<compile_context>
chip_gen: v6e
topology: v6e:2x2x1
jax: 0.10.0
libtpu: 0.0.40
codegen_flags: <defaults>
</compile_context>

<pallas_src>
import functools

import jax
import jax.numpy as jnp
from jax import lax
from jax.scipy.linalg import block_diag
from jax.experimental import pallas as pl
from jax.experimental.pallas import tpu as pltpu


def _round_up(n, m):
    return ((n + m - 1) // m) * m


# --------------------------------------------------------------------------
# Kernel 1: fused multi-head self-attention + residual + LayerNorm
# --------------------------------------------------------------------------
def attn_ln_kernel(x_ref, win_ref, bin_ref, wout_ref, bout_ref, g_ref, beta_ref,
                   o_ref, *, num_heads, eps):
    # x_ref:   (1, S, D)   win/wout: (D, D) block-diagonal   biases/g/beta: (1, D)
    x = x_ref[0].astype(jnp.float32)                              # (S, D)
    S, D = x.shape
    dh = D // num_heads

    # Q = K = V = input_linear(x_head) for all heads at once (block-diag weight,
    # lane width D).
    qkv = jnp.dot(x, win_ref[...], preferred_element_type=jnp.float32) + bin_ref[...]

    scale = 1.0 / jnp.sqrt(jnp.float32(dh))
    head_outs = []
    for h in range(num_heads):                                    # static unroll
        q = qkv[:, h * dh:(h + 1) * dh]                           # (S, dh)
        s = jnp.dot(q, q.T, preferred_element_type=jnp.float32) * scale
        s = s - jnp.max(s, axis=-1, keepdims=True)
        p = jnp.exp(s)
        p = p * pl.reciprocal(jnp.sum(p, axis=-1, keepdims=True), approx=True)
        head_outs.append(jnp.dot(p, q, preferred_element_type=jnp.float32))
    ctx = jnp.concatenate(head_outs, axis=-1)                     # (S, D)

    attn = jnp.dot(ctx, wout_ref[...], preferred_element_type=jnp.float32) + bout_ref[...]

    # Fused residual add + LayerNorm (PyTorch eps=1e-5, biased variance).
    z = attn + x
    mean = jnp.mean(z, axis=-1, keepdims=True)
    zc = z - mean
    var = jnp.mean(zc * zc, axis=-1, keepdims=True)
    y = zc * lax.rsqrt(var + eps) * g_ref[...] + beta_ref[...]
    o_ref[0] = y.astype(o_ref.dtype)


def attention_ln(x, p, num_heads, *, eps=1e-5):
    """x: (B, S, D). Returns LayerNorm(multi_head_attn(x) + x)."""
    B, S, D = x.shape
    kernel = functools.partial(attn_ln_kernel, num_heads=num_heads, eps=eps)
    return pl.pallas_call(
        kernel,
        out_shape=jax.ShapeDtypeStruct((B, S, D), x.dtype),
        grid_spec=pltpu.PrefetchScalarGridSpec(
            num_scalar_prefetch=0,
            grid=(B,),
            in_specs=[
                pl.BlockSpec((1, S, D), lambda b: (b, 0, 0)),
                pl.BlockSpec((D, D), lambda b: (0, 0)),
                pl.BlockSpec((1, D), lambda b: (0, 0)),
                pl.BlockSpec((D, D), lambda b: (0, 0)),
                pl.BlockSpec((1, D), lambda b: (0, 0)),
                pl.BlockSpec((1, D), lambda b: (0, 0)),
                pl.BlockSpec((1, D), lambda b: (0, 0)),
            ],
            out_specs=pl.BlockSpec((1, S, D), lambda b: (b, 0, 0)),
        ),
        compiler_params=pltpu.CompilerParams(
            dimension_semantics=("parallel",),
        ),
    )(x, p["win_bd"], p["b_in"], p["wout_bd"], p["b_out"],
      p["ln_gamma"], p["ln_beta"])


# --------------------------------------------------------------------------
# Kernel 2: fused positionwise FFN + residual + LayerNorm
#   out = LayerNorm(relu(y @ W1^T + b1) @ W2^T + b2 + y)
# --------------------------------------------------------------------------
def ffn_ln_kernel(y_ref, w1t_ref, b1_ref, w2t_ref, b2_ref, g_ref, beta_ref,
                  o_ref, *, eps):
    # y_ref: (tm, D) f32   w1t: (D, F) bf16   b1: (1, F) f32
    # w2t:   (F, D) bf16   b2/g/beta: (1, D) f32
    y = y_ref[...].astype(jnp.float32)
    h = jnp.dot(y.astype(w1t_ref.dtype), w1t_ref[...],
                preferred_element_type=jnp.float32)
    h = jnp.maximum(h + b1_ref[...], 0.0)                         # bias + ReLU, f32
    # TODO(synk): dropout omitted (identity in eval mode); training would use
    # pltpu.prng_seed + pltpu.stateful_bernoulli here.
    ff = jnp.dot(h.astype(w2t_ref.dtype), w2t_ref[...],
                 preferred_element_type=jnp.float32) + b2_ref[...]
    z = ff + y                                                    # residual
    mean = jnp.mean(z, axis=-1, keepdims=True)
    zc = z - mean
    var = jnp.mean(zc * zc, axis=-1, keepdims=True)
    out = zc * lax.rsqrt(var + eps) * g_ref[...] + beta_ref[...]
    o_ref[...] = out.astype(o_ref.dtype)


def ffn_ln(y, p, *, tm=512, eps=1e-5):
    """y: (B, S, D). Returns LayerNorm(FFN(y) + y)."""
    B, S, D = y.shape
    F = p["w1t"].shape[1]
    M = B * S

    tm = max(8, min(_round_up(tm, 8), _round_up(M, 8)))
    m_pad = _round_up(M, tm)
    # Keep >= 2 parallel grid steps when possible (v7x has 2 TensorCores).
    if m_pad // tm < 2 and tm > 8:
        tm = max(8, _round_up(tm // 2, 8))
        m_pad = _round_up(M, tm)

    y2 = y.reshape(M, D)
    if m_pad != M:
        y2 = jnp.pad(y2, ((0, m_pad - M), (0, 0)))

    cost = pl.CostEstimate(
        flops=4 * m_pad * D * F,                       # two matmuls
        transcendentals=0,
        bytes_accessed=int(2 * m_pad * D * 4           # y in + out
                           + 2 * D * F * 2             # W1^T + W2^T (loaded once)
                           + (F + 3 * D) * 4),         # biases, gamma, beta
    )

    out = pl.pallas_call(
        functools.partial(ffn_ln_kernel, eps=eps),
        out_shape=jax.ShapeDtypeStruct((m_pad, D), y.dtype),
        grid_spec=pltpu.PrefetchScalarGridSpec(
            num_scalar_prefetch=0,
            grid=(m_pad // tm,),
            in_specs=[
                pl.BlockSpec((tm, D), lambda i: (i, 0)),
                # Constant block index => weights stay VMEM-resident, no re-DMA.
                pl.BlockSpec((D, F), lambda i: (0, 0)),
                pl.BlockSpec((1, F), lambda i: (0, 0)),
                pl.BlockSpec((F, D), lambda i: (0, 0)),
                pl.BlockSpec((1, D), lambda i: (0, 0)),
                pl.BlockSpec((1, D), lambda i: (0, 0)),
                pl.BlockSpec((1, D), lambda i: (0, 0)),
            ],
            out_specs=pl.BlockSpec((tm, D), lambda i: (i, 0)),
        ),
        compiler_params=pltpu.CompilerParams(
            dimension_semantics=("parallel",),
            vmem_limit_bytes=32 * 1024 * 1024,   # few-MiB footprint; headroom on v7x
        ),
        cost_estimate=cost,
    )(y2, p["w1t"], p["b1"], p["w2t"], p["b2"], p["ln_gamma"], p["ln_beta"])
    return out[:M].reshape(B, S, D)


# --------------------------------------------------------------------------
# Kernel 3: final classifier linear (class dim padded to 128 for lane-dense
# stores; padding sliced off outside)
# --------------------------------------------------------------------------
def classifier_kernel(x_ref, wt_ref, b_ref, o_ref):
    o_ref[...] = (jnp.dot(x_ref[...], wt_ref[...],
                          preferred_element_type=jnp.float32)
                  + b_ref[...]).astype(o_ref.dtype)


def classifier_linear(x2d, clf, class_num):
    """x2d: (B, F); clf['clf_wt']: (F, Cp); clf['clf_b']: (1, Cp)."""
    B, F = x2d.shape
    Cp = clf["clf_wt"].shape[1]
    out = pl.pallas_call(
        classifier_kernel,
        out_shape=jax.ShapeDtypeStruct((B, Cp), x2d.dtype),
        grid_spec=pltpu.PrefetchScalarGridSpec(
            num_scalar_prefetch=0,
            grid=(1,),
            in_specs=[
                pl.BlockSpec((B, F), lambda i: (0, 0)),
                pl.BlockSpec((F, Cp), lambda i: (0, 0)),
                pl.BlockSpec((1, Cp), lambda i: (0, 0)),
            ],
            out_specs=pl.BlockSpec((B, Cp), lambda i: (0, 0)),
        ),
    )(x2d, clf["clf_wt"], clf["clf_b"])
    return out[:, :class_num]


# --------------------------------------------------------------------------
# One-time parameter preparation (hoisted out of the per-forward path)
# --------------------------------------------------------------------------
def prepare_params(enc_params, clf_w, clf_b, *, ffn_dtype=jnp.bfloat16):
    enc_prepped = []
    for p in enc_params:
        H, dh, _ = p["w_in"].shape
        D = H * dh
        # Block-diagonal weights: x @ W_bd == per-head x_h @ W_h^T, concatenated.
        win_bd = block_diag(*[p["w_in"][h].T for h in range(H)]).astype(jnp.float32)
        wout_bd = block_diag(*[p["w_out"][h].T for h in range(H)]).astype(jnp.float32)
        enc_prepped.append(dict(
            win_bd=win_bd,
            b_in=p["b_in"].reshape(1, D).astype(jnp.float32),
            wout_bd=wout_bd,
            b_out=p["b_out"].reshape(1, D).astype(jnp.float32),
            ln_gamma=p["ln_gamma"].reshape(1, D).astype(jnp.float32),
            ln_beta=p["ln_beta"].reshape(1, D).astype(jnp.float32),
            w1t=p["w1"].T.astype(ffn_dtype),                       # (D, F)
            b1=p["b1"].reshape(1, -1).astype(jnp.float32),
            w2t=p["w2"].T.astype(ffn_dtype),                       # (F, D)
            b2=p["b2"].reshape(1, D).astype(jnp.float32),
        ))
    C, Fin = clf_w.shape
    Cp = _round_up(C, 128)
    clf_prepped = dict(
        clf_wt=jnp.pad(clf_w.T, ((0, 0), (0, Cp - C))).astype(jnp.float32),
        clf_b=jnp.pad(clf_b, (0, Cp - C)).reshape(1, Cp).astype(jnp.float32),
    )
    return enc_prepped, clf_prepped


# --------------------------------------------------------------------------
# Model assembly
# --------------------------------------------------------------------------
def transformer_classifier(x, enc_prepped, clf_prepped, *, num_heads, class_num):
    y = x
    for p in enc_prepped:
        y = attention_ln(y, p, num_heads)        # MHA + residual + LN (same LN
        y = ffn_ln(y, p)                         # weights reused, as in PyTorch)
    y2d = y.reshape(y.shape[0], -1)
    return classifier_linear(y2d, clf_prepped, class_num)


# --------------------------------------------------------------------------
# Pure-JAX f32 reference (mirrors the PyTorch module in eval mode)
# --------------------------------------------------------------------------
def ref_forward(x, enc_params, clf_w, clf_b):
    def layernorm(v, g, b, eps=1e-5):
        mean = v.mean(-1, keepdims=True)
        var = ((v - mean) ** 2).mean(-1, keepdims=True)
        return (v - mean) / jnp.sqrt(var + eps) * g + b

    y = x
    for p in enc_params:
        H, dh, _ = p["w_in"].shape
        outs = []
        for h in range(H):
            xh = y[..., h * dh:(h + 1) * dh]
            qkv = xh @ p["w_in"][h].T + p["b_in"][h]
            s = (qkv @ jnp.swapaxes(qkv, -1, -2)) / jnp.sqrt(jnp.float32(dh))
            a = jax.nn.softmax(s, axis=-1)
            outs.append((a @ qkv) @ p["w_out"][h].T + p["b_out"][h])
        attn = jnp.concatenate(outs, axis=-1)
        y1 = layernorm(attn + y, p["ln_gamma"], p["ln_beta"])
        ff = jnp.maximum(y1 @ p["w1"].T + p["b1"], 0.0) @ p["w2"].T + p["b2"]
        y = layernorm(ff + y1, p["ln_gamma"], p["ln_beta"])
    return y.reshape(y.shape[0], -1) @ clf_w.T + clf_b


if __name__ == "__main__":
    batch, seq = 2, 8
    d_embedding, num_heads = 32, 4
    dh = d_embedding // num_heads
    d_ff = 2048                  # PositionwiseFeedForward default
    num_encoders = 2
    class_num = 2                # classifier input width = d_embedding * seq

    keys = iter(jax.random.split(jax.random.PRNGKey(0), 64))

    def rand(shape, scale=0.1):
        return scale * jax.random.normal(next(keys), shape, dtype=jnp.float32)

    x = jax.random.normal(next(keys), (batch, seq, d_embedding), dtype=jnp.float32)

    enc_params = []
    for _ in range(num_encoders):
        enc_params.append(dict(
            w_in=rand((num_heads, dh, dh)),
            b_in=rand((num_heads, dh)),
            w_out=rand((num_heads, dh, dh)),
            b_out=rand((num_heads, dh)),
            ln_gamma=1.0 + rand((d_embedding,)),
            ln_beta=rand((d_embedding,)),
            w1=rand((d_ff, d_embedding), 0.05),
            b1=rand((d_ff,), 0.05),
            w2=rand((d_embedding, d_ff), 0.05),
            b2=rand((d_embedding,), 0.05),
        ))
    clf_w = rand((class_num, d_embedding * seq), 0.05)
    clf_b = rand((class_num,), 0.05)

    # One-time weight prep (block-diag, transposes, bf16 casts, class-dim pad).
    enc_prepped, clf_prepped = prepare_params(enc_params, clf_w, clf_b)
    enc_prepped, clf_prepped = jax.block_until_ready((enc_prepped, clf_prepped))

    fwd = jax.jit(functools.partial(transformer_classifier,
                                    num_heads=num_heads, class_num=class_num))
    out = jax.block_until_ready(fwd(x, enc_prepped, clf_prepped))

    ref = ref_forward(x, enc_params, clf_w, clf_b)
    assert out.shape == (batch, class_num)
    # bf16 MXU operands in the FFN (f32 accumulation) => loose-ish tolerance.
    assert jnp.allclose(out, ref, atol=2e-2, rtol=2e-2), (
        f"mismatch vs reference, max abs err {jnp.max(jnp.abs(out - ref))}")

    print("KERNEL_OK")
</pallas_src>

<mosaic_0001>
module attributes {stable_mosaic.version = 11 : i64} {
  func.func @ffn_ln_kernel(%arg0: i32, %arg1: memref<8x32xf32, #tpu.memory_space<vmem>>, %arg2: memref<32x2048xbf16, #tpu.memory_space<vmem>>, %arg3: memref<1x2048xf32, #tpu.memory_space<vmem>>, %arg4: memref<2048x32xbf16, #tpu.memory_space<vmem>>, %arg5: memref<1x32xf32, #tpu.memory_space<vmem>>, %arg6: memref<1x32xf32, #tpu.memory_space<vmem>>, %arg7: memref<1x32xf32, #tpu.memory_space<vmem>>, %arg8: memref<8x32xf32, #tpu.memory_space<vmem>>) attributes {dimension_semantics = [#tpu.dimension_semantics<parallel>], iteration_bounds = array<i64: 2>, scalar_prefetch = 0 : i64, scratch_operands = 0 : i64, tpu.core_type = #tpu.core_type<tc>, window_params = [{transform_indices = @transform_0, window_bounds = array<i64: 8, 32>}, {pipeline_mode = #tpu.pipeline_mode<synchronous>, transform_indices = @transform_1, window_bounds = array<i64: 32, 2048>}, {pipeline_mode = #tpu.pipeline_mode<synchronous>, transform_indices = @transform_2, window_bounds = array<i64: 1, 2048>}, {pipeline_mode = #tpu.pipeline_mode<synchronous>, transform_indices = @transform_3, window_bounds = array<i64: 2048, 32>}, {pipeline_mode = #tpu.pipeline_mode<synchronous>, transform_indices = @transform_4, window_bounds = array<i64: 1, 32>}, {pipeline_mode = #tpu.pipeline_mode<synchronous>, transform_indices = @transform_5, window_bounds = array<i64: 1, 32>}, {pipeline_mode = #tpu.pipeline_mode<synchronous>, transform_indices = @transform_6, window_bounds = array<i64: 1, 32>}, {transform_indices = @transform_7, window_bounds = array<i64: 8, 32>}]} {
    %c0 = arith.constant 0 : index
    %c0_0 = arith.constant 0 : index
    %0 = vector.load %arg1[%c0, %c0_0] : memref<8x32xf32, #tpu.memory_space<vmem>>, vector<8x32xf32>
    %1 = arith.truncf %0 : vector<8x32xf32> to vector<8x32xbf16>
    %c0_1 = arith.constant 0 : index
    %c0_2 = arith.constant 0 : index
    %2 = vector.load %arg2[%c0_1, %c0_2] : memref<32x2048xbf16, #tpu.memory_space<vmem>>, vector<32x2048xbf16>
    %cst = arith.constant dense<0.000000e+00> : vector<8x2048xf32>
    %3 = tpu.matmul %1, %2, %cst {dimension_numbers = #tpu.dot_dimension_numbers<[1], [0], [0], [1], [0, 0, 1, 1], [], []>} : vector<8x32xbf16>, vector<32x2048xbf16>, vector<8x2048xf32> -> vector<8x2048xf32>
    %c0_3 = arith.constant 0 : index
    %c0_4 = arith.constant 0 : index
    %4 = vector.load %arg3[%c0_3, %c0_4] : memref<1x2048xf32, #tpu.memory_space<vmem>>, vector<1x2048xf32>
    %5 = vector.broadcast %4 : vector<1x2048xf32> to vector<8x2048xf32>
    %6 = arith.addf %3, %5 : vector<8x2048xf32>
    %cst_5 = arith.constant 0.000000e+00 : f32
    %7 = vector.broadcast %cst_5 : f32 to vector<8x2048xf32>
    %8 = arith.maximumf %6, %7 : vector<8x2048xf32>
    %9 = arith.truncf %8 : vector<8x2048xf32> to vector<8x2048xbf16>
    %c0_6 = arith.constant 0 : index
    %c0_7 = arith.constant 0 : index
    %10 = vector.load %arg4[%c0_6, %c0_7] : memref<2048x32xbf16, #tpu.memory_space<vmem>>, vector<2048x32xbf16>
    %cst_8 = arith.constant dense<0.000000e+00> : vector<8x32xf32>
    %11 = tpu.matmul %9, %10, %cst_8 {dimension_numbers = #tpu.dot_dimension_numbers<[1], [0], [0], [1], [0, 0, 1, 1], [], []>} : vector<8x2048xbf16>, vector<2048x32xbf16>, vector<8x32xf32> -> vector<8x32xf32>
    %c0_9 = arith.constant 0 : index
    %c0_10 = arith.constant 0 : index
    %12 = vector.load %arg5[%c0_9, %c0_10] : memref<1x32xf32, #tpu.memory_space<vmem>>, vector<1x32xf32>
    %13 = vector.broadcast %12 : vector<1x32xf32> to vector<8x32xf32>
    %14 = arith.addf %11, %13 : vector<8x32xf32>
    %15 = arith.addf %14, %0 : vector<8x32xf32>
    %cst_11 = arith.constant dense<0.000000e+00> : vector<8xf32>
    %16 = vector.multi_reduction <add>, %15, %cst_11 [1] : vector<8x32xf32> to vector<8xf32>
    %17 = vector.shape_cast %16 : vector<8xf32> to vector<8x1xf32>
    %cst_12 = arith.constant 3.200000e+01 : f32
    %18 = vector.broadcast %cst_12 : f32 to vector<8x1xf32>
    %19 = arith.divf %17, %18 : vector<8x1xf32>
    %20 = vector.broadcast %19 : vector<8x1xf32> to vector<8x32xf32>
    %21 = arith.subf %15, %20 : vector<8x32xf32>
    %22 = arith.mulf %21, %21 : vector<8x32xf32>
    %cst_13 = arith.constant dense<0.000000e+00> : vector<8xf32>
    %23 = vector.multi_reduction <add>, %22, %cst_13 [1] : vector<8x32xf32> to vector<8xf32>
    %24 = vector.shape_cast %23 : vector<8xf32> to vector<8x1xf32>
    %cst_14 = arith.constant 3.200000e+01 : f32
    %25 = vector.broadcast %cst_14 : f32 to vector<8x1xf32>
    %26 = arith.divf %24, %25 : vector<8x1xf32>
    %cst_15 = arith.constant 9.99999974E-6 : f32
    %27 = vector.broadcast %cst_15 : f32 to vector<8x1xf32>
    %28 = arith.addf %26, %27 : vector<8x1xf32>
    %29 = math.rsqrt %28 : vector<8x1xf32>
    %30 = vector.broadcast %29 : vector<8x1xf32> to vector<8x32xf32>
    %31 = arith.mulf %21, %30 : vector<8x32xf32>
    %c0_16 = arith.constant 0 : index
    %c0_17 = arith.constant 0 : index
    %32 = vector.load %arg6[%c0_16, %c0_17] : memref<1x32xf32, #tpu.memory_space<vmem>>, vector<1x32xf32>
    %33 = vector.broadcast %32 : vector<1x32xf32> to vector<8x32xf32>
    %34 = arith.mulf %31, %33 : vector<8x32xf32>
    %c0_18 = arith.constant 0 : index
    %c0_19 = arith.constant 0 : index
    %35 = vector.load %arg7[%c0_18, %c0_19] : memref<1x32xf32, #tpu.memory_space<vmem>>, vector<1x32xf32>
    %36 = vector.broadcast %35 : vector<1x32xf32> to vector<8x32xf32>
    %37 = arith.addf %34, %36 : vector<8x32xf32>
    %c0_20 = arith.constant 0 : index
    %c0_21 = arith.constant 0 : index
    %38 = vector.load %arg8[%c0_20, %c0_21] : memref<8x32xf32, #tpu.memory_space<vmem>>, vector<8x32xf32>
    tpu.vector_store %arg8[%c0_20, %c0_21], %37 {strides = array<i32>} : memref<8x32xf32, #tpu.memory_space<vmem>>, vector<8x32xf32>,
    return
  }
  func.func @transform_0(%arg0: i32) -> (i32, i32) {
    %c0_i32 = arith.constant 0 : i32
    %c0_i32_0 = arith.constant 0 : i32
    return %arg0, %c0_i32 : i32, i32
  }
  func.func @transform_1(%arg0: i32) -> (i32, i32) {
    %c0_i32 = arith.constant 0 : i32
    %c0_i32_0 = arith.constant 0 : i32
    %c0_i32_1 = arith.constant 0 : i32
    return %c0_i32, %c0_i32_0 : i32, i32
  }
  func.func @transform_2(%arg0: i32) -> (i32, i32) {
    %c0_i32 = arith.constant 0 : i32
    %c0_i32_0 = arith.constant 0 : i32
    %c0_i32_1 = arith.constant 0 : i32
    return %c0_i32, %c0_i32_0 : i32, i32
  }
  func.func @transform_3(%arg0: i32) -> (i32, i32) {
    %c0_i32 = arith.constant 0 : i32
    %c0_i32_0 = arith.constant 0 : i32
    %c0_i32_1 = arith.constant 0 : i32
    return %c0_i32, %c0_i32_0 : i32, i32
  }
  func.func @transform_4(%arg0: i32) -> (i32, i32) {
    %c0_i32 = arith.constant 0 : i32
    %c0_i32_0 = arith.constant 0 : i32
    %c0_i32_1 = arith.constant 0 : i32
    return %c0_i32, %c0_i32_0 : i32, i32
  }
  func.func @transform_5(%arg0: i32) -> (i32, i32) {
    %c0_i32 = arith.constant 0 : i32
    %c0_i32_0 = arith.constant 0 : i32
    %c0_i32_1 = arith.constant 0 : i32
    return %c0_i32, %c0_i32_0 : i32, i32
  }
  func.func @transform_6(%arg0: i32) -> (i32, i32) {
    %c0_i32 = arith.constant 0 : i32
    %c0_i32_0 = arith.constant 0 : i32
    %c0_i32_1 = arith.constant 0 : i32
    return %c0_i32, %c0_i32_0 : i32, i32
  }
  func.func @transform_7(%arg0: i32) -> (i32, i32) {
    %c0_i32 = arith.constant 0 : i32
    %c0_i32_0 = arith.constant 0 : i32
    return %arg0, %c0_i32 : i32, i32
  }
}

module attributes {stable_mosaic.version = 11 : i64} {
  func.func @attn_ln_kernel(%arg0: i32, %arg1: memref<1x8x32xf32, #tpu.memory_space<vmem>>, %arg2: memref<32x32xf32, #tpu.memory_space<vmem>>, %arg3: memref<1x32xf32, #tpu.memory_space<vmem>>, %arg4: memref<32x32xf32, #tpu.memory_space<vmem>>, %arg5: memref<1x32xf32, #tpu.memory_space<vmem>>, %arg6: memref<1x32xf32, #tpu.memory_space<vmem>>, %arg7: memref<1x32xf32, #tpu.memory_space<vmem>>, %arg8: memref<1x8x32xf32, #tpu.memory_space<vmem>>) attributes {dimension_semantics = [#tpu.dimension_semantics<parallel>], iteration_bounds = array<i64: 2>, scalar_prefetch = 0 : i64, scratch_operands = 0 : i64, tpu.core_type = #tpu.core_type<tc>, window_params = [{transform_indices = @transform_0, window_bounds = array<i64: 1, 8, 32>}, {pipeline_mode = #tpu.pipeline_mode<synchronous>, transform_indices = @transform_1, window_bounds = array<i64: 32, 32>}, {pipeline_mode = #tpu.pipeline_mode<synchronous>, transform_indices = @transform_2, window_bounds = array<i64: 1, 32>}, {pipeline_mode = #tpu.pipeline_mode<synchronous>, transform_indices = @transform_3, window_bounds = array<i64: 32, 32>}, {pipeline_mode = #tpu.pipeline_mode<synchronous>, transform_indices = @transform_4, window_bounds = array<i64: 1, 32>}, {pipeline_mode = #tpu.pipeline_mode<synchronous>, transform_indices = @transform_5, window_bounds = array<i64: 1, 32>}, {pipeline_mode = #tpu.pipeline_mode<synchronous>, transform_indices = @transform_6, window_bounds = array<i64: 1, 32>}, {transform_indices = @transform_7, window_bounds = array<i64: 1, 8, 32>}]} {
    %c0 = arith.constant 0 : index
    %c0_0 = arith.constant 0 : index
    %c0_1 = arith.constant 0 : index
    %0 = vector.load %arg1[%c0, %c0_0, %c0_1] : memref<1x8x32xf32, #tpu.memory_space<vmem>>, vector<1x8x32xf32>
    %1 = vector.shape_cast %0 : vector<1x8x32xf32> to vector<8x32xf32>
    %c0_2 = arith.constant 0 : index
    %c0_3 = arith.constant 0 : index
    %2 = vector.load %arg2[%c0_2, %c0_3] : memref<32x32xf32, #tpu.memory_space<vmem>>, vector<32x32xf32>
    %cst = arith.constant dense<0.000000e+00> : vector<8x32xf32>
    %3 = tpu.matmul %1, %2, %cst {dimension_numbers = #tpu.dot_dimension_numbers<[1], [0], [0], [1], [0, 0, 1, 1], [], []>} : vector<8x32xf32>, vector<32x32xf32>, vector<8x32xf32> -> vector<8x32xf32>
    %c0_4 = arith.constant 0 : index
    %c0_5 = arith.constant 0 : index
    %4 = vector.load %arg3[%c0_4, %c0_5] : memref<1x32xf32, #tpu.memory_space<vmem>>, vector<1x32xf32>
    %5 = vector.broadcast %4 : vector<1x32xf32> to vector<8x32xf32>
    %6 = arith.addf %3, %5 : vector<8x32xf32>
    %cst_6 = arith.constant 8.000000e+00 : f32
    %7 = math.sqrt %cst_6 : f32
    %cst_7 = arith.constant 1.000000e+00 : f32
    %8 = arith.divf %cst_7, %7 : f32
    %9 = vector.extract_strided_slice %6 {offsets = [0, 0], sizes = [8, 8], strides = [1, 1]} : vector<8x32xf32> to vector<8x8xf32>
    %10 = tpu.transpose %9, [1, 0] : vector<8x8xf32> -> vector<8x8xf32>
    %cst_8 = arith.constant dense<0.000000e+00> : vector<8x8xf32>
    %11 = tpu.matmul %9, %10, %cst_8 {dimension_numbers = #tpu.dot_dimension_numbers<[1], [0], [0], [1], [0, 0, 1, 1], [], []>} : vector<8x8xf32>, vector<8x8xf32>, vector<8x8xf32> -> vector<8x8xf32>
    %12 = vector.broadcast %8 : f32 to vector<8x8xf32>
    %13 = arith.mulf %11, %12 : vector<8x8xf32>
    %cst_9 = arith.constant dense<0xFF800000> : vector<8xf32>
    %14 = vector.multi_reduction <maximumf>, %13, %cst_9 [1] : vector<8x8xf32> to vector<8xf32>
    %15 = vector.shape_cast %14 : vector<8xf32> to vector<8x1xf32>
    %16 = vector.broadcast %15 : vector<8x1xf32> to vector<8x8xf32>
    %17 = arith.subf %13, %16 : vector<8x8xf32>
    %18 = math.exp %17 : vector<8x8xf32>
    %cst_10 = arith.constant dense<0.000000e+00> : vector<8xf32>
    %19 = vector.multi_reduction <add>, %18, %cst_10 [1] : vector<8x8xf32> to vector<8xf32>
    %20 = vector.shape_cast %19 : vector<8xf32> to vector<8x1xf32>
    %21 = tpu.reciprocal %20 {approx = true} : vector<8x1xf32> -> vector<8x1xf32>
    %22 = vector.broadcast %21 : vector<8x1xf32> to vector<8x8xf32>
    %23 = arith.mulf %18, %22 : vector<8x8xf32>
    %cst_11 = arith.constant dense<0.000000e+00> : vector<8x8xf32>
    %24 = tpu.matmul %23, %9, %cst_11 {dimension_numbers = #tpu.dot_dimension_numbers<[1], [0], [0], [1], [0, 0, 1, 1], [], []>} : vector<8x8xf32>, vector<8x8xf32>, vector<8x8xf32> -> vector<8x8xf32>
    %25 = vector.extract_strided_slice %6 {offsets = [0, 8], sizes = [8, 8], strides = [1, 1]} : vector<8x32xf32> to vector<8x8xf32>
    %26 = tpu.transpose %25, [1, 0] : vector<8x8xf32> -> vector<8x8xf32>
    %cst_12 = arith.constant dense<0.000000e+00> : vector<8x8xf32>
    %27 = tpu.matmul %25, %26, %cst_12 {dimension_numbers = #tpu.dot_dimension_numbers<[1], [0], [0], [1], [0, 0, 1, 1], [], []>} : vector<8x8xf32>, vector<8x8xf32>, vector<8x8xf32> -> vector<8x8xf32>
    %28 = vector.broadcast %8 : f32 to vector<8x8xf32>
    %29 = arith.mulf %27, %28 : vector<8x8xf32>
    %cst_13 = arith.constant dense<0xFF800000> : vector<8xf32>
    %30 = vector.multi_reduction <maximumf>, %29, %cst_13 [1] : vector<8x8xf32> to vector<8xf32>
    %31 = vector.shape_cast %30 : vector<8xf32> to vector<8x1xf32>
    %32 = vector.broadcast %31 : vector<8x1xf32> to vector<8x8xf32>
    %33 = arith.subf %29, %32 : vector<8x8xf32>
    %34 = math.exp %33 : vector<8x8xf32>
    %cst_14 = arith.constant dense<0.000000e+00> : vector<8xf32>
    %35 = vector.multi_reduction <add>, %34, %cst_14 [1] : vector<8x8xf32> to vector<8xf32>
    %36 = vector.shape_cast %35 : vector<8xf32> to vector<8x1xf32>
    %37 = tpu.reciprocal %36 {approx = true} : vector<8x1xf32> -> vector<8x1xf32>
    %38 = vector.broadcast %37 : vector<8x1xf32> to vector<8x8xf32>
    %39 = arith.mulf %34, %38 : vector<8x8xf32>
    %cst_15 = arith.constant dense<0.000000e+00> : vector<8x8xf32>
    %40 = tpu.matmul %39, %25, %cst_15 {dimension_numbers = #tpu.dot_dimension_numbers<[1], [0], [0], [1], [0, 0, 1, 1], [], []>} : vector<8x8xf32>, vector<8x8xf32>, vector<8x8xf32> -> vector<8x8xf32>
    %41 = vector.extract_strided_slice %6 {offsets = [0, 16], sizes = [8, 8], strides = [1, 1]} : vector<8x32xf32> to vector<8x8xf32>
    %42 = tpu.transpose %41, [1, 0] : vector<8x8xf32> -> vector<8x8xf32>
    %cst_16 = arith.constant dense<0.000000e+00> : vector<8x8xf32>
    %43 = tpu.matmul %41, %42, %cst_16 {dimension_numbers = #tpu.dot_dimension_numbers<[1], [0], [0], [1], [0, 0, 1, 1], [], []>} : vector<8x8xf32>, vector<8x8xf32>, vector<8x8xf32> -> vector<8x8xf32>
    %44 = vector.broadcast %8 : f32 to vector<8x8xf32>
    %45 = arith.mulf %43, %44 : vector<8x8xf32>
    %cst_17 = arith.constant dense<0xFF800000> : vector<8xf32>
    %46 = vector.multi_reduction <maximumf>, %45, %cst_17 [1] : vector<8x8xf32> to vector<8xf32>
    %47 = vector.shape_cast %46 : vector<8xf32> to vector<8x1xf32>
    %48 = vector.broadcast %47 : vector<8x1xf32> to vector<8x8xf32>
    %49 = arith.subf %45, %48 : vector<8x8xf32>
    %50 = math.exp %49 : vector<8x8xf32>
    %cst_18 = arith.constant dense<0.000000e+00> : vector<8xf32>
    %51 = vector.multi_reduction <add>, %50, %cst_18 [1] : vector<8x8xf32> to vector<8xf32>
    %52 = vector.shape_cast %51 : vector<8xf32> to vector<8x1xf32>
    %53 = tpu.reciprocal %52 {approx = true} : vector<8x1xf32> -> vector<8x1xf32>
    %54 = vector.broadcast %53 : vector<8x1xf32> to vector<8x8xf32>
    %55 = arith.mulf %50, %54 : vector<8x8xf32>
    %cst_19 = arith.constant dense<0.000000e+00> : vector<8x8xf32>
    %56 = tpu.matmul %55, %41, %cst_19 {dimension_numbers = #tpu.dot_dimension_numbers<[1], [0], [0], [1], [0, 0, 1, 1], [], []>} : vector<8x8xf32>, vector<8x8xf32>, vector<8x8xf32> -> vector<8x8xf32>
    %57 = vector.extract_strided_slice %6 {offsets = [0, 24], sizes = [8, 8], strides = [1, 1]} : vector<8x32xf32> to vector<8x8xf32>
    %58 = tpu.transpose %57, [1, 0] : vector<8x8xf32> -> vector<8x8xf32>
    %cst_20 = arith.constant dense<0.000000e+00> : vector<8x8xf32>
    %59 = tpu.matmul %57, %58, %cst_20 {dimension_numbers = #tpu.dot_dimension_numbers<[1], [0], [0], [1], [0, 0, 1, 1], [], []>} : vector<8x8xf32>, vector<8x8xf32>, vector<8x8xf32> -> vector<8x8xf32>
    %60 = vector.broadcast %8 : f32 to vector<8x8xf32>
    %61 = arith.mulf %59, %60 : vector<8x8xf32>
    %cst_21 = arith.constant dense<0xFF800000> : vector<8xf32>
    %62 = vector.multi_reduction <maximumf>, %61, %cst_21 [1] : vector<8x8xf32> to vector<8xf32>
    %63 = vector.shape_cast %62 : vector<8xf32> to vector<8x1xf32>
    %64 = vector.broadcast %63 : vector<8x1xf32> to vector<8x8xf32>
    %65 = arith.subf %61, %64 : vector<8x8xf32>
    %66 = math.exp %65 : vector<8x8xf32>
    %cst_22 = arith.constant dense<0.000000e+00> : vector<8xf32>
    %67 = vector.multi_reduction <add>, %66, %cst_22 [1] : vector<8x8xf32> to vector<8xf32>
    %68 = vector.shape_cast %67 : vector<8xf32> to vector<8x1xf32>
    %69 = tpu.reciprocal %68 {approx = true} : vector<8x1xf32> -> vector<8x1xf32>
    %70 = vector.broadcast %69 : vector<8x1xf32> to vector<8x8xf32>
    %71 = arith.mulf %66, %70 : vector<8x8xf32>
    %cst_23 = arith.constant dense<0.000000e+00> : vector<8x8xf32>
    %72 = tpu.matmul %71, %57, %cst_23 {dimension_numbers = #tpu.dot_dimension_numbers<[1], [0], [0], [1], [0, 0, 1, 1], [], []>} : vector<8x8xf32>, vector<8x8xf32>, vector<8x8xf32> -> vector<8x8xf32>
    %73 = tpu.concatenate %24, %40, %56, %72 in 1 : vector<8x8xf32>, vector<8x8xf32>, vector<8x8xf32>, vector<8x8xf32> -> vector<8x32xf32>
    %c0_24 = arith.constant 0 : index
    %c0_25 = arith.constant 0 : index
    %74 = vector.load %arg4[%c0_24, %c0_25] : memref<32x32xf32, #tpu.memory_space<vmem>>, vector<32x32xf32>
    %cst_26 = arith.constant dense<0.000000e+00> : vector<8x32xf32>
    %75 = tpu.matmul %73, %74, %cst_26 {dimension_numbers = #tpu.dot_dimension_numbers<[1], [0], [0], [1], [0, 0, 1, 1], [], []>} : vector<8x32xf32>, vector<32x32xf32>, vector<8x32xf32> -> vector<8x32xf32>
    %c0_27 = arith.constant 0 : index
    %c0_28 = arith.constant 0 : index
    %76 = vector.load %arg5[%c0_27, %c0_28] : memref<1x32xf32, #tpu.memory_space<vmem>>, vector<1x32xf32>
    %77 = vector.broadcast %76 : vector<1x32xf32> to vector<8x32xf32>
    %78 = arith.addf %75, %77 : vector<8x32xf32>
    %79 = arith.addf %78, %1 : vector<8x32xf32>
    %cst_29 = arith.constant dense<0.000000e+00> : vector<8xf32>
    %80 = vector.multi_reduction <add>, %79, %cst_29 [1] : vector<8x32xf32> to vector<8xf32>
    %81 = vector.shape_cast %80 : vector<8xf32> to vector<8x1xf32>
    %cst_30 = arith.constant 3.200000e+01 : f32
    %82 = vector.broadcast %cst_30 : f32 to vector<8x1xf32>
    %83 = arith.divf %81, %82 : vector<8x1xf32>
    %84 = vector.broadcast %83 : vector<8x1xf32> to vector<8x32xf32>
    %85 = arith.subf %79, %84 : vector<8x32xf32>
    %86 = arith.mulf %85, %85 : vector<8x32xf32>
    %cst_31 = arith.constant dense<0.000000e+00> : vector<8xf32>
    %87 = vector.multi_reduction <add>, %86, %cst_31 [1] : vector<8x32xf32> to vector<8xf32>
    %88 = vector.shape_cast %87 : vector<8xf32> to vector<8x1xf32>
    %cst_32 = arith.constant 3.200000e+01 : f32
    %89 = vector.broadcast %cst_32 : f32 to vector<8x1xf32>
    %90 = arith.divf %88, %89 : vector<8x1xf32>
    %cst_33 = arith.constant 9.99999974E-6 : f32
    %91 = vector.broadcast %cst_33 : f32 to vector<8x1xf32>
    %92 = arith.addf %90, %91 : vector<8x1xf32>
    %93 = math.rsqrt %92 : vector<8x1xf32>
    %94 = vector.broadcast %93 : vector<8x1xf32> to vector<8x32xf32>
    %95 = arith.mulf %85, %94 : vector<8x32xf32>
    %c0_34 = arith.constant 0 : index
    %c0_35 = arith.constant 0 : index
    %96 = vector.load %arg6[%c0_34, %c0_35] : memref<1x32xf32, #tpu.memory_space<vmem>>, vector<1x32xf32>
    %97 = vector.broadcast %96 : vector<1x32xf32> to vector<8x32xf32>
    %98 = arith.mulf %95, %97 : vector<8x32xf32>
    %c0_36 = arith.constant 0 : index
    %c0_37 = arith.constant 0 : index
    %99 = vector.load %arg7[%c0_36, %c0_37] : memref<1x32xf32, #tpu.memory_space<vmem>>, vector<1x32xf32>
    %100 = vector.broadcast %99 : vector<1x32xf32> to vector<8x32xf32>
    %101 = arith.addf %98, %100 : vector<8x32xf32>
    %c0_38 = arith.constant 0 : index
    %c0_39 = arith.constant 0 : index
    %c0_40 = arith.constant 0 : index
    %102 = vector.load %arg8[%c0_38, %c0_39, %c0_40] : memref<1x8x32xf32, #tpu.memory_space<vmem>>, vector<1x8x32xf32>
    %103 = vector.shape_cast %102 : vector<1x8x32xf32> to vector<8x32xf32>
    %104 = vector.shape_cast %101 : vector<8x32xf32> to vector<1x8x32xf32>
    tpu.vector_store %arg8[%c0_38, %c0_39, %c0_40], %104 {strides = array<i32>} : memref<1x8x32xf32, #tpu.memory_space<vmem>>, vector<1x8x32xf32>,
    return
  }
  func.func @transform_0(%arg0: i32) -> (i32, i32, i32) {
    %c0_i32 = arith.constant 0 : i32
    %c0_i32_0 = arith.constant 0 : i32
    %c0_i32_1 = arith.constant 0 : i32
    return %arg0, %c0_i32, %c0_i32_0 : i32, i32, i32
  }
  func.func @transform_1(%arg0: i32) -> (i32, i32) {
    %c0_i32 = arith.constant 0 : i32
    %c0_i32_0 = arith.constant 0 : i32
    %c0_i32_1 = arith.constant 0 : i32
    return %c0_i32, %c0_i32_0 : i32, i32
  }
  func.func @transform_2(%arg0: i32) -> (i32, i32) {
    %c0_i32 = arith.constant 0 : i32
    %c0_i32_0 = arith.constant 0 : i32
    %c0_i32_1 = arith.constant 0 : i32
    return %c0_i32, %c0_i32_0 : i32, i32
  }
  func.func @transform_3(%arg0: i32) -> (i32, i32) {
    %c0_i32 = arith.constant 0 : i32
    %c0_i32_0 = arith.constant 0 : i32
    %c0_i32_1 = arith.constant 0 : i32
    return %c0_i32, %c0_i32_0 : i32, i32
  }
  func.func @transform_4(%arg0: i32) -> (i32, i32) {
    %c0_i32 = arith.constant 0 : i32
    %c0_i32_0 = arith.constant 0 : i32
    %c0_i32_1 = arith.constant 0 : i32
    return %c0_i32, %c0_i32_0 : i32, i32
  }
  func.func @transform_5(%arg0: i32) -> (i32, i32) {
    %c0_i32 = arith.constant 0 : i32
    %c0_i32_0 = arith.constant 0 : i32
    %c0_i32_1 = arith.constant 0 : i32
    return %c0_i32, %c0_i32_0 : i32, i32
  }
  func.func @transform_6(%arg0: i32) -> (i32, i32) {
    %c0_i32 = arith.constant 0 : i32
    %c0_i32_0 = arith.constant 0 : i32
    %c0_i32_1 = arith.constant 0 : i32
    return %c0_i32, %c0_i32_0 : i32, i32
  }
  func.func @transform_7(%arg0: i32) -> (i32, i32, i32) {
    %c0_i32 = arith.constant 0 : i32
    %c0_i32_0 = arith.constant 0 : i32
    %c0_i32_1 = arith.constant 0 : i32
    return %arg0, %c0_i32, %c0_i32_0 : i32, i32, i32
  }
}

module attributes {stable_mosaic.version = 11 : i64} {
  func.func @attn_ln_kernel(%arg0: i32, %arg1: memref<1x8x32xf32, #tpu.memory_space<vmem>>, %arg2: memref<32x32xf32, #tpu.memory_space<vmem>>, %arg3: memref<1x32xf32, #tpu.memory_space<vmem>>, %arg4: memref<32x32xf32, #tpu.memory_space<vmem>>, %arg5: memref<1x32xf32, #tpu.memory_space<vmem>>, %arg6: memref<1x32xf32, #tpu.memory_space<vmem>>, %arg7: memref<1x32xf32, #tpu.memory_space<vmem>>, %arg8: memref<1x8x32xf32, #tpu.memory_space<vmem>>) attributes {dimension_semantics = [#tpu.dimension_semantics<parallel>], iteration_bounds = array<i64: 2>, scalar_prefetch = 0 : i64, scratch_operands = 0 : i64, tpu.core_type = #tpu.core_type<tc>, window_params = [{transform_indices = @transform_0, window_bounds = array<i64: 1, 8, 32>}, {pipeline_mode = #tpu.pipeline_mode<synchronous>, transform_indices = @transform_1, window_bounds = array<i64: 32, 32>}, {pipeline_mode = #tpu.pipeline_mode<synchronous>, transform_indices = @transform_2, window_bounds = array<i64: 1, 32>}, {pipeline_mode = #tpu.pipeline_mode<synchronous>, transform_indices = @transform_3, window_bounds = array<i64: 32, 32>}, {pipeline_mode = #tpu.pipeline_mode<synchronous>, transform_indices = @transform_4, window_bounds = array<i64: 1, 32>}, {pipeline_mode = #tpu.pipeline_mode<synchronous>, transform_indices = @transform_5, window_bounds = array<i64: 1, 32>}, {pipeline_mode = #tpu.pipeline_mode<synchronous>, transform_indices = @transform_6, window_bounds = array<i64: 1, 32>}, {transform_indices = @transform_7, window_bounds = array<i64: 1, 8, 32>}]} {
    %c0 = arith.constant 0 : index
    %c0_0 = arith.constant 0 : index
    %c0_1 = arith.constant 0 : index
    %0 = vector.load %arg1[%c0, %c0_0, %c0_1] : memref<1x8x32xf32, #tpu.memory_space<vmem>>, vector<1x8x32xf32>
    %1 = vector.shape_cast %0 : vector<1x8x32xf32> to vector<8x32xf32>
    %c0_2 = arith.constant 0 : index
    %c0_3 = arith.constant 0 : index
    %2 = vector.load %arg2[%c0_2, %c0_3] : memref<32x32xf32, #tpu.memory_space<vmem>>, vector<32x32xf32>
    %cst = arith.constant dense<0.000000e+00> : vector<8x32xf32>
    %3 = tpu.matmul %1, %2, %cst {dimension_numbers = #tpu.dot_dimension_numbers<[1], [0], [0], [1], [0, 0, 1, 1], [], []>} : vector<8x32xf32>, vector<32x32xf32>, vector<8x32xf32> -> vector<8x32xf32>
    %c0_4 = arith.constant 0 : index
    %c0_5 = arith.constant 0 : index
    %4 = vector.load %arg3[%c0_4, %c0_5] : memref<1x32xf32, #tpu.memory_space<vmem>>, vector<1x32xf32>
    %5 = vector.broadcast %4 : vector<1x32xf32> to vector<8x32xf32>
    %6 = arith.addf %3, %5 : vector<8x32xf32>
    %cst_6 = arith.constant 8.000000e+00 : f32
    %7 = math.sqrt %cst_6 : f32
    %cst_7 = arith.constant 1.000000e+00 : f32
    %8 = arith.divf %cst_7, %7 : f32
    %9 = vector.extract_strided_slice %6 {offsets = [0, 0], sizes = [8, 8], strides = [1, 1]} : vector<8x32xf32> to vector<8x8xf32>
    %10 = tpu.transpose %9, [1, 0] : vector<8x8xf32> -> vector<8x8xf32>
    %cst_8 = arith.constant dense<0.000000e+00> : vector<8x8xf32>
    %11 = tpu.matmul %9, %10, %cst_8 {dimension_numbers = #tpu.dot_dimension_numbers<[1], [0], [0], [1], [0, 0, 1, 1], [], []>} : vector<8x8xf32>, vector<8x8xf32>, vector<8x8xf32> -> vector<8x8xf32>
    %12 = vector.broadcast %8 : f32 to vector<8x8xf32>
    %13 = arith.mulf %11, %12 : vector<8x8xf32>
    %cst_9 = arith.constant dense<0xFF800000> : vector<8xf32>
    %14 = vector.multi_reduction <maximumf>, %13, %cst_9 [1] : vector<8x8xf32> to vector<8xf32>
    %15 = vector.shape_cast %14 : vector<8xf32> to vector<8x1xf32>
    %16 = vector.broadcast %15 : vector<8x1xf32> to vector<8x8xf32>
    %17 = arith.subf %13, %16 : vector<8x8xf32>
    %18 = math.exp %17 : vector<8x8xf32>
    %cst_10 = arith.constant dense<0.000000e+00> : vector<8xf32>
    %19 = vector.multi_reduction <add>, %18, %cst_10 [1] : vector<8x8xf32> to vector<8xf32>
    %20 = vector.shape_cast %19 : vector<8xf32> to vector<8x1xf32>
    %21 = tpu.reciprocal %20 {approx = true} : vector<8x1xf32> -> vector<8x1xf32>
    %22 = vector.broadcast %21 : vector<8x1xf32> to vector<8x8xf32>
    %23 = arith.mulf %18, %22 : vector<8x8xf32>
    %cst_11 = arith.constant dense<0.000000e+00> : vector<8x8xf32>
    %24 = tpu.matmul %23, %9, %cst_11 {dimension_numbers = #tpu.dot_dimension_numbers<[1], [0], [0], [1], [0, 0, 1, 1], [], []>} : vector<8x8xf32>, vector<8x8xf32>, vector<8x8xf32> -> vector<8x8xf32>
    %25 = vector.extract_strided_slice %6 {offsets = [0, 8], sizes = [8, 8], strides = [1, 1]} : vector<8x32xf32> to vector<8x8xf32>
    %26 = tpu.transpose %25, [1, 0] : vector<8x8xf32> -> vector<8x8xf32>
    %cst_12 = arith.constant dense<0.000000e+00> : vector<8x8xf32>
    %27 = tpu.matmul %25, %26, %cst_12 {dimension_numbers = #tpu.dot_dimension_numbers<[1], [0], [0], [1], [0, 0, 1, 1], [], []>} : vector<8x8xf32>, vector<8x8xf32>, vector<8x8xf32> -> vector<8x8xf32>
    %28 = vector.broadcast %8 : f32 to vector<8x8xf32>
    %29 = arith.mulf %27, %28 : vector<8x8xf32>
    %cst_13 = arith.constant dense<0xFF800000> : vector<8xf32>
    %30 = vector.multi_reduction <maximumf>, %29, %cst_13 [1] : vector<8x8xf32> to vector<8xf32>
    %31 = vector.shape_cast %30 : vector<8xf32> to vector<8x1xf32>
    %32 = vector.broadcast %31 : vector<8x1xf32> to vector<8x8xf32>
    %33 = arith.subf %29, %32 : vector<8x8xf32>
    %34 = math.exp %33 : vector<8x8xf32>
    %cst_14 = arith.constant dense<0.000000e+00> : vector<8xf32>
    %35 = vector.multi_reduction <add>, %34, %cst_14 [1] : vector<8x8xf32> to vector<8xf32>
    %36 = vector.shape_cast %35 : vector<8xf32> to vector<8x1xf32>
    %37 = tpu.reciprocal %36 {approx = true} : vector<8x1xf32> -> vector<8x1xf32>
    %38 = vector.broadcast %37 : vector<8x1xf32> to vector<8x8xf32>
    %39 = arith.mulf %34, %38 : vector<8x8xf32>
    %cst_15 = arith.constant dense<0.000000e+00> : vector<8x8xf32>
    %40 = tpu.matmul %39, %25, %cst_15 {dimension_numbers = #tpu.dot_dimension_numbers<[1], [0], [0], [1], [0, 0, 1, 1], [], []>} : vector<8x8xf32>, vector<8x8xf32>, vector<8x8xf32> -> vector<8x8xf32>
    %41 = vector.extract_strided_slice %6 {offsets = [0, 16], sizes = [8, 8], strides = [1, 1]} : vector<8x32xf32> to vector<8x8xf32>
    %42 = tpu.transpose %41, [1, 0] : vector<8x8xf32> -> vector<8x8xf32>
    %cst_16 = arith.constant dense<0.000000e+00> : vector<8x8xf32>
    %43 = tpu.matmul %41, %42, %cst_16 {dimension_numbers = #tpu.dot_dimension_numbers<[1], [0], [0], [1], [0, 0, 1, 1], [], []>} : vector<8x8xf32>, vector<8x8xf32>, vector<8x8xf32> -> vector<8x8xf32>
    %44 = vector.broadcast %8 : f32 to vector<8x8xf32>
    %45 = arith.mulf %43, %44 : vector<8x8xf32>
    %cst_17 = arith.constant dense<0xFF800000> : vector<8xf32>
    %46 = vector.multi_reduction <maximumf>, %45, %cst_17 [1] : vector<8x8xf32> to vector<8xf32>
    %47 = vector.shape_cast %46 : vector<8xf32> to vector<8x1xf32>
    %48 = vector.broadcast %47 : vector<8x1xf32> to vector<8x8xf32>
    %49 = arith.subf %45, %48 : vector<8x8xf32>
    %50 = math.exp %49 : vector<8x8xf32>
    %cst_18 = arith.constant dense<0.000000e+00> : vector<8xf32>
    %51 = vector.multi_reduction <add>, %50, %cst_18 [1] : vector<8x8xf32> to vector<8xf32>
    %52 = vector.shape_cast %51 : vector<8xf32> to vector<8x1xf32>
    %53 = tpu.reciprocal %52 {approx = true} : vector<8x1xf32> -> vector<8x1xf32>
    %54 = vector.broadcast %53 : vector<8x1xf32> to vector<8x8xf32>
    %55 = arith.mulf %50, %54 : vector<8x8xf32>
    %cst_19 = arith.constant dense<0.000000e+00> : vector<8x8xf32>
    %56 = tpu.matmul %55, %41, %cst_19 {dimension_numbers = #tpu.dot_dimension_numbers<[1], [0], [0], [1], [0, 0, 1, 1], [], []>} : vector<8x8xf32>, vector<8x8xf32>, vector<8x8xf32> -> vector<8x8xf32>
    %57 = vector.extract_strided_slice %6 {offsets = [0, 24], sizes = [8, 8], strides = [1, 1]} : vector<8x32xf32> to vector<8x8xf32>
    %58 = tpu.transpose %57, [1, 0] : vector<8x8xf32> -> vector<8x8xf32>
    %cst_20 = arith.constant dense<0.000000e+00> : vector<8x8xf32>
    %59 = tpu.matmul %57, %58, %cst_20 {dimension_numbers = #tpu.dot_dimension_numbers<[1], [0], [0], [1], [0, 0, 1, 1], [], []>} : vector<8x8xf32>, vector<8x8xf32>, vector<8x8xf32> -> vector<8x8xf32>
    %60 = vector.broadcast %8 : f32 to vector<8x8xf32>
    %61 = arith.mulf %59, %60 : vector<8x8xf32>
    %cst_21 = arith.constant dense<0xFF800000> : vector<8xf32>
    %62 = vector.multi_reduction <maximumf>, %61, %cst_21 [1] : vector<8x8xf32> to vector<8xf32>
    %63 = vector.shape_cast %62 : vector<8xf32> to vector<8x1xf32>
    %64 = vector.broadcast %63 : vector<8x1xf32> to vector<8x8xf32>
    %65 = arith.subf %61, %64 : vector<8x8xf32>
    %66 = math.exp %65 : vector<8x8xf32>
    %cst_22 = arith.constant dense<0.000000e+00> : vector<8xf32>
    %67 = vector.multi_reduction <add>, %66, %cst_22 [1] : vector<8x8xf32> to vector<8xf32>
    %68 = vector.shape_cast %67 : vector<8xf32> to vector<8x1xf32>
    %69 = tpu.reciprocal %68 {approx = true} : vector<8x1xf32> -> vector<8x1xf32>
    %70 = vector.broadcast %69 : vector<8x1xf32> to vector<8x8xf32>
    %71 = arith.mulf %66, %70 : vector<8x8xf32>
    %cst_23 = arith.constant dense<0.000000e+00> : vector<8x8xf32>
    %72 = tpu.matmul %71, %57, %cst_23 {dimension_numbers = #tpu.dot_dimension_numbers<[1], [0], [0], [1], [0, 0, 1, 1], [], []>} : vector<8x8xf32>, vector<8x8xf32>, vector<8x8xf32> -> vector<8x8xf32>
    %73 = tpu.concatenate %24, %40, %56, %72 in 1 : vector<8x8xf32>, vector<8x8xf32>, vector<8x8xf32>, vector<8x8xf32> -> vector<8x32xf32>
    %c0_24 = arith.constant 0 : index
    %c0_25 = arith.constant 0 : index
    %74 = vector.load %arg4[%c0_24, %c0_25] : memref<32x32xf32, #tpu.memory_space<vmem>>, vector<32x32xf32>
    %cst_26 = arith.constant dense<0.000000e+00> : vector<8x32xf32>
    %75 = tpu.matmul %73, %74, %cst_26 {dimension_numbers = #tpu.dot_dimension_numbers<[1], [0], [0], [1], [0, 0, 1, 1], [], []>} : vector<8x32xf32>, vector<32x32xf32>, vector<8x32xf32> -> vector<8x32xf32>
    %c0_27 = arith.constant 0 : index
    %c0_28 = arith.constant 0 : index
    %76 = vector.load %arg5[%c0_27, %c0_28] : memref<1x32xf32, #tpu.memory_space<vmem>>, vector<1x32xf32>
    %77 = vector.broadcast %76 : vector<1x32xf32> to vector<8x32xf32>
    %78 = arith.addf %75, %77 : vector<8x32xf32>
    %79 = arith.addf %78, %1 : vector<8x32xf32>
    %cst_29 = arith.constant dense<0.000000e+00> : vector<8xf32>
    %80 = vector.multi_reduction <add>, %79, %cst_29 [1] : vector<8x32xf32> to vector<8xf32>
    %81 = vector.shape_cast %80 : vector<8xf32> to vector<8x1xf32>
    %cst_30 = arith.constant 3.200000e+01 : f32
    %82 = vector.broadcast %cst_30 : f32 to vector<8x1xf32>
    %83 = arith.divf %81, %82 : vector<8x1xf32>
    %84 = vector.broadcast %83 : vector<8x1xf32> to vector<8x32xf32>
    %85 = arith.subf %79, %84 : vector<8x32xf32>
    %86 = arith.mulf %85, %85 : vector<8x32xf32>
    %cst_31 = arith.constant dense<0.000000e+00> : vector<8xf32>
    %87 = vector.multi_reduction <add>, %86, %cst_31 [1] : vector<8x32xf32> to vector<8xf32>
    %88 = vector.shape_cast %87 : vector<8xf32> to vector<8x1xf32>
    %cst_32 = arith.constant 3.200000e+01 : f32
    %89 = vector.broadcast %cst_32 : f32 to vector<8x1xf32>
    %90 = arith.divf %88, %89 : vector<8x1xf32>
    %cst_33 = arith.constant 9.99999974E-6 : f32
    %91 = vector.broadcast %cst_33 : f32 to vector<8x1xf32>
    %92 = arith.addf %90, %91 : vector<8x1xf32>
    %93 = math.rsqrt %92 : vector<8x1xf32>
    %94 = vector.broadcast %93 : vector<8x1xf32> to vector<8x32xf32>
    %95 = arith.mulf %85, %94 : vector<8x32xf32>
    %c0_34 = arith.constant 0 : index
    %c0_35 = arith.constant 0 : index
    %96 = vector.load %arg6[%c0_34, %c0_35] : memref<1x32xf32, #tpu.memory_space<vmem>>, vector<1x32xf32>
    %97 = vector.broadcast %96 : vector<1x32xf32> to vector<8x32xf32>
    %98 = arith.mulf %95, %97 : vector<8x32xf32>
    %c0_36 = arith.constant 0 : index
    %c0_37 = arith.constant 0 : index
    %99 = vector.load %arg7[%c0_36, %c0_37] : memref<1x32xf32, #tpu.memory_space<vmem>>, vector<1x32xf32>
    %100 = vector.broadcast %99 : vector<1x32xf32> to vector<8x32xf32>
    %101 = arith.addf %98, %100 : vector<8x32xf32>
    %c0_38 = arith.constant 0 : index
    %c0_39 = arith.constant 0 : index
    %c0_40 = arith.constant 0 : index
    %102 = vector.load %arg8[%c0_38, %c0_39, %c0_40] : memref<1x8x32xf32, #tpu.memory_space<vmem>>, vector<1x8x32xf32>
    %103 = vector.shape_cast %102 : vector<1x8x32xf32> to vector<8x32xf32>
    %104 = vector.shape_cast %101 : vector<8x32xf32> to vector<1x8x32xf32>
    tpu.vector_store %arg8[%c0_38, %c0_39, %c0_40], %104 {strides = array<i32>} : memref<1x8x32xf32, #tpu.memory_space<vmem>>, vector<1x8x32xf32>,
    return
  }
  func.func @transform_0(%arg0: i32) -> (i32, i32, i32) {
    %c0_i32 = arith.constant 0 : i32
    %c0_i32_0 = arith.constant 0 : i32
    %c0_i32_1 = arith.constant 0 : i32
    return %arg0, %c0_i32, %c0_i32_0 : i32, i32, i32
  }
  func.func @transform_1(%arg0: i32) -> (i32, i32) {
    %c0_i32 = arith.constant 0 : i32
    %c0_i32_0 = arith.constant 0 : i32
    %c0_i32_1 = arith.constant 0 : i32
    return %c0_i32, %c0_i32_0 : i32, i32
  }
  func.func @transform_2(%arg0: i32) -> (i32, i32) {
    %c0_i32 = arith.constant 0 : i32
    %c0_i32_0 = arith.constant 0 : i32
    %c0_i32_1 = arith.constant 0 : i32
    return %c0_i32, %c0_i32_0 : i32, i32
  }
  func.func @transform_3(%arg0: i32) -> (i32, i32) {
    %c0_i32 = arith.constant 0 : i32
    %c0_i32_0 = arith.constant 0 : i32
    %c0_i32_1 = arith.constant 0 : i32
    return %c0_i32, %c0_i32_0 : i32, i32
  }
  func.func @transform_4(%arg0: i32) -> (i32, i32) {
    %c0_i32 = arith.constant 0 : i32
    %c0_i32_0 = arith.constant 0 : i32
    %c0_i32_1 = arith.constant 0 : i32
    return %c0_i32, %c0_i32_0 : i32, i32
  }
  func.func @transform_5(%arg0: i32) -> (i32, i32) {
    %c0_i32 = arith.constant 0 : i32
    %c0_i32_0 = arith.constant 0 : i32
    %c0_i32_1 = arith.constant 0 : i32
    return %c0_i32, %c0_i32_0 : i32, i32
  }
  func.func @transform_6(%arg0: i32) -> (i32, i32) {
    %c0_i32 = arith.constant 0 : i32
    %c0_i32_0 = arith.constant 0 : i32
    %c0_i32_1 = arith.constant 0 : i32
    return %c0_i32, %c0_i32_0 : i32, i32
  }
  func.func @transform_7(%arg0: i32) -> (i32, i32, i32) {
    %c0_i32 = arith.constant 0 : i32
    %c0_i32_0 = arith.constant 0 : i32
    %c0_i32_1 = arith.constant 0 : i32
    return %arg0, %c0_i32, %c0_i32_0 : i32, i32, i32
  }
}

module attributes {stable_mosaic.version = 11 : i64} {
  func.func @classifier_kernel(%arg0: i32, %arg1: memref<2x256xf32, #tpu.memory_space<vmem>>, %arg2: memref<256x128xf32, #tpu.memory_space<vmem>>, %arg3: memref<1x128xf32, #tpu.memory_space<vmem>>, %arg4: memref<2x128xf32, #tpu.memory_space<vmem>>) attributes {dimension_semantics = [#tpu.dimension_semantics<arbitrary>], iteration_bounds = array<i64: 1>, scalar_prefetch = 0 : i64, scratch_operands = 0 : i64, tpu.core_type = #tpu.core_type<tc>, window_params = [{pipeline_mode = #tpu.pipeline_mode<synchronous>, transform_indices = @transform_0, window_bounds = array<i64: 2, 256>}, {pipeline_mode = #tpu.pipeline_mode<synchronous>, transform_indices = @transform_1, window_bounds = array<i64: 256, 128>}, {pipeline_mode = #tpu.pipeline_mode<synchronous>, transform_indices = @transform_2, window_bounds = array<i64: 1, 128>}, {pipeline_mode = #tpu.pipeline_mode<synchronous>, transform_indices = @transform_3, window_bounds = array<i64: 2, 128>}]} {
    %c0 = arith.constant 0 : index
    %c0_0 = arith.constant 0 : index
    %0 = vector.load %arg1[%c0, %c0_0] : memref<2x256xf32, #tpu.memory_space<vmem>>, vector<2x256xf32>
    %c0_1 = arith.constant 0 : index
    %c0_2 = arith.constant 0 : index
    %1 = vector.load %arg2[%c0_1, %c0_2] : memref<256x128xf32, #tpu.memory_space<vmem>>, vector<256x128xf32>
    %cst = arith.constant dense<0.000000e+00> : vector<2x128xf32>
    %2 = tpu.matmul %0, %1, %cst {dimension_numbers = #tpu.dot_dimension_numbers<[1], [0], [0], [1], [0, 0, 1, 1], [], []>} : vector<2x256xf32>, vector<256x128xf32>, vector<2x128xf32> -> vector<2x128xf32>
    %c0_3 = arith.constant 0 : index
    %c0_4 = arith.constant 0 : index
    %3 = vector.load %arg3[%c0_3, %c0_4] : memref<1x128xf32, #tpu.memory_space<vmem>>, vector<1x128xf32>
    %4 = vector.broadcast %3 : vector<1x128xf32> to vector<2x128xf32>
    %5 = arith.addf %2, %4 : vector<2x128xf32>
    %c0_5 = arith.constant 0 : index
    %c0_6 = arith.constant 0 : index
    %6 = vector.load %arg4[%c0_5, %c0_6] : memref<2x128xf32, #tpu.memory_space<vmem>>, vector<2x128xf32>
    tpu.vector_store %arg4[%c0_5, %c0_6], %5 {strides = array<i32>} : memref<2x128xf32, #tpu.memory_space<vmem>>, vector<2x128xf32>,
    return
  }
  func.func @transform_0(%arg0: i32) -> (i32, i32) {
    %c0_i32 = arith.constant 0 : i32
    %c0_i32_0 = arith.constant 0 : i32
    %c0_i32_1 = arith.constant 0 : i32
    return %c0_i32, %c0_i32_0 : i32, i32
  }
  func.func @transform_1(%arg0: i32) -> (i32, i32) {
    %c0_i32 = arith.constant 0 : i32
    %c0_i32_0 = arith.constant 0 : i32
    %c0_i32_1 = arith.constant 0 : i32
    return %c0_i32, %c0_i32_0 : i32, i32
  }
  func.func @transform_2(%arg0: i32) -> (i32, i32) {
    %c0_i32 = arith.constant 0 : i32
    %c0_i32_0 = arith.constant 0 : i32
    %c0_i32_1 = arith.constant 0 : i32
    return %c0_i32, %c0_i32_0 : i32, i32
  }
  func.func @transform_3(%arg0: i32) -> (i32, i32) {
    %c0_i32 = arith.constant 0 : i32
    %c0_i32_0 = arith.constant 0 : i32
    %c0_i32_1 = arith.constant 0 : i32
    return %c0_i32, %c0_i32_0 : i32, i32
  }
}

</mosaic_0001>

<llo_original>
// kernel: transformer_classifier.5
$region0: #{transformer_classifier.5}
  #allocation0 [shape = 'u32[]', space=smem, size = 0x4, offset = 0x4, fixed_abs, tag = 'smem constant byte address 0x4 - core index']
  #allocation1 [shape = 'u32[144,128]{1,0:T(1,128)}', space=vmem, size = 0x12000, scoped, tag = 'internal scratch']
  %s0 = inlined_call_operand.hbm [shape: f32[2,8,32], index: 0, kind: input, shape index: {}]
  %s1 = inlined_call_operand.hbm [shape: f32[32,32], index: 1, kind: input, shape index: {}]
  %s2 = inlined_call_operand.vmem [shape: f32[1,32], index: 2, kind: input, shape index: {}]
  %s3 = inlined_call_operand.hbm [shape: f32[32,32], index: 3, kind: input, shape index: {}]
  %s4 = inlined_call_operand.vmem [shape: f32[1,32], index: 4, kind: input, shape index: {}]
  %s5 = inlined_call_operand.vmem [shape: f32[1,32], index: 5, kind: input, shape index: {}]
  %s6 = inlined_call_operand.vmem [shape: f32[1,32], index: 6, kind: input, shape index: {}]
  %s7 = inlined_call_operand.vmem [shape: f32[2,8,32], index: 7, kind: output, shape index: {}]
  %s8 = sld [smem:[#allocation0]]
  $region73: #{transformer_classifier.5} parent=0
    _
  %s10 = ssub.s32 1, %s8
  %s11 = scalar_select 0, %s10, %s8
  $region1: #{transformer_classifier.5} parent=0
    #allocation2 [shape = 'u8[8192]{0}', space=vmem, size = 0x2000, scoped, tag = 'input window, operand 0']
    #allocation3 [shape = 's32[2]{0}', space=sflag, size = 0x8, scoped, tag = 'scoped memory for transformer_classifier.5']
    #allocation4 [shape = 'u8[16384]{0}', space=vmem, size = 0x4000, scoped, tag = 'input window, operand 1, single buffered']
    #allocation5 [shape = 's32[1]{0}', space=sflag, size = 0x4, scoped, tag = 'scoped memory for transformer_classifier.5']
    #allocation6 [shape = 'u8[16384]{0}', space=vmem, size = 0x4000, scoped, tag = 'input window, operand 3, single buffered']
    %12 = vsyncpa [#allocation3], 0
    %s13 = scalar_lea.sflag [#allocation3], 1
    %14 = vsyncpa %s13, 0
    %15 = vsyncpa [#allocation5], 0
    loop: start=0, step=1, limit=4
    $region2: #{transformer_classifier.5} parent=1 // loop_pre_header
      _
    $region3: #{transformer_classifier.5} parent=1 // loop_header
      %s17 = sphi 0, %s21
      %p18 = scmp.ge.s32.totalorder %s17, 4
      %s27 = sphi 0, %s29
      %s30 = sphi 0, %s27
      %s31 = sphi 0, %s30
      %s47 = sphi 0, %s31
      %s51 = sphi 0, %s51
      %s53 = sphi 0, %s51
      %s54 = sphi 0, %s53
      %s68 = sphi 0, %s54
      %s72 = sphi 0, %s72
      %s74 = sphi 0, %s72
      %s75 = sphi 0, %s74
      %s89 = sphi 0, %s75
      %s93 = sphi 0, %s93
      %s95 = sphi 0, %s93
      %s96 = sphi 0, %s95
      %s110 = sphi 0, %s96
      %s114 = sphi 0, %s114
      %s116 = sphi 0, %s114
      %s117 = sphi 0, %s116
      %s131 = sphi 0, %s117
      %s135 = sphi 0, %s135
      %s137 = sphi 0, %s135
      %s138 = sphi 0, %s137
      %s152 = sphi 0, %s138
      %s156 = sphi 0, %s156
      %s158 = sphi 0, %s156
      %s159 = sphi 0, %s158
      %s173 = sphi 0, %s159
      %s179 = sphi 0, %s181
      %s182 = sphi 0, %s179
      %s183 = sphi 0, %s182
      %s199 = sphi 0, %s183
    $region4: #{transformer_classifier.5} parent=1 // loop_header_branch
      %20 = sbr.rel (%p18) target = $region8
    $region5: #{transformer_classifier.5} parent=1 // loop_body
      %s22 = ssub.s32 %s17, 1
      %s23 = ssub.s32 %s17, 2
      %s24 = sadd.s32 %s17, 1
      %s25 = ssub.s32 %s17, %s24
      %p26 = scmp.eq.s32.totalorder %s25, 0
      %s28 = sadd.s32 %s27, 1
      %s29 = scalar_select %p26, %s27, %s28
      %p32 = pneg %p26
      %p33 = scmp.eq.s32.totalorder %s17, 1
      %p34 = por %p32, %p33
      %p35 = scmp.ne.s32.totalorder %s27, %s30
      %p36 = scmp.eq.s32.totalorder %s17, 0
      %p37 = por %p35, %p36
      %p38 = scmp.ne.s32.totalorder %s27, %s30
      %p39 = scmp.eq.s32.totalorder %s22, 1
      %p40 = por %p38, %p39
      %p41 = scmp.ne.s32.totalorder %s30, %s31
      %p42 = scmp.eq.s32.totalorder %s22, 0
      %p43 = por %p41, %p42
      %p44 = scmp.ne.s32.totalorder %s30, %s31
      %p45 = scmp.eq.s32.totalorder %s23, 1
      %p46 = por %p44, %p45
      %p48 = scmp.ne.s32.totalorder %s31, %s47
      %p49 = scmp.eq.s32.totalorder %s23, 0
      %p50 = por %p48, %p49
      %s52 = sadd.s32 %s51, 1
      %p55 = scmp.eq.s32.totalorder %s17, 1
      %p56 = scmp.ne.s32.totalorder %s51, %s53
      %p57 = scmp.eq.s32.totalorder %s17, 0
      %p58 = por %p56, %p57
      %p59 = scmp.ne.s32.totalorder %s51, %s53
      %p60 = scmp.eq.s32.totalorder %s22, 1
      %p61 = por %p59, %p60
      %p62 = scmp.ne.s32.totalorder %s53, %s54
      %p63 = scmp.eq.s32.totalorder %s22, 0
      %p64 = por %p62, %p63
      %p65 = scmp.ne.s32.totalorder %s53, %s54
      %p66 = scmp.eq.s32.totalorder %s23, 1
      %p67 = por %p65, %p66
      %p69 = scmp.ne.s32.totalorder %s54, %s68
      %p70 = scmp.eq.s32.totalorder %s23, 0
      %p71 = por %p69, %p70
      %s73 = sadd.s32 %s72, 1
      %p76 = scmp.eq.s32.totalorder %s17, 1
      %p77 = scmp.ne.s32.totalorder %s72, %s74
      %p78 = scmp.eq.s32.totalorder %s17, 0
      %p79 = por %p77, %p78
      %p80 = scmp.ne.s32.totalorder %s72, %s74
      %p81 = scmp.eq.s32.totalorder %s22, 1
      %p82 = por %p80, %p81
      %p83 = scmp.ne.s32.totalorder %s74, %s75
      %p84 = scmp.eq.s32.totalorder %s22, 0
      %p85 = por %p83, %p84
      %p86 = scmp.ne.s32.totalorder %s74, %s75
      %p87 = scmp.eq.s32.totalorder %s23, 1
      %p88 = por %p86, %p87
      %p90 = scmp.ne.s32.totalorder %s75, %s89
      %p91 = scmp.eq.s32.totalorder %s23, 0
      %p92 = por %p90, %p91
      %s94 = sadd.s32 %s93, 1
      %p97 = scmp.eq.s32.totalorder %s17, 1
      %p98 = scmp.ne.s32.totalorder %s93, %s95
      %p99 = scmp.eq.s32.totalorder %s17, 0
      %p100 = por %p98, %p99
      %p101 = scmp.ne.s32.totalorder %s93, %s95
      %p102 = scmp.eq.s32.totalorder %s22, 1
      %p103 = por %p101, %p102
      %p104 = scmp.ne.s32.totalorder %s95, %s96
      %p105 = scmp.eq.s32.totalorder %s22, 0
      %p106 = por %p104, %p105
      %p107 = scmp.ne.s32.totalorder %s95, %s96
      %p108 = scmp.eq.s32.totalorder %s23, 1
      %p109 = por %p107, %p108
      %p111 = scmp.ne.s32.totalorder %s96, %s110
      %p112 = scmp.eq.s32.totalorder %s23, 0
      %p113 = por %p111, %p112
      %s115 = sadd.s32 %s114, 1
      %p118 = scmp.eq.s32.totalorder %s17, 1
      %p119 = scmp.ne.s32.totalorder %s114, %s116
      %p120 = scmp.eq.s32.totalorder %s17, 0
      %p121 = por %p119, %p120
      %p122 = scmp.ne.s32.totalorder %s114, %s116
      %p123 = scmp.eq.s32.totalorder %s22, 1
      %p124 = por %p122, %p123
      %p125 = scmp.ne.s32.totalorder %s116, %s117
      %p126 = scmp.eq.s32.totalorder %s22, 0
      %p127 = por %p125, %p126
      %p128 = scmp.ne.s32.totalorder %s116, %s117
      %p129 = scmp.eq.s32.totalorder %s23, 1
      %p130 = por %p128, %p129
      %p132 = scmp.ne.s32.totalorder %s117, %s131
      %p133 = scmp.eq.s32.totalorder %s23, 0
      %p134 = por %p132, %p133
      %s136 = sadd.s32 %s135, 1
      %p139 = scmp.eq.s32.totalorder %s17, 1
      %p140 = scmp.ne.s32.totalorder %s135, %s137
      %p141 = scmp.eq.s32.totalorder %s17, 0
      %p142 = por %p140, %p141
      %p143 = scmp.ne.s32.totalorder %s135, %s137
      %p144 = scmp.eq.s32.totalorder %s22, 1
      %p145 = por %p143, %p144
      %p146 = scmp.ne.s32.totalorder %s137, %s138
      %p147 = scmp.eq.s32.totalorder %s22, 0
      %p148 = por %p146, %p147
      %p149 = scmp.ne.s32.totalorder %s137, %s138
      %p150 = scmp.eq.s32.totalorder %s23, 1
      %p151 = por %p149, %p150
      %p153 = scmp.ne.s32.totalorder %s138, %s152
      %p154 = scmp.eq.s32.totalorder %s23, 0
      %p155 = por %p153, %p154
      %s157 = sadd.s32 %s156, 1
      %p160 = scmp.eq.s32.totalorder %s17, 1
      %p161 = scmp.ne.s32.totalorder %s156, %s158
      %p162 = scmp.eq.s32.totalorder %s17, 0
      %p163 = por %p161, %p162
      %p164 = scmp.ne.s32.totalorder %s156, %s158
      %p165 = scmp.eq.s32.totalorder %s22, 1
      %p166 = por %p164, %p165
      %p167 = scmp.ne.s32.totalorder %s158, %s159
      %p168 = scmp.eq.s32.totalorder %s22, 0
      %p169 = por %p167, %p168
      %p170 = scmp.ne.s32.totalorder %s158, %s159
      %p171 = scmp.eq.s32.totalorder %s23, 1
      %p172 = por %p170, %p171
      %p174 = scmp.ne.s32.totalorder %s159, %s173
      %p175 = scmp.eq.s32.totalorder %s23, 0
      %p176 = por %p174, %p175
      %s177 = ssub.s32 %s17, %s24
      %p178 = scmp.eq.s32.totalorder %s177, 0
      %s180 = sadd.s32 %s179, 1
      %s181 = scalar_select %p178, %s179, %s180
      %p184 = pneg %p178
      %p185 = scmp.eq.s32.totalorder %s17, 1
      %p186 = por %p184, %p185
      %p187 = scmp.ne.s32.totalorder %s179, %s182
      %p188 = scmp.eq.s32.totalorder %s17, 0
      %p189 = por %p187, %p188
      %p190 = scmp.ne.s32.totalorder %s179, %s182
      %p191 = scmp.eq.s32.totalorder %s22, 1
      %p192 = por %p190, %p191
      %p193 = scmp.ne.s32.totalorder %s182, %s183
      %p194 = scmp.eq.s32.totalorder %s22, 0
      %p195 = por %p193, %p194
      %p196 = scmp.ne.s32.totalorder %s182, %s183
      %p197 = scmp.eq.s32.totalorder %s23, 1
      %p198 = por %p196, %p197
      %p200 = scmp.ne.s32.totalorder %s183, %s199
      %p201 = scmp.eq.s32.totalorder %s23, 0
      %p202 = por %p200, %p201
      %p203 = scmp.le.s32.totalorder 1, %s17
      %p204 = scmp.lt.s32.totalorder %s17, 3
      %p205 = pnand %p203, %p204
      %p206 = pneg %p205
      // Predicated region
      $region9: #{transformer_classifier.5} parent=5 // pred_check
        _
      $region10: #{transformer_classifier.5} parent=5 // pred_check_branch
        %208 = sbr.rel (%p205) target = $region12
      $region11: #{transformer_classifier.5} parent=5 // pred_region
        %s209 = ssub.s32 %s17, 1
        // Predicated region
        $region13: #{transformer_classifier.5} parent=11 // pred_check
          %p210 = pneg %p64
        $region14: #{transformer_classifier.5} parent=11 // pred_check_branch
          %212 = sbr.rel (%p210) target = $region16
        $region15: #{transformer_classifier.5} parent=11 // pred_region
          %s214 = ssub.s32 512, 512
          %215 = vsyncadd [#allocation5], %s214
          %s216 = sshll.u32 [#allocation4], 4
          %s217 = int_to_ptr.vmem [resolvable:$true] %s216
          %222 = dma.hbm_to_vmem [thread:$0]  %s1, 512, %s217, [#allocation5], 128, 128, 8
        $region16: #{transformer_classifier.5} parent=11 // pred_fallthru
          _
        // Predicated region
        $region17: #{transformer_classifier.5} parent=11 // pred_check
          %p223 = pneg %p85
        $region18: #{transformer_classifier.5} parent=11 // pred_check_branch
          %225 = sbr.rel (%p223) target = $region20
        $region19: #{transformer_classifier.5} parent=11 // pred_region
          _
        $region20: #{transformer_classifier.5} parent=11 // pred_fallthru
          _
        // Predicated region
        $region21: #{transformer_classifier.5} parent=11 // pred_check
          %p226 = pneg %p106
        $region22: #{transformer_classifier.5} parent=11 // pred_check_branch
          %228 = sbr.rel (%p226) target = $region24
        $region23: #{transformer_classifier.5} parent=11 // pred_region
          %s230 = ssub.s32 512, 512
          %231 = vsyncadd [#allocation5], %s230
          %s232 = sshll.u32 [#allocation6], 4
          %s233 = int_to_ptr.vmem [resolvable:$true] %s232
          %238 = dma.hbm_to_vmem [thread:$0]  %s3, 512, %s233, [#allocation5], 128, 128, 8
        $region24: #{transformer_classifier.5} parent=11 // pred_fallthru
          _
        // Predicated region
        $region25: #{transformer_classifier.5} parent=11 // pred_check
          %p239 = pneg %p127
        $region26: #{transformer_classifier.5} parent=11 // pred_check_branch
          %241 = sbr.rel (%p239) target = $region28
        $region27: #{transformer_classifier.5} parent=11 // pred_region
          _
        $region28: #{transformer_classifier.5} parent=11 // pred_fallthru
          _
        // Predicated region
        $region29: #{transformer_classifier.5} parent=11 // pred_check
          %p242 = pneg %p148
        $region30: #{transformer_classifier.5} parent=11 // pred_check_branch
          %244 = sbr.rel (%p242) target = $region32
        $region31: #{transformer_classifier.5} parent=11 // pred_region
          _
        $region32: #{transformer_classifier.5} parent=11 // pred_fallthru
          _
        // Predicated region
        $region33: #{transformer_classifier.5} parent=11 // pred_check
          %p245 = pneg %p169
        $region34: #{transformer_classifier.5} parent=11 // pred_check_branch
          %247 = sbr.rel (%p245) target = $region36
        $region35: #{transformer_classifier.5} parent=11 // pred_region
          _
        $region36: #{transformer_classifier.5} parent=11 // pred_fallthru
          _
      $region12: #{transformer_classifier.5} parent=5 // pred_fallthru
        _
      %p248 = scmp.lt.s32.totalorder %s17, 2
      // Predicated region
      $region37: #{transformer_classifier.5} parent=5 // pred_check
        %p249 = pneg %p248
      $region38: #{transformer_classifier.5} parent=5 // pred_check_branch
        %251 = sbr.rel (%p249) target = $region40
      $region39: #{transformer_classifier.5} parent=5 // pred_region
        // Predicated region
        $region41: #{transformer_classifier.5} parent=39 // pred_check
          %p252 = pneg %p37
        $region42: #{transformer_classifier.5} parent=39 // pred_check_branch
          %254 = sbr.rel (%p252) target = $region44
        $region43: #{transformer_classifier.5} parent=39 // pred_region
          %s255 = sand.u32 %s27, 1
          %s256 = scalar_lea.sflag [#allocation3], %s255
          %s257 = sand.u32 %s27, 1
          %s258 = smul.addr %s257, 8
          %s259 = scalar_lea.vmem [#allocation2], %s258
          %s261 = ssub.s32 128, 128
          %262 = vsyncadd %s256, %s261
          %s263 = smul.addr %s17, 128
          %s264 = scalar_lea.hbm %s0, %s263
          %s266 = sshll.u32 %s259, 4
          %s267 = int_to_ptr.vmem [resolvable:$true] %s266
          %269 = dma.hbm_to_vmem [thread:$0]  %s264, 128, %s267, %s256
        $region44: #{transformer_classifier.5} parent=39 // pred_fallthru
          _
      $region40: #{transformer_classifier.5} parent=5 // pred_fallthru
        _
      %p270 = scmp.le.s32.totalorder 1, %s17
      %p271 = scmp.lt.s32.totalorder %s17, 3
      %p272 = pnand %p270, %p271
      %p273 = pneg %p272
      // Predicated region
      $region45: #{transformer_classifier.5} parent=5 // pred_check
        _
      $region46: #{transformer_classifier.5} parent=5 // pred_check_branch
        %275 = sbr.rel (%p272) target = $region48
      $region47: #{transformer_classifier.5} parent=5 // pred_region
        %s276 = ssub.s32 %s17, 1
        %s277 = sand.u32 %s30, 1
        %s278 = scalar_lea.sflag [#allocation3], %s277
        %s279 = sand.u32 %s30, 1
        %s280 = smul.addr %s279, 8
        %s281 = scalar_lea.vmem [#allocation2], %s280
        // Predicated region
        $region49: #{transformer_classifier.5} parent=47 // pred_check
          %p282 = pneg %p43
        $region50: #{transformer_classifier.5} parent=47 // pred_check_branch
          %284 = sbr.rel (%p282) target = $region52
        $region51: #{transformer_classifier.5} parent=47 // pred_region
          %285 = dma.done %s278, 128
        $region52: #{transformer_classifier.5} parent=47 // pred_fallthru
          _
        // Predicated region
        $region53: #{transformer_classifier.5} parent=47 // pred_check
          %p286 = pneg %p64
        $region54: #{transformer_classifier.5} parent=47 // pred_check_branch
          %288 = sbr.rel (%p286) target = $region56
        $region55: #{transformer_classifier.5} parent=47 // pred_region
          %289 = dma.done [#allocation5], 512
        $region56: #{transformer_classifier.5} parent=47 // pred_fallthru
          _
        // Predicated region
        $region57: #{transformer_classifier.5} parent=47 // pred_check
          %p290 = pneg %p106
        $region58: #{transformer_classifier.5} parent=47 // pred_check_branch
          %292 = sbr.rel (%p290) target = $region60
        $region59: #{transformer_classifier.5} parent=47 // pred_region
          %293 = dma.done [#allocation5], 512
        $region60: #{transformer_classifier.5} parent=47 // pred_fallthru
          _
        %s294 = sand.u32 %s30, 1
        %s295 = scalar_lea.sflag [#allocation3], %s294
        %s296 = sand.u32 %s30, 1
        %s297 = smul.addr %s296, 8
        %s298 = scalar_lea.vmem [#allocation2], %s297
        %p299 = pneg %p43
        %p300 = pneg %p40
        %p301 = pneg %p64
        %p302 = pneg %p61
        %p303 = pneg %p85
        %p304 = pneg %p82
        %p305 = pneg %p106
        %p306 = pneg %p103
        %p307 = pneg %p127
        %p308 = pneg %p124
        %p309 = pneg %p148
        %p310 = pneg %p145
        %p311 = pneg %p169
        %p312 = pneg %p166
        %p313 = pneg %p195
        %p314 = pneg %p192
        %p315 = scmp.lt.s32.totalorder %s22, 1
        %s316 = scalar_select %p315, %s22, 1
        %s317 = smul.addr %s316, 8
        %s318 = scalar_lea.vmem %s7, %s317
        %p319 = scmp.lt.s32.totalorder %s22, 1
        %s320 = scalar_select %p319, %s22, 1
        %s321 = smul.addr %s320, 8
        %s322 = scalar_lea.vmem %s7, %s321
        %v323 = vld [vmem:[%s281] sm:$0xff]
        %v324 = vld [vmem:[#allocation4] sm:$0xff]
        %v325 = vld [vmem:[#allocation4 + $0x8] sm:$0xff]
        %v326 = vld [vmem:[#allocation4 + $0x10] sm:$0xff]
        %v327 = vld [vmem:[#allocation4 + $0x18] sm:$0xff]
        %v328 = vld [vmem:[%s2] sm:$0x1]
        %v330 = vlaneseq
        %v331 = vshrl.u32 %v330, 7
        %v332 = vsub.s32 0, %v331
        %v333 = vrot.slane %v328, %v332
        %vm335 = vcmask 261120
        %v337 = vsel %vm335, %v323, 0
        %339 = vmatprep.subr.mxu0 0.0
        %340 = vmatpush1.msra.mxu0 0.0
        %341 = vmatprep.subr.mxu0 0.0
        %342 = vmatpush1.msra.mxu0 0.0
        %343 = vmatprep.subr.mxu0 0.0
        %344 = vmatpush1.msra.mxu0 0.0
        %345 = vmatprep.subr.mxu0 0.0
        %346 = vmatpush1.msra.mxu0 0.0
        %347 = vmatprep.subr.mxu0 0.0
        %348 = vmatpush1.msra.mxu0 0.0
        %349 = vmatprep.subr.mxu0 0.0
        %350 = vmatpush1.msra.mxu0 0.0
        %351 = vmatprep.subr.mxu0 0.0
        %352 = vmatpush1.msra.mxu0 0.0
        %353 = vmatprep.subr.mxu0 0.0
        %354 = vmatpush1.msra.mxu0 0.0
        %355 = vmatprep.subr.mxu0 0.0
        %356 = vmatpush1.msra.mxu0 0.0
        %357 = vmatprep.subr.mxu0 0.0
        %358 = vmatpush1.msra.mxu0 0.0
        %359 = vmatprep.subr.mxu0 0.0
        %360 = vmatpush1.msra.mxu0 0.0
        %361 = vmatprep.subr.mxu0 0.0
        %362 = vmatpush1.msra.mxu0 0.0
        %363 = vmatprep.subr.mxu0 0.0
        %364 = vmatpush1.msra.mxu0 %v327
        %365 = vmatprep.subr.mxu0 0.0
        %366 = vmatpush1.msra.mxu0 %v326
        %367 = vmatprep.subr.mxu0 0.0
        %368 = vmatpush1.msra.mxu0 %v325
        %369 = vmatprep.subr.mxu0 0.0
        %370 = vmatpush1.msra.mxu0 %v324
        %371 = vmatprep.subr.mxu0 0.0
        %372 = vmatpush2.msra.mxu0 0.0
        %373 = vmatprep.subr.mxu0 0.0
        %374 = vmatpush2.msra.mxu0 0.0
        %375 = vmatprep.subr.mxu0 0.0
        %376 = vmatpush2.msra.mxu0 0.0
        %377 = vmatprep.subr.mxu0 0.0
        %378 = vmatpush2.msra.mxu0 0.0
        %379 = vmatprep.subr.mxu0 0.0
        %380 = vmatpush2.msra.mxu0 0.0
        %381 = vmatprep.subr.mxu0 0.0
        %382 = vmatpush2.msra.mxu0 0.0
        %383 = vmatprep.subr.mxu0 0.0
        %384 = vmatpush2.msra.mxu0 0.0
        %385 = vmatprep.subr.mxu0 0.0
        %386 = vmatpush2.msra.mxu0 0.0
        %387 = vmatprep.subr.mxu0 0.0
        %388 = vmatpush2.msra.mxu0 0.0
        %389 = vmatprep.subr.mxu0 0.0
        %390 = vmatpush2.msra.mxu0 0.0
        %391 = vmatprep.subr.mxu0 0.0
        %392 = vmatpush2.msra.mxu0 0.0
        %393 = vmatprep.subr.mxu0 0.0
        %394 = vmatpush2.msra.mxu0 0.0
        %395 = vmatprep.subr.mxu0 0.0
        %396 = vmatpush2.msra.mxu0 0.0
        %397 = vmatprep.subr.mxu0 0.0
        %398 = vmatpush2.msra.mxu0 0.0
        %399 = vmatprep.subr.mxu0 0.0
        %400 = vmatpush2.msra.mxu0 0.0
        %401 = vmatprep.subr.mxu0 0.0
        %402 = vmatpush2.msra.mxu0 0.0
        %403 = vmatprep.mubr.f32.mxu0 0.0
        %404 = vmatmul.mubr.f32.gmra.mxu0 %v337
        %v405 = vpop.f32.mrf.mxu0
        %v406 = vadd.f32 %v333, %v405
        %v407 = vpop.f32.mrf.mxu0
        %408 = vdwg.mxu0
        %vm409 = vcmask 64512
        %v411 = vsel %vm409, %v406, 0
        %413 = vmatprep.subr.mxu0 0.0
        %414 = vmatpush1.xpose.msra.mxu0 0.0
        %415 = vmatprep.subr.mxu0 0.0
        %416 = vmatpush1.xpose.msra.mxu0 0.0
        %417 = vmatprep.subr.mxu0 0.0
        %418 = vmatpush1.xpose.msra.mxu0 0.0
        %419 = vmatprep.subr.mxu0 0.0
        %420 = vmatpush1.xpose.msra.mxu0 0.0
        %421 = vmatprep.subr.mxu0 0.0
        %422 = vmatpush1.xpose.msra.mxu0 0.0
        %423 = vmatprep.subr.mxu0 0.0
        %424 = vmatpush1.xpose.msra.mxu0 0.0
        %425 = vmatprep.subr.mxu0 0.0
        %426 = vmatpush1.xpose.msra.mxu0 0.0
        %427 = vmatprep.subr.mxu0 0.0
        %428 = vmatpush1.xpose.msra.mxu0 0.0
        %429 = vmatprep.subr.mxu0 0.0
        %430 = vmatpush1.xpose.msra.mxu0 0.0
        %431 = vmatprep.subr.mxu0 0.0
        %432 = vmatpush1.xpose.msra.mxu0 0.0
        %433 = vmatprep.subr.mxu0 0.0
        %434 = vmatpush1.xpose.msra.mxu0 0.0
        %435 = vmatprep.subr.mxu0 0.0
        %436 = vmatpush1.xpose.msra.mxu0 0.0
        %437 = vmatprep.subr.mxu0 0.0
        %438 = vmatpush1.xpose.msra.mxu0 0.0
        %439 = vmatprep.subr.mxu0 0.0
        %440 = vmatpush1.xpose.msra.mxu0 0.0
        %441 = vmatprep.subr.mxu0 0.0
        %442 = vmatpush1.xpose.msra.mxu0 0.0
        %443 = vmatprep.subr.mxu0 0.0
        %444 = vmatpush1.xpose.msra.mxu0 %v411
        %445 = vmatprep.subr.mxu0 0.0
        %446 = vmatpush2.xpose.msra.mxu0 0.0
        %447 = vmatprep.subr.mxu0 0.0
        %448 = vmatpush2.xpose.msra.mxu0 0.0
        %449 = vmatprep.subr.mxu0 0.0
        %450 = vmatpush2.xpose.msra.mxu0 0.0
        %451 = vmatprep.subr.mxu0 0.0
        %452 = vmatpush2.xpose.msra.mxu0 0.0
        %453 = vmatprep.subr.mxu0 0.0
        %454 = vmatpush2.xpose.msra.mxu0 0.0
        %455 = vmatprep.subr.mxu0 0.0
        %456 = vmatpush2.xpose.msra.mxu0 0.0
        %457 = vmatprep.subr.mxu0 0.0
        %458 = vmatpush2.xpose.msra.mxu0 0.0
        %459 = vmatprep.subr.mxu0 0.0
        %460 = vmatpush2.xpose.msra.mxu0 0.0
        %461 = vmatprep.subr.mxu0 0.0
        %462 = vmatpush2.xpose.msra.mxu0 0.0
        %463 = vmatprep.subr.mxu0 0.0
        %464 = vmatpush2.xpose.msra.mxu0 0.0
        %465 = vmatprep.subr.mxu0 0.0
        %466 = vmatpush2.xpose.msra.mxu0 0.0
        %467 = vmatprep.subr.mxu0 0.0
        %468 = vmatpush2.xpose.msra.mxu0 0.0
        %469 = vmatprep.subr.mxu0 0.0
        %470 = vmatpush2.xpose.msra.mxu0 0.0
        %471 = vmatprep.subr.mxu0 0.0
        %472 = vmatpush2.xpose.msra.mxu0 0.0
        %473 = vmatprep.subr.mxu0 0.0
        %474 = vmatpush2.xpose.msra.mxu0 0.0
        %475 = vmatprep.subr.mxu0 0.0
        %476 = vmatpush2.xpose.msra.mxu0 0.0
        %477 = vmatprep.mubr.f32.mxu0 0.0
        %478 = vmatmul.mubr.f32.gmra.mxu0 %v411
        %v479 = vpop.f32.mrf.mxu0
        %v480 = vadd.f32 0.0, %v479
        %v481 = vpop.f32.mrf.mxu0
        %482 = vdwg.mxu0
        %v483 = vmul.f32 %v480, 0.35355338
        %v484 = vsel %vm409, %v483, -inf
        %485 = vmax.xlane.f32.xlu0 %v484
        %v486 = vpop.xlane.xlu0 %485
        %v487 = vsub.f32 %v483, %v486
        %v488 = vmul.f32 %v487, 1.442695
        %v489 = vpow.pop %v488
        %v490 = vsel %vm409, %v489, 0.0
        %491 = vadd.xlane.f32.xlu0 %v490
        %v492 = vpop.xlane.xlu0 %491
        %v493 = vrcp.pop %v492
        %v494 = vmul.f32 %v489, %v493
        %v496 = vsel %vm409, %v494, 0
        %498 = vmatprep.subr.mxu0 0.0
        %499 = vmatpush1.msra.mxu0 0.0
        %500 = vmatprep.subr.mxu0 0.0
        %501 = vmatpush1.msra.mxu0 0.0
        %502 = vmatprep.subr.mxu0 0.0
        %503 = vmatpush1.msra.mxu0 0.0
        %504 = vmatprep.subr.mxu0 0.0
        %505 = vmatpush1.msra.mxu0 0.0
        %506 = vmatprep.subr.mxu0 0.0
        %507 = vmatpush1.msra.mxu0 0.0
        %508 = vmatprep.subr.mxu0 0.0
        %509 = vmatpush1.msra.mxu0 0.0
        %510 = vmatprep.subr.mxu0 0.0
        %511 = vmatpush1.msra.mxu0 0.0
        %512 = vmatprep.subr.mxu0 0.0
        %513 = vmatpush1.msra.mxu0 0.0
        %514 = vmatprep.subr.mxu0 0.0
        %515 = vmatpush1.msra.mxu0 0.0
        %516 = vmatprep.subr.mxu0 0.0
        %517 = vmatpush1.msra.mxu0 0.0
        %518 = vmatprep.subr.mxu0 0.0
        %519 = vmatpush1.msra.mxu0 0.0
        %520 = vmatprep.subr.mxu0 0.0
        %521 = vmatpush1.msra.mxu0 0.0
        %522 = vmatprep.subr.mxu0 0.0
        %523 = vmatpush1.msra.mxu0 0.0
        %524 = vmatprep.subr.mxu0 0.0
        %525 = vmatpush1.msra.mxu0 0.0
        %526 = vmatprep.subr.mxu0 0.0
        %527 = vmatpush1.msra.mxu0 0.0
        %528 = vmatprep.subr.mxu0 0.0
        %529 = vmatpush1.msra.mxu0 %v406
        %530 = vmatprep.subr.mxu0 0.0
        %531 = vmatpush2.msra.mxu0 0.0
        %532 = vmatprep.subr.mxu0 0.0
        %533 = vmatpush2.msra.mxu0 0.0
        %534 = vmatprep.subr.mxu0 0.0
        %535 = vmatpush2.msra.mxu0 0.0
        %536 = vmatprep.subr.mxu0 0.0
        %537 = vmatpush2.msra.mxu0 0.0
        %538 = vmatprep.subr.mxu0 0.0
        %539 = vmatpush2.msra.mxu0 0.0
        %540 = vmatprep.subr.mxu0 0.0
        %541 = vmatpush2.msra.mxu0 0.0
        %542 = vmatprep.subr.mxu0 0.0
        %543 = vmatpush2.msra.mxu0 0.0
        %544 = vmatprep.subr.mxu0 0.0
        %545 = vmatpush2.msra.mxu0 0.0
        %546 = vmatprep.subr.mxu0 0.0
        %547 = vmatpush2.msra.mxu0 0.0
        %548 = vmatprep.subr.mxu0 0.0
        %549 = vmatpush2.msra.mxu0 0.0
        %550 = vmatprep.subr.mxu0 0.0
        %551 = vmatpush2.msra.mxu0 0.0
        %552 = vmatprep.subr.mxu0 0.0
        %553 = vmatpush2.msra.mxu0 0.0
        %554 = vmatprep.subr.mxu0 0.0
        %555 = vmatpush2.msra.mxu0 0.0
        %556 = vmatprep.subr.mxu0 0.0
        %557 = vmatpush2.msra.mxu0 0.0
        %558 = vmatprep.subr.mxu0 0.0
        %559 = vmatpush2.msra.mxu0 0.0
        %560 = vmatprep.subr.mxu0 0.0
        %561 = vmatpush2.msra.mxu0 0.0
        %562 = vmatprep.mubr.f32.mxu0 0.0
        %563 = vmatmul.mubr.f32.gmra.mxu0 %v496
        %v564 = vpop.f32.mrf.mxu0
        %v565 = vadd.f32 0.0, %v564
        %v566 = vpop.f32.mrf.mxu0
        %567 = vdwg.mxu0
        %568 = vrot.lane.b32.xlu0 %v406, 120
        %v569 = vpop.permute.xlu0 %568
        %v570 = vsel %vm409, %v569, 0
        %572 = vmatprep.subr.mxu0 0.0
        %573 = vmatpush1.xpose.msra.mxu0 0.0
        %574 = vmatprep.subr.mxu0 0.0
        %575 = vmatpush1.xpose.msra.mxu0 0.0
        %576 = vmatprep.subr.mxu0 0.0
        %577 = vmatpush1.xpose.msra.mxu0 0.0
        %578 = vmatprep.subr.mxu0 0.0
        %579 = vmatpush1.xpose.msra.mxu0 0.0
        %580 = vmatprep.subr.mxu0 0.0
        %581 = vmatpush1.xpose.msra.mxu0 0.0
        %582 = vmatprep.subr.mxu0 0.0
        %583 = vmatpush1.xpose.msra.mxu0 0.0
        %584 = vmatprep.subr.mxu0 0.0
        %585 = vmatpush1.xpose.msra.mxu0 0.0
        %586 = vmatprep.subr.mxu0 0.0
        %587 = vmatpush1.xpose.msra.mxu0 0.0
        %588 = vmatprep.subr.mxu0 0.0
        %589 = vmatpush1.xpose.msra.mxu0 0.0
        %590 = vmatprep.subr.mxu0 0.0
        %591 = vmatpush1.xpose.msra.mxu0 0.0
        %592 = vmatprep.subr.mxu0 0.0
        %593 = vmatpush1.xpose.msra.mxu0 0.0
        %594 = vmatprep.subr.mxu0 0.0
        %595 = vmatpush1.xpose.msra.mxu0 0.0
        %596 = vmatprep.subr.mxu0 0.0
        %597 = vmatpush1.xpose.msra.mxu0 0.0
        %598 = vmatprep.subr.mxu0 0.0
        %599 = vmatpush1.xpose.msra.mxu0 0.0
        %600 = vmatprep.subr.mxu0 0.0
        %601 = vmatpush1.xpose.msra.mxu0 0.0
        %602 = vmatprep.subr.mxu0 0.0
        %603 = vmatpush1.xpose.msra.mxu0 %v570
        %604 = vmatprep.subr.mxu0 0.0
        %605 = vmatpush2.xpose.msra.mxu0 0.0
        %606 = vmatprep.subr.mxu0 0.0
        %607 = vmatpush2.xpose.msra.mxu0 0.0
        %608 = vmatprep.subr.mxu0 0.0
        %609 = vmatpush2.xpose.msra.mxu0 0.0
        %610 = vmatprep.subr.mxu0 0.0
        %611 = vmatpush2.xpose.msra.mxu0 0.0
        %612 = vmatprep.subr.mxu0 0.0
        %613 = vmatpush2.xpose.msra.mxu0 0.0
        %614 = vmatprep.subr.mxu0 0.0
        %615 = vmatpush2.xpose.msra.mxu0 0.0
        %616 = vmatprep.subr.mxu0 0.0
        %617 = vmatpush2.xpose.msra.mxu0 0.0
        %618 = vmatprep.subr.mxu0 0.0
        %619 = vmatpush2.xpose.msra.mxu0 0.0
        %620 = vmatprep.subr.mxu0 0.0
        %621 = vmatpush2.xpose.msra.mxu0 0.0
        %622 = vmatprep.subr.mxu0 0.0
        %623 = vmatpush2.xpose.msra.mxu0 0.0
        %624 = vmatprep.subr.mxu0 0.0
        %625 = vmatpush2.xpose.msra.mxu0 0.0
        %626 = vmatprep.subr.mxu0 0.0
        %627 = vmatpush2.xpose.msra.mxu0 0.0
        %628 = vmatprep.subr.mxu0 0.0
        %629 = vmatpush2.xpose.msra.mxu0 0.0
        %630 = vmatprep.subr.mxu0 0.0
        %631 = vmatpush2.xpose.msra.mxu0 0.0
        %632 = vmatprep.subr.mxu0 0.0
        %633 = vmatpush2.xpose.msra.mxu0 0.0
        %634 = vmatprep.subr.mxu0 0.0
        %635 = vmatpush2.xpose.msra.mxu0 0.0
        %636 = vmatprep.mubr.f32.mxu0 0.0
        %637 = vmatmul.mubr.f32.gmra.mxu0 %v570
        %v638 = vpop.f32.mrf.mxu0
        %v639 = vadd.f32 0.0, %v638
        %v640 = vpop.f32.mrf.mxu0
        %641 = vdwg.mxu0
        %v642 = vmul.f32 %v639, 0.35355338
        %v643 = vsel %vm409, %v642, -inf
        %644 = vmax.xlane.f32.xlu0 %v643
        %v645 = vpop.xlane.xlu0 %644
        %v646 = vsub.f32 %v642, %v645
        %v647 = vmul.f32 %v646, 1.442695
        %v648 = vpow.pop %v647
        %v649 = vsel %vm409, %v648, 0.0
        %650 = vadd.xlane.f32.xlu0 %v649
        %v651 = vpop.xlane.xlu0 %650
        %v652 = vrcp.pop %v651
        %v653 = vmul.f32 %v648, %v652
        %v656 = vsel %vm409, %v653, 0
        %658 = vmatprep.subr.mxu0 0.0
        %659 = vmatpush1.msra.mxu0 0.0
        %660 = vmatprep.subr.mxu0 0.0
        %661 = vmatpush1.msra.mxu0 0.0
        %662 = vmatprep.subr.mxu0 0.0
        %663 = vmatpush1.msra.mxu0 0.0
        %664 = vmatprep.subr.mxu0 0.0
        %665 = vmatpush1.msra.mxu0 0.0
        %666 = vmatprep.subr.mxu0 0.0
        %667 = vmatpush1.msra.mxu0 0.0
        %668 = vmatprep.subr.mxu0 0.0
        %669 = vmatpush1.msra.mxu0 0.0
        %670 = vmatprep.subr.mxu0 0.0
        %671 = vmatpush1.msra.mxu0 0.0
        %672 = vmatprep.subr.mxu0 0.0
        %673 = vmatpush1.msra.mxu0 0.0
        %674 = vmatprep.subr.mxu0 0.0
        %675 = vmatpush1.msra.mxu0 0.0
        %676 = vmatprep.subr.mxu0 0.0
        %677 = vmatpush1.msra.mxu0 0.0
        %678 = vmatprep.subr.mxu0 0.0
        %679 = vmatpush1.msra.mxu0 0.0
        %680 = vmatprep.subr.mxu0 0.0
        %681 = vmatpush1.msra.mxu0 0.0
        %682 = vmatprep.subr.mxu0 0.0
        %683 = vmatpush1.msra.mxu0 0.0
        %684 = vmatprep.subr.mxu0 0.0
        %685 = vmatpush1.msra.mxu0 0.0
        %686 = vmatprep.subr.mxu0 0.0
        %687 = vmatpush1.msra.mxu0 0.0
        %688 = vmatprep.subr.mxu0 0.0
        %689 = vmatpush1.msra.mxu0 %v569
        %690 = vmatprep.subr.mxu0 0.0
        %691 = vmatpush2.msra.mxu0 0.0
        %692 = vmatprep.subr.mxu0 0.0
        %693 = vmatpush2.msra.mxu0 0.0
        %694 = vmatprep.subr.mxu0 0.0
        %695 = vmatpush2.msra.mxu0 0.0
        %696 = vmatprep.subr.mxu0 0.0
        %697 = vmatpush2.msra.mxu0 0.0
        %698 = vmatprep.subr.mxu0 0.0
        %699 = vmatpush2.msra.mxu0 0.0
        %700 = vmatprep.subr.mxu0 0.0
        %701 = vmatpush2.msra.mxu0 0.0
        %702 = vmatprep.subr.mxu0 0.0
        %703 = vmatpush2.msra.mxu0 0.0
        %704 = vmatprep.subr.mxu0 0.0
        %705 = vmatpush2.msra.mxu0 0.0
        %706 = vmatprep.subr.mxu0 0.0
        %707 = vmatpush2.msra.mxu0 0.0
        %708 = vmatprep.subr.mxu0 0.0
        %709 = vmatpush2.msra.mxu0 0.0
        %710 = vmatprep.subr.mxu0 0.0
        %711 = vmatpush2.msra.mxu0 0.0
        %712 = vmatprep.subr.mxu0 0.0
        %713 = vmatpush2.msra.mxu0 0.0
        %714 = vmatprep.subr.mxu0 0.0
        %715 = vmatpush2.msra.mxu0 0.0
        %716 = vmatprep.subr.mxu0 0.0
        %717 = vmatpush2.msra.mxu0 0.0
        %718 = vmatprep.subr.mxu0 0.0
        %719 = vmatpush2.msra.mxu0 0.0
        %720 = vmatprep.subr.mxu0 0.0
        %721 = vmatpush2.msra.mxu0 0.0
        %722 = vmatprep.mubr.f32.mxu0 0.0
        %723 = vmatmul.mubr.f32.gmra.mxu0 %v656
        %v724 = vpop.f32.mrf.mxu0
        %v725 = vadd.f32 0.0, %v724
        %v726 = vpop.f32.mrf.mxu0
        %727 = vdwg.mxu0
        %728 = vrot.lane.b32.xlu0 %v406, 112
        %v729 = vpop.permute.xlu0 %728
        %v730 = vsel %vm409, %v729, 0
        %732 = vmatprep.subr.mxu0 0.0
        %733 = vmatpush1.xpose.msra.mxu0 0.0
        %734 = vmatprep.subr.mxu0 0.0
        %735 = vmatpush1.xpose.msra.mxu0 0.0
        %736 = vmatprep.subr.mxu0 0.0
        %737 = vmatpush1.xpose.msra.mxu0 0.0
        %738 = vmatprep.subr.mxu0 0.0
        %739 = vmatpush1.xpose.msra.mxu0 0.0
        %740 = vmatprep.subr.mxu0 0.0
        %741 = vmatpush1.xpose.msra.mxu0 0.0
        %742 = vmatprep.subr.mxu0 0.0
        %743 = vmatpush1.xpose.msra.mxu0 0.0
        %744 = vmatprep.subr.mxu0 0.0
        %745 = vmatpush1.xpose.msra.mxu0 0.0
        %746 = vmatprep.subr.mxu0 0.0
        %747 = vmatpush1.xpose.msra.mxu0 0.0
        %748 = vmatprep.subr.mxu0 0.0
        %749 = vmatpush1.xpose.msra.mxu0 0.0
        %750 = vmatprep.subr.mxu0 0.0
        %751 = vmatpush1.xpose.msra.mxu0 0.0
        %752 = vmatprep.subr.mxu0 0.0
        %753 = vmatpush1.xpose.msra.mxu0 0.0
        %754 = vmatprep.subr.mxu0 0.0
        %755 = vmatpush1.xpose.msra.mxu0 0.0
        %756 = vmatprep.subr.mxu0 0.0
        %757 = vmatpush1.xpose.msra.mxu0 0.0
        %758 = vmatprep.subr.mxu0 0.0
        %759 = vmatpush1.xpose.msra.mxu0 0.0
        %760 = vmatprep.subr.mxu0 0.0
        %761 = vmatpush1.xpose.msra.mxu0 0.0
        %762 = vmatprep.subr.mxu0 0.0
        %763 = vmatpush1.xpose.msra.mxu0 %v730
        %764 = vmatprep.subr.mxu0 0.0
        %765 = vmatpush2.xpose.msra.mxu0 0.0
        %766 = vmatprep.subr.mxu0 0.0
        %767 = vmatpush2.xpose.msra.mxu0 0.0
        %768 = vmatprep.subr.mxu0 0.0
        %769 = vmatpush2.xpose.msra.mxu0 0.0
        %770 = vmatprep.subr.mxu0 0.0
        %771 = vmatpush2.xpose.msra.mxu0 0.0
        %772 = vmatprep.subr.mxu0 0.0
        %773 = vmatpush2.xpose.msra.mxu0 0.0
        %774 = vmatprep.subr.mxu0 0.0
        %775 = vmatpush2.xpose.msra.mxu0 0.0
        %776 = vmatprep.subr.mxu0 0.0
        %777 = vmatpush2.xpose.msra.mxu0 0.0
        %778 = vmatprep.subr.mxu0 0.0
        %779 = vmatpush2.xpose.msra.mxu0 0.0
        %780 = vmatprep.subr.mxu0 0.0
        %781 = vmatpush2.xpose.msra.mxu0 0.0
        %782 = vmatprep.subr.mxu0 0.0
        %783 = vmatpush2.xpose.msra.mxu0 0.0
        %784 = vmatprep.subr.mxu0 0.0
        %785 = vmatpush2.xpose.msra.mxu0 0.0
        %786 = vmatprep.subr.mxu0 0.0
        %787 = vmatpush2.xpose.msra.mxu0 0.0
        %788 = vmatprep.subr.mxu0 0.0
        %789 = vmatpush2.xpose.msra.mxu0 0.0
        %790 = vmatprep.subr.mxu0 0.0
        %791 = vmatpush2.xpose.msra.mxu0 0.0
        %792 = vmatprep.subr.mxu0 0.0
        %793 = vmatpush2.xpose.msra.mxu0 0.0
        %794 = vmatprep.subr.mxu0 0.0
        %795 = vmatpush2.xpose.msra.mxu0 0.0
        %796 = vmatprep.mubr.f32.mxu0 0.0
        %797 = vmatmul.mubr.f32.gmra.mxu0 %v730
        %v798 = vpop.f32.mrf.mxu0
        %v799 = vadd.f32 0.0, %v798
        %v800 = vpop.f32.mrf.mxu0
        %801 = vdwg.mxu0
        %v802 = vmul.f32 %v799, 0.35355338
        %v803 = vsel %vm409, %v802, -inf
        %804 = vmax.xlane.f32.xlu0 %v803
        %v805 = vpop.xlane.xlu0 %804
        %v806 = vsub.f32 %v802, %v805
        %v807 = vmul.f32 %v806, 1.442695
        %v808 = vpow.pop %v807
        %v809 = vsel %vm409, %v808, 0.0
        %810 = vadd.xlane.f32.xlu0 %v809
        %v811 = vpop.xlane.xlu0 %810
        %v812 = vrcp.pop %v811
        %v813 = vmul.f32 %v808, %v812
        %v816 = vsel %vm409, %v813, 0
        %818 = vmatprep.subr.mxu0 0.0
        %819 = vmatpush1.msra.mxu0 0.0
        %820 = vmatprep.subr.mxu0 0.0
        %821 = vmatpush1.msra.mxu0 0.0
        %822 = vmatprep.subr.mxu0 0.0
        %823 = vmatpush1.msra.mxu0 0.0
        %824 = vmatprep.subr.mxu0 0.0
        %825 = vmatpush1.msra.mxu0 0.0
        %826 = vmatprep.subr.mxu0 0.0
        %827 = vmatpush1.msra.mxu0 0.0
        %828 = vmatprep.subr.mxu0 0.0
        %829 = vmatpush1.msra.mxu0 0.0
        %830 = vmatprep.subr.mxu0 0.0
        %831 = vmatpush1.msra.mxu0 0.0
        %832 = vmatprep.subr.mxu0 0.0
        %833 = vmatpush1.msra.mxu0 0.0
        %834 = vmatprep.subr.mxu0 0.0
        %835 = vmatpush1.msra.mxu0 0.0
        %836 = vmatprep.subr.mxu0 0.0
        %837 = vmatpush1.msra.mxu0 0.0
        %838 = vmatprep.subr.mxu0 0.0
        %839 = vmatpush1.msra.mxu0 0.0
        %840 = vmatprep.subr.mxu0 0.0
        %841 = vmatpush1.msra.mxu0 0.0
        %842 = vmatprep.subr.mxu0 0.0
        %843 = vmatpush1.msra.mxu0 0.0
        %844 = vmatprep.subr.mxu0 0.0
        %845 = vmatpush1.msra.mxu0 0.0
        %846 = vmatprep.subr.mxu0 0.0
        %847 = vmatpush1.msra.mxu0 0.0
        %848 = vmatprep.subr.mxu0 0.0
        %849 = vmatpush1.msra.mxu0 %v729
        %850 = vmatprep.subr.mxu0 0.0
        %851 = vmatpush2.msra.mxu0 0.0
        %852 = vmatprep.subr.mxu0 0.0
        %853 = vmatpush2.msra.mxu0 0.0
        %854 = vmatprep.subr.mxu0 0.0
        %855 = vmatpush2.msra.mxu0 0.0
        %856 = vmatprep.subr.mxu0 0.0
        %857 = vmatpush2.msra.mxu0 0.0
        %858 = vmatprep.subr.mxu0 0.0
        %859 = vmatpush2.msra.mxu0 0.0
        %860 = vmatprep.subr.mxu0 0.0
        %861 = vmatpush2.msra.mxu0 0.0
        %862 = vmatprep.subr.mxu0 0.0
        %863 = vmatpush2.msra.mxu0 0.0
        %864 = vmatprep.subr.mxu0 0.0
        %865 = vmatpush2.msra.mxu0 0.0
        %866 = vmatprep.subr.mxu0 0.0
        %867 = vmatpush2.msra.mxu0 0.0
        %868 = vmatprep.subr.mxu0 0.0
        %869 = vmatpush2.msra.mxu0 0.0
        %870 = vmatprep.subr.mxu0 0.0
        %871 = vmatpush2.msra.mxu0 0.0
        %872 = vmatprep.subr.mxu0 0.0
        %873 = vmatpush2.msra.mxu0 0.0
        %874 = vmatprep.subr.mxu0 0.0
        %875 = vmatpush2.msra.mxu0 0.0
        %876 = vmatprep.subr.mxu0 0.0
        %877 = vmatpush2.msra.mxu0 0.0
        %878 = vmatprep.subr.mxu0 0.0
        %879 = vmatpush2.msra.mxu0 0.0
        %880 = vmatprep.subr.mxu0 0.0
        %881 = vmatpush2.msra.mxu0 0.0
        %882 = vmatprep.mubr.f32.mxu0 0.0
        %883 = vmatmul.mubr.f32.gmra.mxu0 %v816
        %v884 = vpop.f32.mrf.mxu0
        %v885 = vadd.f32 0.0, %v884
        %v886 = vpop.f32.mrf.mxu0
        %887 = vdwg.mxu0
        %888 = vrot.lane.b32.xlu0 %v406, 104
        %v889 = vpop.permute.xlu0 %888
        %v890 = vsel %vm409, %v889, 0
        %892 = vmatprep.subr.mxu0 0.0
        %893 = vmatpush1.xpose.msra.mxu0 0.0
        %894 = vmatprep.subr.mxu0 0.0
        %895 = vmatpush1.xpose.msra.mxu0 0.0
        %896 = vmatprep.subr.mxu0 0.0
        %897 = vmatpush1.xpose.msra.mxu0 0.0
        %898 = vmatprep.subr.mxu0 0.0
        %899 = vmatpush1.xpose.msra.mxu0 0.0
        %900 = vmatprep.subr.mxu0 0.0
        %901 = vmatpush1.xpose.msra.mxu0 0.0
        %902 = vmatprep.subr.mxu0 0.0
        %903 = vmatpush1.xpose.msra.mxu0 0.0
        %904 = vmatprep.subr.mxu0 0.0
        %905 = vmatpush1.xpose.msra.mxu0 0.0
        %906 = vmatprep.subr.mxu0 0.0
        %907 = vmatpush1.xpose.msra.mxu0 0.0
        %908 = vmatprep.subr.mxu0 0.0
        %909 = vmatpush1.xpose.msra.mxu0 0.0
        %910 = vmatprep.subr.mxu0 0.0
        %911 = vmatpush1.xpose.msra.mxu0 0.0
        %912 = vmatprep.subr.mxu0 0.0
        %913 = vmatpush1.xpose.msra.mxu0 0.0
        %914 = vmatprep.subr.mxu0 0.0
        %915 = vmatpush1.xpose.msra.mxu0 0.0
        %916 = vmatprep.subr.mxu0 0.0
        %917 = vmatpush1.xpose.msra.mxu0 0.0
        %918 = vmatprep.subr.mxu0 0.0
        %919 = vmatpush1.xpose.msra.mxu0 0.0
        %920 = vmatprep.subr.mxu0 0.0
        %921 = vmatpush1.xpose.msra.mxu0 0.0
        %922 = vmatprep.subr.mxu0 0.0
        %923 = vmatpush1.xpose.msra.mxu0 %v890
        %924 = vmatprep.subr.mxu0 0.0
        %925 = vmatpush2.xpose.msra.mxu0 0.0
        %926 = vmatprep.subr.mxu0 0.0
        %927 = vmatpush2.xpose.msra.mxu0 0.0
        %928 = vmatprep.subr.mxu0 0.0
        %929 = vmatpush2.xpose.msra.mxu0 0.0
        %930 = vmatprep.subr.mxu0 0.0
        %931 = vmatpush2.xpose.msra.mxu0 0.0
        %932 = vmatprep.subr.mxu0 0.0
        %933 = vmatpush2.xpose.msra.mxu0 0.0
        %934 = vmatprep.subr.mxu0 0.0
        %935 = vmatpush2.xpose.msra.mxu0 0.0
        %936 = vmatprep.subr.mxu0 0.0
        %937 = vmatpush2.xpose.msra.mxu0 0.0
        %938 = vmatprep.subr.mxu0 0.0
        %939 = vmatpush2.xpose.msra.mxu0 0.0
        %940 = vmatprep.subr.mxu0 0.0
        %941 = vmatpush2.xpose.msra.mxu0 0.0
        %942 = vmatprep.subr.mxu0 0.0
        %943 = vmatpush2.xpose.msra.mxu0 0.0
        %944 = vmatprep.subr.mxu0 0.0
        %945 = vmatpush2.xpose.msra.mxu0 0.0
        %946 = vmatprep.subr.mxu0 0.0
        %947 = vmatpush2.xpose.msra.mxu0 0.0
        %948 = vmatprep.subr.mxu0 0.0
        %949 = vmatpush2.xpose.msra.mxu0 0.0
        %950 = vmatprep.subr.mxu0 0.0
        %951 = vmatpush2.xpose.msra.mxu0 0.0
        %952 = vmatprep.subr.mxu0 0.0
        %953 = vmatpush2.xpose.msra.mxu0 0.0
        %954 = vmatprep.subr.mxu0 0.0
        %955 = vmatpush2.xpose.msra.mxu0 0.0
        %956 = vmatprep.mubr.f32.mxu0 0.0
        %957 = vmatmul.mubr.f32.gmra.mxu0 %v890
        %v958 = vpop.f32.mrf.mxu0
        %v959 = vadd.f32 0.0, %v958
        %v960 = vpop.f32.mrf.mxu0
        %961 = vdwg.mxu0
        %v962 = vmul.f32 %v959, 0.35355338
        %v963 = vsel %vm409, %v962, -inf
        %964 = vmax.xlane.f32.xlu0 %v963
        %v965 = vpop.xlane.xlu0 %964
        %v966 = vsub.f32 %v962, %v965
        %v967 = vmul.f32 %v966, 1.442695
        %v968 = vpow.pop %v967
        %v969 = vsel %vm409, %v968, 0.0
        %970 = vadd.xlane.f32.xlu0 %v969
        %v971 = vpop.xlane.xlu0 %970
        %v972 = vrcp.pop %v971
        %v973 = vmul.f32 %v968, %v972
        %v976 = vsel %vm409, %v973, 0
        %978 = vmatprep.subr.mxu0 0.0
        %979 = vmatpush1.msra.mxu0 0.0
        %980 = vmatprep.subr.mxu0 0.0
        %981 = vmatpush1.msra.mxu0 0.0
        %982 = vmatprep.subr.mxu0 0.0
        %983 = vmatpush1.msra.mxu0 0.0
        %984 = vmatprep.subr.mxu0 0.0
        %985 = vmatpush1.msra.mxu0 0.0
        %986 = vmatprep.subr.mxu0 0.0
        %987 = vmatpush1.msra.mxu0 0.0
        %988 = vmatprep.subr.mxu0 0.0
        %989 = vmatpush1.msra.mxu0 0.0
        %990 = vmatprep.subr.mxu0 0.0
        %991 = vmatpush1.msra.mxu0 0.0
        %992 = vmatprep.subr.mxu0 0.0
        %993 = vmatpush1.msra.mxu0 0.0
        %994 = vmatprep.subr.mxu0 0.0
        %995 = vmatpush1.msra.mxu0 0.0
        %996 = vmatprep.subr.mxu0 0.0
        %997 = vmatpush1.msra.mxu0 0.0
        %998 = vmatprep.subr.mxu0 0.0
        %999 = vmatpush1.msra.mxu0 0.0
        %1000 = vmatprep.subr.mxu0 0.0
        %1001 = vmatpush1.msra.mxu0 0.0
        %1002 = vmatprep.subr.mxu0 0.0
        %1003 = vmatpush1.msra.mxu0 0.0
        %1004 = vmatprep.subr.mxu0 0.0
        %1005 = vmatpush1.msra.mxu0 0.0
        %1006 = vmatprep.subr.mxu0 0.0
        %1007 = vmatpush1.msra.mxu0 0.0
        %1008 = vmatprep.subr.mxu0 0.0
        %1009 = vmatpush1.msra.mxu0 %v889
        %1010 = vmatprep.subr.mxu0 0.0
        %1011 = vmatpush2.msra.mxu0 0.0
        %1012 = vmatprep.subr.mxu0 0.0
        %1013 = vmatpush2.msra.mxu0 0.0
        %1014 = vmatprep.subr.mxu0 0.0
        %1015 = vmatpush2.msra.mxu0 0.0
        %1016 = vmatprep.subr.mxu0 0.0
        %1017 = vmatpush2.msra.mxu0 0.0
        %1018 = vmatprep.subr.mxu0 0.0
        %1019 = vmatpush2.msra.mxu0 0.0
        %1020 = vmatprep.subr.mxu0 0.0
        %1021 = vmatpush2.msra.mxu0 0.0
        %1022 = vmatprep.subr.mxu0 0.0
        %1023 = vmatpush2.msra.mxu0 0.0
        %1024 = vmatprep.subr.mxu0 0.0
        %1025 = vmatpush2.msra.mxu0 0.0
        %1026 = vmatprep.subr.mxu0 0.0
        %1027 = vmatpush2.msra.mxu0 0.0
        %1028 = vmatprep.subr.mxu0 0.0
        %1029 = vmatpush2.msra.mxu0 0.0
        %1030 = vmatprep.subr.mxu0 0.0
        %1031 = vmatpush2.msra.mxu0 0.0
        %1032 = vmatprep.subr.mxu0 0.0
        %1033 = vmatpush2.msra.mxu0 0.0
        %1034 = vmatprep.subr.mxu0 0.0
        %1035 = vmatpush2.msra.mxu0 0.0
        %1036 = vmatprep.subr.mxu0 0.0
        %1037 = vmatpush2.msra.mxu0 0.0
        %1038 = vmatprep.subr.mxu0 0.0
        %1039 = vmatpush2.msra.mxu0 0.0
        %1040 = vmatprep.subr.mxu0 0.0
        %1041 = vmatpush2.msra.mxu0 0.0
        %1042 = vmatprep.mubr.f32.mxu0 0.0
        %1043 = vmatmul.mubr.f32.gmra.mxu0 %v976
        %v1044 = vpop.f32.mrf.mxu0
        %v1045 = vadd.f32 0.0, %v1044
        %v1046 = vpop.f32.mrf.mxu0
        %1047 = vdwg.mxu0
        %1049 = vrot.lane.b32.xlu0 %v725, 8
        %v1050 = vpop.permute.xlu0 %1049
        %1053 = vrot.lane.b32.xlu0 %v885, 16
        %v1054 = vpop.permute.xlu0 %1053
        %1057 = vrot.lane.b32.xlu0 %v1045, 24
        %v1058 = vpop.permute.xlu0 %1057
        %v1060 = vsel %vm409, %v565, %v1050
        %vm1061 = vcmask 130048
        %v1062 = vsel %vm1061, %v1060, %v1054
        %vm1063 = vcmask 195584
        %v1064 = vsel %vm1063, %v1062, %v1058
        %v1065 = vld [vmem:[#allocation6] sm:$0xff]
        %v1066 = vld [vmem:[#allocation6 + $0x8] sm:$0xff]
        %v1067 = vld [vmem:[#allocation6 + $0x10] sm:$0xff]
        %v1068 = vld [vmem:[#allocation6 + $0x18] sm:$0xff]
        %v1069 = vld [vmem:[%s4] sm:$0x1]
        %v1071 = vlaneseq
        %v1072 = vshrl.u32 %v1071, 7
        %v1073 = vsub.s32 0, %v1072
        %v1074 = vrot.slane %v1069, %v1073
        %v1077 = vsel %vm335, %v1064, 0
        %1079 = vmatprep.subr.mxu0 0.0
        %1080 = vmatpush1.msra.mxu0 0.0
        %1081 = vmatprep.subr.mxu0 0.0
        %1082 = vmatpush1.msra.mxu0 0.0
        %1083 = vmatprep.subr.mxu0 0.0
        %1084 = vmatpush1.msra.mxu0 0.0
        %1085 = vmatprep.subr.mxu0 0.0
        %1086 = vmatpush1.msra.mxu0 0.0
        %1087 = vmatprep.subr.mxu0 0.0
        %1088 = vmatpush1.msra.mxu0 0.0
        %1089 = vmatprep.subr.mxu0 0.0
        %1090 = vmatpush1.msra.mxu0 0.0
        %1091 = vmatprep.subr.mxu0 0.0
        %1092 = vmatpush1.msra.mxu0 0.0
        %1093 = vmatprep.subr.mxu0 0.0
        %1094 = vmatpush1.msra.mxu0 0.0
        %1095 = vmatprep.subr.mxu0 0.0
        %1096 = vmatpush1.msra.mxu0 0.0
        %1097 = vmatprep.subr.mxu0 0.0
        %1098 = vmatpush1.msra.mxu0 0.0
        %1099 = vmatprep.subr.mxu0 0.0
        %1100 = vmatpush1.msra.mxu0 0.0
        %1101 = vmatprep.subr.mxu0 0.0
        %1102 = vmatpush1.msra.mxu0 0.0
        %1103 = vmatprep.subr.mxu0 0.0
        %1104 = vmatpush1.msra.mxu0 %v1068
        %1105 = vmatprep.subr.mxu0 0.0
        %1106 = vmatpush1.msra.mxu0 %v1067
        %1107 = vmatprep.subr.mxu0 0.0
        %1108 = vmatpush1.msra.mxu0 %v1066
        %1109 = vmatprep.subr.mxu0 0.0
        %1110 = vmatpush1.msra.mxu0 %v1065
        %1111 = vmatprep.subr.mxu0 0.0
        %1112 = vmatpush2.msra.mxu0 0.0
        %1113 = vmatprep.subr.mxu0 0.0
        %1114 = vmatpush2.msra.mxu0 0.0
        %1115 = vmatprep.subr.mxu0 0.0
        %1116 = vmatpush2.msra.mxu0 0.0
        %1117 = vmatprep.subr.mxu0 0.0
        %1118 = vmatpush2.msra.mxu0 0.0
        %1119 = vmatprep.subr.mxu0 0.0
        %1120 = vmatpush2.msra.mxu0 0.0
        %1121 = vmatprep.subr.mxu0 0.0
        %1122 = vmatpush2.msra.mxu0 0.0
        %1123 = vmatprep.subr.mxu0 0.0
        %1124 = vmatpush2.msra.mxu0 0.0
        %1125 = vmatprep.subr.mxu0 0.0
        %1126 = vmatpush2.msra.mxu0 0.0
        %1127 = vmatprep.subr.mxu0 0.0
        %1128 = vmatpush2.msra.mxu0 0.0
        %1129 = vmatprep.subr.mxu0 0.0
        %1130 = vmatpush2.msra.mxu0 0.0
        %1131 = vmatprep.subr.mxu0 0.0
        %1132 = vmatpush2.msra.mxu0 0.0
        %1133 = vmatprep.subr.mxu0 0.0
        %1134 = vmatpush2.msra.mxu0 0.0
        %1135 = vmatprep.subr.mxu0 0.0
        %1136 = vmatpush2.msra.mxu0 0.0
        %1137 = vmatprep.subr.mxu0 0.0
        %1138 = vmatpush2.msra.mxu0 0.0
        %1139 = vmatprep.subr.mxu0 0.0
        %1140 = vmatpush2.msra.mxu0 0.0
        %1141 = vmatprep.subr.mxu0 0.0
        %1142 = vmatpush2.msra.mxu0 0.0
        %1143 = vmatprep.mubr.f32.mxu0 0.0
        %1144 = vmatmul.mubr.f32.gmra.mxu0 %v1077
        %v1145 = vpop.f32.mrf.mxu0
        %v1146 = vadd.f32 %v1074, %v1145
        %v1147 = vpop.f32.mrf.mxu0
        %1148 = vdwg.mxu0
        %v1149 = vadd.f32 %v1146, %v323
        %v1150 = vsel %vm335, %v1149, 0.0
        %1151 = vadd.xlane.f32.xlu0 %v1150
        %v1152 = vpop.xlane.xlu0 %1151
        %v1153 = vrcp.pop 32.0
        %v1154 = vmul.f32 %v1152, %v1153
        %v1155 = vsub.f32 %v1149, %v1154
        %v1156 = vmul.f32 %v1155, %v1155
        %v1157 = vsel %vm335, %v1156, 0.0
        %1158 = vadd.xlane.f32.xlu0 %v1157
        %v1159 = vpop.xlane.xlu0 %1158
        %v1160 = vmul.f32 %v1159, %v1153
        %v1161 = vadd.f32 %v1160, 1e-05
        %v1162 = vrsqrt.pop %v1161
        %v1163 = vmul.f32 %v1155, %v1162
        %v1164 = vld [vmem:[%s5] sm:$0x1]
        %v1166 = vlaneseq
        %v1167 = vshrl.u32 %v1166, 7
        %v1168 = vsub.s32 0, %v1167
        %v1169 = vrot.slane %v1164, %v1168
        %v1171 = vmul.f32 %v1163, %v1169
        %v1172 = vld [vmem:[%s6] sm:$0x1]
        %v1174 = vlaneseq
        %v1175 = vshrl.u32 %v1174, 7
        %v1176 = vsub.s32 0, %v1175
        %v1177 = vrot.slane %v1172, %v1176
        %v1179 = vadd.f32 %v1171, %v1177
        %1180 = vst.msk [vmem:[%s322] sm:$0xff] %vm335, %v1179
        %p1181 = scmp.lt.s32.totalorder %s22, 1
        %s1182 = scalar_select %p1181, %s22, 1
        %s1183 = smul.addr %s1182, 8
        %s1184 = scalar_lea.vmem %s7, %s1183
        // Predicated region
        $region61: #{transformer_classifier.5} parent=47 // pred_check
          %p1185 = pneg %p192
        $region62: #{transformer_classifier.5} parent=47 // pred_check_branch
          %1187 = sbr.rel (%p1185) target = $region64
        $region63: #{transformer_classifier.5} parent=47 // pred_region
          _
        $region64: #{transformer_classifier.5} parent=47 // pred_fallthru
          _
      $region48: #{transformer_classifier.5} parent=5 // pred_fallthru
        _
      %p1188 = scmp.le.s32.totalorder 2, %s17
      // Predicated region
      $region65: #{transformer_classifier.5} parent=5 // pred_check
        %p1189 = pneg %p1188
      $region66: #{transformer_classifier.5} parent=5 // pred_check_branch
        %1191 = sbr.rel (%p1189) target = $region68
      $region67: #{transformer_classifier.5} parent=5 // pred_region
        %s1192 = ssub.s32 %s17, 2
        // Predicated region
        $region69: #{transformer_classifier.5} parent=67 // pred_check
          %p1193 = pneg %p198
        $region70: #{transformer_classifier.5} parent=67 // pred_check_branch
          %1195 = sbr.rel (%p1193) target = $region72
        $region71: #{transformer_classifier.5} parent=67 // pred_region
          %p1196 = scmp.lt.s32.totalorder %s23, 1
          %s1197 = scalar_select %p1196, %s23, 1
          %s1198 = smul.addr %s1197, 8
          %s1199 = scalar_lea.vmem %s7, %s1198
        $region72: #{transformer_classifier.5} parent=67 // pred_fallthru
          _
      $region68: #{transformer_classifier.5} parent=5 // pred_fallthru
        _
    $region6: #{transformer_classifier.5} parent=1 // loop_footer
      %s21 = sadd.s32 1, %s17
    $region7: #{transformer_classifier.5} parent=1 // loop_footer_branch
      %16 = sbr.rel target = $region3
    $region8: #{transformer_classifier.5} parent=1 // loop_exit
      _
    %1200 = vsyncpa [#allocation3], 1
    %s1201 = scalar_lea.sflag [#allocation3], 1
    %1202 = vsyncpa %s1201, 1
    %1203 = vsyncpa [#allocation5], 1

// kernel: transformer_classifier.7
$region0: #{transformer_classifier.7}
  #allocation0 [shape = 'u32[]', space=smem, size = 0x4, offset = 0x4, fixed_abs, tag = 'smem constant byte address 0x4 - core index']
  #allocation1 [shape = 'u32[144,128]{1,0:T(1,128)}', space=vmem, size = 0x12000, scoped, tag = 'internal scratch']
  %s0 = inlined_call_operand.vmem [shape: f32[2,8,32], index: 0, kind: input, shape index: {}]
  %s1 = inlined_call_operand.vmem [shape: f32[32,32], index: 1, kind: input, shape index: {}]
  %s2 = inlined_call_operand.vmem [shape: f32[1,32], index: 2, kind: input, shape index: {}]
  %s3 = inlined_call_operand.vmem [shape: f32[32,32], index: 3, kind: input, shape index: {}]
  %s4 = inlined_call_operand.vmem [shape: f32[1,32], index: 4, kind: input, shape index: {}]
  %s5 = inlined_call_operand.vmem [shape: f32[1,32], index: 5, kind: input, shape index: {}]
  %s6 = inlined_call_operand.vmem [shape: f32[1,32], index: 6, kind: input, shape index: {}]
  %s7 = inlined_call_operand.vmem [shape: f32[2,8,32], index: 7, kind: output, shape index: {}]
  %s8 = sld [smem:[#allocation0]]
  $region61: #{transformer_classifier.7} parent=0
    _
  %s10 = ssub.s32 1, %s8
  %s11 = scalar_select 0, %s10, %s8
  loop: start=0, step=1, limit=4
  $region2: #{transformer_classifier.7} parent=0 // loop_pre_header
    _
  $region3: #{transformer_classifier.7} parent=0 // loop_header
    %s13 = sphi 0, %s17
    %p14 = scmp.ge.s32.totalorder %s13, 4
    %s23 = sphi 0, %s25
    %s26 = sphi 0, %s23
    %s27 = sphi 0, %s26
    %s43 = sphi 0, %s27
    %s47 = sphi 0, %s47
    %s49 = sphi 0, %s47
    %s50 = sphi 0, %s49
    %s64 = sphi 0, %s50
    %s68 = sphi 0, %s68
    %s70 = sphi 0, %s68
    %s71 = sphi 0, %s70
    %s85 = sphi 0, %s71
    %s89 = sphi 0, %s89
    %s91 = sphi 0, %s89
    %s92 = sphi 0, %s91
    %s106 = sphi 0, %s92
    %s110 = sphi 0, %s110
    %s112 = sphi 0, %s110
    %s113 = sphi 0, %s112
    %s127 = sphi 0, %s113
    %s131 = sphi 0, %s131
    %s133 = sphi 0, %s131
    %s134 = sphi 0, %s133
    %s148 = sphi 0, %s134
    %s152 = sphi 0, %s152
    %s154 = sphi 0, %s152
    %s155 = sphi 0, %s154
    %s169 = sphi 0, %s155
    %s175 = sphi 0, %s177
    %s178 = sphi 0, %s175
    %s179 = sphi 0, %s178
    %s195 = sphi 0, %s179
  $region4: #{transformer_classifier.7} parent=0 // loop_header_branch
    %16 = sbr.rel (%p14) target = $region8
  $region5: #{transformer_classifier.7} parent=0 // loop_body
    %s18 = ssub.s32 %s13, 1
    %s19 = ssub.s32 %s13, 2
    %s20 = sadd.s32 %s13, 1
    %s21 = ssub.s32 %s13, %s20
    %p22 = scmp.eq.s32.totalorder %s21, 0
    %s24 = sadd.s32 %s23, 1
    %s25 = scalar_select %p22, %s23, %s24
    %p28 = pneg %p22
    %p29 = scmp.eq.s32.totalorder %s13, 1
    %p30 = por %p28, %p29
    %p31 = scmp.ne.s32.totalorder %s23, %s26
    %p32 = scmp.eq.s32.totalorder %s13, 0
    %p33 = por %p31, %p32
    %p34 = scmp.ne.s32.totalorder %s23, %s26
    %p35 = scmp.eq.s32.totalorder %s18, 1
    %p36 = por %p34, %p35
    %p37 = scmp.ne.s32.totalorder %s26, %s27
    %p38 = scmp.eq.s32.totalorder %s18, 0
    %p39 = por %p37, %p38
    %p40 = scmp.ne.s32.totalorder %s26, %s27
    %p41 = scmp.eq.s32.totalorder %s19, 1
    %p42 = por %p40, %p41
    %p44 = scmp.ne.s32.totalorder %s27, %s43
    %p45 = scmp.eq.s32.totalorder %s19, 0
    %p46 = por %p44, %p45
    %s48 = sadd.s32 %s47, 1
    %p51 = scmp.eq.s32.totalorder %s13, 1
    %p52 = scmp.ne.s32.totalorder %s47, %s49
    %p53 = scmp.eq.s32.totalorder %s13, 0
    %p54 = por %p52, %p53
    %p55 = scmp.ne.s32.totalorder %s47, %s49
    %p56 = scmp.eq.s32.totalorder %s18, 1
    %p57 = por %p55, %p56
    %p58 = scmp.ne.s32.totalorder %s49, %s50
    %p59 = scmp.eq.s32.totalorder %s18, 0
    %p60 = por %p58, %p59
    %p61 = scmp.ne.s32.totalorder %s49, %s50
    %p62 = scmp.eq.s32.totalorder %s19, 1
    %p63 = por %p61, %p62
    %p65 = scmp.ne.s32.totalorder %s50, %s64
    %p66 = scmp.eq.s32.totalorder %s19, 0
    %p67 = por %p65, %p66
    %s69 = sadd.s32 %s68, 1
    %p72 = scmp.eq.s32.totalorder %s13, 1
    %p73 = scmp.ne.s32.totalorder %s68, %s70
    %p74 = scmp.eq.s32.totalorder %s13, 0
    %p75 = por %p73, %p74
    %p76 = scmp.ne.s32.totalorder %s68, %s70
    %p77 = scmp.eq.s32.totalorder %s18, 1
    %p78 = por %p76, %p77
    %p79 = scmp.ne.s32.totalorder %s70, %s71
    %p80 = scmp.eq.s32.totalorder %s18, 0
    %p81 = por %p79, %p80
    %p82 = scmp.ne.s32.totalorder %s70, %s71
    %p83 = scmp.eq.s32.totalorder %s19, 1
    %p84 = por %p82, %p83
    %p86 = scmp.ne.s32.totalorder %s71, %s85
    %p87 = scmp.eq.s32.totalorder %s19, 0
    %p88 = por %p86, %p87
    %s90 = sadd.s32 %s89, 1
    %p93 = scmp.eq.s32.totalorder %s13, 1
    %p94 = scmp.ne.s32.totalorder %s89, %s91
    %p95 = scmp.eq.s32.totalorder %s13, 0
    %p96 = por %p94, %p95
    %p97 = scmp.ne.s32.totalorder %s89, %s91
    %p98 = scmp.eq.s32.totalorder %s18, 1
    %p99 = por %p97, %p98
    %p100 = scmp.ne.s32.totalorder %s91, %s92
    %p101 = scmp.eq.s32.totalorder %s18, 0
    %p102 = por %p100, %p101
    %p103 = scmp.ne.s32.totalorder %s91, %s92
    %p104 = scmp.eq.s32.totalorder %s19, 1
    %p105 = por %p103, %p104
    %p107 = scmp.ne.s32.totalorder %s92, %s106
    %p108 = scmp.eq.s32.totalorder %s19, 0
    %p109 = por %p107, %p108
    %s111 = sadd.s32 %s110, 1
    %p114 = scmp.eq.s32.totalorder %s13, 1
    %p115 = scmp.ne.s32.totalorder %s110, %s112
    %p116 = scmp.eq.s32.totalorder %s13, 0
    %p117 = por %p115, %p116
    %p118 = scmp.ne.s32.totalorder %s110, %s112
    %p119 = scmp.eq.s32.totalorder %s18, 1
    %p120 = por %p118, %p119
    %p121 = scmp.ne.s32.totalorder %s112, %s113
    %p122 = scmp.eq.s32.totalorder %s18, 0
    %p123 = por %p121, %p122
    %p124 = scmp.ne.s32.totalorder %s112, %s113
    %p125 = scmp.eq.s32.totalorder %s19, 1
    %p126 = por %p124, %p125
    %p128 = scmp.ne.s32.totalorder %s113, %s127
    %p129 = scmp.eq.s32.totalorder %s19, 0
    %p130 = por %p128, %p129
    %s132 = sadd.s32 %s131, 1
    %p135 = scmp.eq.s32.totalorder %s13, 1
    %p136 = scmp.ne.s32.totalorder %s131, %s133
    %p137 = scmp.eq.s32.totalorder %s13, 0
    %p138 = por %p136, %p137
    %p139 = scmp.ne.s32.totalorder %s131, %s133
    %p140 = scmp.eq.s32.totalorder %s18, 1
    %p141 = por %p139, %p140
    %p142 = scmp.ne.s32.totalorder %s133, %s134
    %p143 = scmp.eq.s32.totalorder %s18, 0
    %p144 = por %p142, %p143
    %p145 = scmp.ne.s32.totalorder %s133, %s134
    %p146 = scmp.eq.s32.totalorder %s19, 1
    %p147 = por %p145, %p146
    %p149 = scmp.ne.s32.totalorder %s134, %s148
    %p150 = scmp.eq.s32.totalorder %s19, 0
    %p151 = por %p149, %p150
    %s153 = sadd.s32 %s152, 1
    %p156 = scmp.eq.s32.totalorder %s13, 1
    %p157 = scmp.ne.s32.totalorder %s152, %s154
    %p158 = scmp.eq.s32.totalorder %s13, 0
    %p159 = por %p157, %p158
    %p160 = scmp.ne.s32.totalorder %s152, %s154
    %p161 = scmp.eq.s32.totalorder %s18, 1
    %p162 = por %p160, %p161
    %p163 = scmp.ne.s32.totalorder %s154, %s155
    %p164 = scmp.eq.s32.totalorder %s18, 0
    %p165 = por %p163, %p164
    %p166 = scmp.ne.s32.totalorder %s154, %s155
    %p167 = scmp.eq.s32.totalorder %s19, 1
    %p168 = por %p166, %p167
    %p170 = scmp.ne.s32.totalorder %s155, %s169
    %p171 = scmp.eq.s32.totalorder %s19, 0
    %p172 = por %p170, %p171
    %s173 = ssub.s32 %s13, %s20
    %p174 = scmp.eq.s32.totalorder %s173, 0
    %s176 = sadd.s32 %s175, 1
    %s177 = scalar_select %p174, %s175, %s176
    %p180 = pneg %p174
    %p181 = scmp.eq.s32.totalorder %s13, 1
    %p182 = por %p180, %p181
    %p183 = scmp.ne.s32.totalorder %s175, %s178
    %p184 = scmp.eq.s32.totalorder %s13, 0
    %p185 = por %p183, %p184
    %p186 = scmp.ne.s32.totalorder %s175, %s178
    %p187 = scmp.eq.s32.totalorder %s18, 1
    %p188 = por %p186, %p187
    %p189 = scmp.ne.s32.totalorder %s178, %s179
    %p190 = scmp.eq.s32.totalorder %s18, 0
    %p191 = por %p189, %p190
    %p192 = scmp.ne.s32.totalorder %s178, %s179
    %p193 = scmp.eq.s32.totalorder %s19, 1
    %p194 = por %p192, %p193
    %p196 = scmp.ne.s32.totalorder %s179, %s195
    %p197 = scmp.eq.s32.totalorder %s19, 0
    %p198 = por %p196, %p197
    %p199 = scmp.le.s32.totalorder 1, %s13
    %p200 = scmp.lt.s32.totalorder %s13, 3
    %p201 = pnand %p199, %p200
    %p202 = pneg %p201
    // Predicated region
    $region9: #{transformer_classifier.7} parent=5 // pred_check
      _
    $region10: #{transformer_classifier.7} parent=5 // pred_check_branch
      %204 = sbr.rel (%p201) target = $region12
    $region11: #{transformer_classifier.7} parent=5 // pred_region
      %s205 = ssub.s32 %s13, 1
      // Predicated region
      $region13: #{transformer_classifier.7} parent=11 // pred_check
        %p206 = pneg %p60
      $region14: #{transformer_classifier.7} parent=11 // pred_check_branch
        %208 = sbr.rel (%p206) target = $region16
      $region15: #{transformer_classifier.7} parent=11 // pred_region
        _
      $region16: #{transformer_classifier.7} parent=11 // pred_fallthru
        _
      // Predicated region
      $region17: #{transformer_classifier.7} parent=11 // pred_check
        %p209 = pneg %p81
      $region18: #{transformer_classifier.7} parent=11 // pred_check_branch
        %211 = sbr.rel (%p209) target = $region20
      $region19: #{transformer_classifier.7} parent=11 // pred_region
        _
      $region20: #{transformer_classifier.7} parent=11 // pred_fallthru
        _
      // Predicated region
      $region21: #{transformer_classifier.7} parent=11 // pred_check
        %p212 = pneg %p102
      $region22: #{transformer_classifier.7} parent=11 // pred_check_branch
        %214 = sbr.rel (%p212) target = $region24
      $region23: #{transformer_classifier.7} parent=11 // pred_region
        _
      $region24: #{transformer_classifier.7} parent=11 // pred_fallthru
        _
      // Predicated region
      $region25: #{transformer_classifier.7} parent=11 // pred_check
        %p215 = pneg %p123
      $region26: #{transformer_classifier.7} parent=11 // pred_check_branch
        %217 = sbr.rel (%p215) target = $region28
      $region27: #{transformer_classifier.7} parent=11 // pred_region
        _
      $region28: #{transformer_classifier.7} parent=11 // pred_fallthru
        _
      // Predicated region
      $region29: #{transformer_classifier.7} parent=11 // pred_check
        %p218 = pneg %p144
      $region30: #{transformer_classifier.7} parent=11 // pred_check_branch
        %220 = sbr.rel (%p218) target = $region32
      $region31: #{transformer_classifier.7} parent=11 // pred_region
        _
      $region32: #{transformer_classifier.7} parent=11 // pred_fallthru
        _
      // Predicated region
      $region33: #{transformer_classifier.7} parent=11 // pred_check
        %p221 = pneg %p165
      $region34: #{transformer_classifier.7} parent=11 // pred_check_branch
        %223 = sbr.rel (%p221) target = $region36
      $region35: #{transformer_classifier.7} parent=11 // pred_region
        _
      $region36: #{transformer_classifier.7} parent=11 // pred_fallthru
        _
    $region12: #{transformer_classifier.7} parent=5 // pred_fallthru
      _
    %p224 = scmp.lt.s32.totalorder %s13, 2
    // Predicated region
    $region37: #{transformer_classifier.7} parent=5 // pred_check
      %p225 = pneg %p224
    $region38: #{transformer_classifier.7} parent=5 // pred_check_branch
      %227 = sbr.rel (%p225) target = $region40
    $region39: #{transformer_classifier.7} parent=5 // pred_region
      // Predicated region
      $region41: #{transformer_classifier.7} parent=39 // pred_check
        %p228 = pneg %p33
      $region42: #{transformer_classifier.7} parent=39 // pred_check_branch
        %230 = sbr.rel (%p228) target = $region44
      $region43: #{transformer_classifier.7} parent=39 // pred_region
        %p231 = scmp.lt.s32.totalorder %s13, 1
        %s232 = scalar_select %p231, %s13, 1
        %s233 = smul.addr %s232, 8
        %s234 = scalar_lea.vmem %s0, %s233
      $region44: #{transformer_classifier.7} parent=39 // pred_fallthru
        _
    $region40: #{transformer_classifier.7} parent=5 // pred_fallthru
      _
    %p235 = scmp.le.s32.totalorder 1, %s13
    %p236 = scmp.lt.s32.totalorder %s13, 3
    %p237 = pnand %p235, %p236
    %p238 = pneg %p237
    // Predicated region
    $region45: #{transformer_classifier.7} parent=5 // pred_check
      _
    $region46: #{transformer_classifier.7} parent=5 // pred_check_branch
      %240 = sbr.rel (%p237) target = $region48
    $region47: #{transformer_classifier.7} parent=5 // pred_region
      %s241 = ssub.s32 %s13, 1
      %p242 = scmp.lt.s32.totalorder %s18, 1
      %s243 = scalar_select %p242, %s18, 1
      %s244 = smul.addr %s243, 8
      %s245 = scalar_lea.vmem %s0, %s244
      %p246 = pneg %p39
      %p247 = pneg %p36
      %p248 = pneg %p60
      %p249 = pneg %p57
      %p250 = pneg %p81
      %p251 = pneg %p78
      %p252 = pneg %p102
      %p253 = pneg %p99
      %p254 = pneg %p123
      %p255 = pneg %p120
      %p256 = pneg %p144
      %p257 = pneg %p141
      %p258 = pneg %p165
      %p259 = pneg %p162
      %p260 = pneg %p191
      %p261 = pneg %p188
      %p262 = scmp.lt.s32.totalorder %s18, 1
      %s263 = scalar_select %p262, %s18, 1
      %s264 = smul.addr %s263, 8
      %s265 = scalar_lea.vmem %s7, %s264
      %p266 = scmp.lt.s32.totalorder %s18, 1
      %s267 = scalar_select %p266, %s18, 1
      %s268 = smul.addr %s267, 8
      %s269 = scalar_lea.vmem %s0, %s268
      %p270 = scmp.lt.s32.totalorder %s18, 1
      %s271 = scalar_select %p270, %s18, 1
      %s272 = smul.addr %s271, 8
      %s273 = scalar_lea.vmem %s7, %s272
      %v274 = vld [vmem:[%s269] sm:$0xff]
      %v275 = vld [vmem:[%s1] sm:$0xff]
      %v276 = vld [vmem:[%s1 + $0x8] sm:$0xff]
      %v277 = vld [vmem:[%s1 + $0x10] sm:$0xff]
      %v278 = vld [vmem:[%s1 + $0x18] sm:$0xff]
      %v279 = vld [vmem:[%s2] sm:$0x1]
      %v281 = vlaneseq
      %v282 = vshrl.u32 %v281, 7
      %v283 = vsub.s32 0, %v282
      %v284 = vrot.slane %v279, %v283
      %vm286 = vcmask 261120
      %v288 = vsel %vm286, %v274, 0
      %290 = vmatprep.subr.mxu0 0.0
      %291 = vmatpush1.msra.mxu0 0.0
      %292 = vmatprep.subr.mxu0 0.0
      %293 = vmatpush1.msra.mxu0 0.0
      %294 = vmatprep.subr.mxu0 0.0
      %295 = vmatpush1.msra.mxu0 0.0
      %296 = vmatprep.subr.mxu0 0.0
      %297 = vmatpush1.msra.mxu0 0.0
      %298 = vmatprep.subr.mxu0 0.0
      %299 = vmatpush1.msra.mxu0 0.0
      %300 = vmatprep.subr.mxu0 0.0
      %301 = vmatpush1.msra.mxu0 0.0
      %302 = vmatprep.subr.mxu0 0.0
      %303 = vmatpush1.msra.mxu0 0.0
      %304 = vmatprep.subr.mxu0 0.0
      %305 = vmatpush1.msra.mxu0 0.0
      %306 = vmatprep.subr.mxu0 0.0
      %307 = vmatpush1.msra.mxu0 0.0
      %308 = vmatprep.subr.mxu0 0.0
      %309 = vmatpush1.msra.mxu0 0.0
      %310 = vmatprep.subr.mxu0 0.0
      %311 = vmatpush1.msra.mxu0 0.0
      %312 = vmatprep.subr.mxu0 0.0
      %313 = vmatpush1.msra.mxu0 0.0
      %314 = vmatprep.subr.mxu0 0.0
      %315 = vmatpush1.msra.mxu0 %v278
      %316 = vmatprep.subr.mxu0 0.0
      %317 = vmatpush1.msra.mxu0 %v277
      %318 = vmatprep.subr.mxu0 0.0
      %319 = vmatpush1.msra.mxu0 %v276
      %320 = vmatprep.subr.mxu0 0.0
      %321 = vmatpush1.msra.mxu0 %v275
      %322 = vmatprep.subr.mxu0 0.0
      %323 = vmatpush2.msra.mxu0 0.0
      %324 = vmatprep.subr.mxu0 0.0
      %325 = vmatpush2.msra.mxu0 0.0
      %326 = vmatprep.subr.mxu0 0.0
      %327 = vmatpush2.msra.mxu0 0.0
      %328 = vmatprep.subr.mxu0 0.0
      %329 = vmatpush2.msra.mxu0 0.0
      %330 = vmatprep.subr.mxu0 0.0
      %331 = vmatpush2.msra.mxu0 0.0
      %332 = vmatprep.subr.mxu0 0.0
      %333 = vmatpush2.msra.mxu0 0.0
      %334 = vmatprep.subr.mxu0 0.0
      %335 = vmatpush2.msra.mxu0 0.0
      %336 = vmatprep.subr.mxu0 0.0
      %337 = vmatpush2.msra.mxu0 0.0
      %338 = vmatprep.subr.mxu0 0.0
      %339 = vmatpush2.msra.mxu0 0.0
      %340 = vmatprep.subr.mxu0 0.0
      %341 = vmatpush2.msra.mxu0 0.0
      %342 = vmatprep.subr.mxu0 0.0
      %343 = vmatpush2.msra.mxu0 0.0
      %344 = vmatprep.subr.mxu0 0.0
      %345 = vmatpush2.msra.mxu0 0.0
      %346 = vmatprep.subr.mxu0 0.0
      %347 = vmatpush2.msra.mxu0 0.0
      %348 = vmatprep.subr.mxu0 0.0
      %349 = vmatpush2.msra.mxu0 0.0
      %350 = vmatprep.subr.mxu0 0.0
      %351 = vmatpush2.msra.mxu0 0.0
      %352 = vmatprep.subr.mxu0 0.0
      %353 = vmatpush2.msra.mxu0 0.0
      %354 = vmatprep.mubr.f32.mxu0 0.0
      %355 = vmatmul.mubr.f32.gmra.mxu0 %v288
      %v356 = vpop.f32.mrf.mxu0
      %v357 = vadd.f32 %v284, %v356
      %v358 = vpop.f32.mrf.mxu0
      %359 = vdwg.mxu0
      %vm360 = vcmask 64512
      %v362 = vsel %vm360, %v357, 0
      %364 = vmatprep.subr.mxu0 0.0
      %365 = vmatpush1.xpose.msra.mxu0 0.0
      %366 = vmatprep.subr.mxu0 0.0
      %367 = vmatpush1.xpose.msra.mxu0 0.0
      %368 = vmatprep.subr.mxu0 0.0
      %369 = vmatpush1.xpose.msra.mxu0 0.0
      %370 = vmatprep.subr.mxu0 0.0
      %371 = vmatpush1.xpose.msra.mxu0 0.0
      %372 = vmatprep.subr.mxu0 0.0
      %373 = vmatpush1.xpose.msra.mxu0 0.0
      %374 = vmatprep.subr.mxu0 0.0
      %375 = vmatpush1.xpose.msra.mxu0 0.0
      %376 = vmatprep.subr.mxu0 0.0
      %377 = vmatpush1.xpose.msra.mxu0 0.0
      %378 = vmatprep.subr.mxu0 0.0
      %379 = vmatpush1.xpose.msra.mxu0 0.0
      %380 = vmatprep.subr.mxu0 0.0
      %381 = vmatpush1.xpose.msra.mxu0 0.0
      %382 = vmatprep.subr.mxu0 0.0
      %383 = vmatpush1.xpose.msra.mxu0 0.0
      %384 = vmatprep.subr.mxu0 0.0
      %385 = vmatpush1.xpose.msra.mxu0 0.0
      %386 = vmatprep.subr.mxu0 0.0
      %387 = vmatpush1.xpose.msra.mxu0 0.0
      %388 = vmatprep.subr.mxu0 0.0
      %389 = vmatpush1.xpose.msra.mxu0 0.0
      %390 = vmatprep.subr.mxu0 0.0
      %391 = vmatpush1.xpose.msra.mxu0 0.0
      %392 = vmatprep.subr.mxu0 0.0
      %393 = vmatpush1.xpose.msra.mxu0 0.0
      %394 = vmatprep.subr.mxu0 0.0
      %395 = vmatpush1.xpose.msra.mxu0 %v362
      %396 = vmatprep.subr.mxu0 0.0
      %397 = vmatpush2.xpose.msra.mxu0 0.0
      %398 = vmatprep.subr.mxu0 0.0
      %399 = vmatpush2.xpose.msra.mxu0 0.0
      %400 = vmatprep.subr.mxu0 0.0
      %401 = vmatpush2.xpose.msra.mxu0 0.0
      %402 = vmatprep.subr.mxu0 0.0
      %403 = vmatpush2.xpose.msra.mxu0 0.0
      %404 = vmatprep.subr.mxu0 0.0
      %405 = vmatpush2.xpose.msra.mxu0 0.0
      %406 = vmatprep.subr.mxu0 0.0
      %407 = vmatpush2.xpose.msra.mxu0 0.0
      %408 = vmatprep.subr.mxu0 0.0
      %409 = vmatpush2.xpose.msra.mxu0 0.0
      %410 = vmatprep.subr.mxu0 0.0
      %411 = vmatpush2.xpose.msra.mxu0 0.0
      %412 = vmatprep.subr.mxu0 0.0
      %413 = vmatpush2.xpose.msra.mxu0 0.0
      %414 = vmatprep.subr.mxu0 0.0
      %415 = vmatpush2.xpose.msra.mxu0 0.0
      %416 = vmatprep.subr.mxu0 0.0
      %417 = vmatpush2.xpose.msra.mxu0 0.0
      %418 = vmatprep.subr.mxu0 0.0
      %419 = vmatpush2.xpose.msra.mxu0 0.0
      %420 = vmatprep.subr.mxu0 0.0
      %421 = vmatpush2.xpose.msra.mxu0 0.0
      %422 = vmatprep.subr.mxu0 0.0
      %423 = vmatpush2.xpose.msra.mxu0 0.0
      %424 = vmatprep.subr.mxu0 0.0
      %425 = vmatpush2.xpose.msra.mxu0 0.0
      %426 = vmatprep.subr.mxu0 0.0
      %427 = vmatpush2.xpose.msra.mxu0 0.0
      %428 = vmatprep.mubr.f32.mxu0 0.0
      %429 = vmatmul.mubr.f32.gmra.mxu0 %v362
      %v430 = vpop.f32.mrf.mxu0
      %v431 = vadd.f32 0.0, %v430
      %v432 = vpop.f32.mrf.mxu0
      %433 = vdwg.mxu0
      %v434 = vmul.f32 %v431, 0.35355338
      %v435 = vsel %vm360, %v434, -inf
      %436 = vmax.xlane.f32.xlu0 %v435
      %v437 = vpop.xlane.xlu0 %436
      %v438 = vsub.f32 %v434, %v437
      %v439 = vmul.f32 %v438, 1.442695
      %v440 = vpow.pop %v439
      %v441 = vsel %vm360, %v440, 0.0
      %442 = vadd.xlane.f32.xlu0 %v441
      %v443 = vpop.xlane.xlu0 %442
      %v444 = vrcp.pop %v443
      %v445 = vmul.f32 %v440, %v444
      %v447 = vsel %vm360, %v445, 0
      %449 = vmatprep.subr.mxu0 0.0
      %450 = vmatpush1.msra.mxu0 0.0
      %451 = vmatprep.subr.mxu0 0.0
      %452 = vmatpush1.msra.mxu0 0.0
      %453 = vmatprep.subr.mxu0 0.0
      %454 = vmatpush1.msra.mxu0 0.0
      %455 = vmatprep.subr.mxu0 0.0
      %456 = vmatpush1.msra.mxu0 0.0
      %457 = vmatprep.subr.mxu0 0.0
      %458 = vmatpush1.msra.mxu0 0.0
      %459 = vmatprep.subr.mxu0 0.0
      %460 = vmatpush1.msra.mxu0 0.0
      %461 = vmatprep.subr.mxu0 0.0
      %462 = vmatpush1.msra.mxu0 0.0
      %463 = vmatprep.subr.mxu0 0.0
      %464 = vmatpush1.msra.mxu0 0.0
      %465 = vmatprep.subr.mxu0 0.0
      %466 = vmatpush1.msra.mxu0 0.0
      %467 = vmatprep.subr.mxu0 0.0
      %468 = vmatpush1.msra.mxu0 0.0
      %469 = vmatprep.subr.mxu0 0.0
      %470 = vmatpush1.msra.mxu0 0.0
      %471 = vmatprep.subr.mxu0 0.0
      %472 = vmatpush1.msra.mxu0 0.0
      %473 = vmatprep.subr.mxu0 0.0
      %474 = vmatpush1.msra.mxu0 0.0
      %475 = vmatprep.subr.mxu0 0.0
      %476 = vmatpush1.msra.mxu0 0.0
      %477 = vmatprep.subr.mxu0 0.0
      %478 = vmatpush1.msra.mxu0 0.0
      %479 = vmatprep.subr.mxu0 0.0
      %480 = vmatpush1.msra.mxu0 %v357
      %481 = vmatprep.subr.mxu0 0.0
      %482 = vmatpush2.msra.mxu0 0.0
      %483 = vmatprep.subr.mxu0 0.0
      %484 = vmatpush2.msra.mxu0 0.0
      %485 = vmatprep.subr.mxu0 0.0
      %486 = vmatpush2.msra.mxu0 0.0
      %487 = vmatprep.subr.mxu0 0.0
      %488 = vmatpush2.msra.mxu0 0.0
      %489 = vmatprep.subr.mxu0 0.0
      %490 = vmatpush2.msra.mxu0 0.0
      %491 = vmatprep.subr.mxu0 0.0
      %492 = vmatpush2.msra.mxu0 0.0
      %493 = vmatprep.subr.mxu0 0.0
      %494 = vmatpush2.msra.mxu0 0.0
      %495 = vmatprep.subr.mxu0 0.0
      %496 = vmatpush2.msra.mxu0 0.0
      %497 = vmatprep.subr.mxu0 0.0
      %498 = vmatpush2.msra.mxu0 0.0
      %499 = vmatprep.subr.mxu0 0.0
      %500 = vmatpush2.msra.mxu0 0.0
      %501 = vmatprep.subr.mxu0 0.0
      %502 = vmatpush2.msra.mxu0 0.0
      %503 = vmatprep.subr.mxu0 0.0
      %504 = vmatpush2.msra.mxu0 0.0
      %505 = vmatprep.subr.mxu0 0.0
      %506 = vmatpush2.msra.mxu0 0.0
      %507 = vmatprep.subr.mxu0 0.0
      %508 = vmatpush2.msra.mxu0 0.0
      %509 = vmatprep.subr.mxu0 0.0
      %510 = vmatpush2.msra.mxu0 0.0
      %511 = vmatprep.subr.mxu0 0.0
      %512 = vmatpush2.msra.mxu0 0.0
      %513 = vmatprep.mubr.f32.mxu0 0.0
      %514 = vmatmul.mubr.f32.gmra.mxu0 %v447
      %v515 = vpop.f32.mrf.mxu0
      %v516 = vadd.f32 0.0, %v515
      %v517 = vpop.f32.mrf.mxu0
      %518 = vdwg.mxu0
      %519 = vrot.lane.b32.xlu0 %v357, 120
      %v520 = vpop.permute.xlu0 %519
      %v521 = vsel %vm360, %v520, 0
      %523 = vmatprep.subr.mxu0 0.0
      %524 = vmatpush1.xpose.msra.mxu0 0.0
      %525 = vmatprep.subr.mxu0 0.0
      %526 = vmatpush1.xpose.msra.mxu0 0.0
      %527 = vmatprep.subr.mxu0 0.0
      %528 = vmatpush1.xpose.msra.mxu0 0.0
      %529 = vmatprep.subr.mxu0 0.0
      %530 = vmatpush1.xpose.msra.mxu0 0.0
      %531 = vmatprep.subr.mxu0 0.0
      %532 = vmatpush1.xpose.msra.mxu0 0.0
      %533 = vmatprep.subr.mxu0 0.0
      %534 = vmatpush1.xpose.msra.mxu0 0.0
      %535 = vmatprep.subr.mxu0 0.0
      %536 = vmatpush1.xpose.msra.mxu0 0.0
      %537 = vmatprep.subr.mxu0 0.0
      %538 = vmatpush1.xpose.msra.mxu0 0.0
      %539 = vmatprep.subr.mxu0 0.0
      %540 = vmatpush1.xpose.msra.mxu0 0.0
      %541 = vmatprep.subr.mxu0 0.0
      %542 = vmatpush1.xpose.msra.mxu0 0.0
      %543 = vmatprep.subr.mxu0 0.0
      %544 = vmatpush1.xpose.msra.mxu0 0.0
      %545 = vmatprep.subr.mxu0 0.0
      %546 = vmatpush1.xpose.msra.mxu0 0.0
      %547 = vmatprep.subr.mxu0 0.0
      %548 = vmatpush1.xpose.msra.mxu0 0.0
      %549 = vmatprep.subr.mxu0 0.0
      %550 = vmatpush1.xpose.msra.mxu0 0.0
      %551 = vmatprep.subr.mxu0 0.0
      %552 = vmatpush1.xpose.msra.mxu0 0.0
      %553 = vmatprep.subr.mxu0 0.0
      %554 = vmatpush1.xpose.msra.mxu0 %v521
      %555 = vmatprep.subr.mxu0 0.0
      %556 = vmatpush2.xpose.msra.mxu0 0.0
      %557 = vmatprep.subr.mxu0 0.0
      %558 = vmatpush2.xpose.msra.mxu0 0.0
      %559 = vmatprep.subr.mxu0 0.0
      %560 = vmatpush2.xpose.msra.mxu0 0.0
      %561 = vmatprep.subr.mxu0 0.0
      %562 = vmatpush2.xpose.msra.mxu0 0.0
      %563 = vmatprep.subr.mxu0 0.0
      %564 = vmatpush2.xpose.msra.mxu0 0.0
      %565 = vmatprep.subr.mxu0 0.0
      %566 = vmatpush2.xpose.msra.mxu0 0.0
      %567 = vmatprep.subr.mxu0 0.0
      %568 = vmatpush2.xpose.msra.mxu0 0.0
      %569 = vmatprep.subr.mxu0 0.0
      %570 = vmatpush2.xpose.msra.mxu0 0.0
      %571 = vmatprep.subr.mxu0 0.0
      %572 = vmatpush2.xpose.msra.mxu0 0.0
      %573 = vmatprep.subr.mxu0 0.0
      %574 = vmatpush2.xpose.msra.mxu0 0.0
      %575 = vmatprep.subr.mxu0 0.0
      %576 = vmatpush2.xpose.msra.mxu0 0.0
      %577 = vmatprep.subr.mxu0 0.0
      %578 = vmatpush2.xpose.msra.mxu0 0.0
      %579 = vmatprep.subr.mxu0 0.0
      %580 = vmatpush2.xpose.msra.mxu0 0.0
      %581 = vmatprep.subr.mxu0 0.0
      %582 = vmatpush2.xpose.msra.mxu0 0.0
      %583 = vmatprep.subr.mxu0 0.0
      %584 = vmatpush2.xpose.msra.mxu0 0.0
      %585 = vmatprep.subr.mxu0 0.0
      %586 = vmatpush2.xpose.msra.mxu0 0.0
      %587 = vmatprep.mubr.f32.mxu0 0.0
      %588 = vmatmul.mubr.f32.gmra.mxu0 %v521
      %v589 = vpop.f32.mrf.mxu0
      %v590 = vadd.f32 0.0, %v589
      %v591 = vpop.f32.mrf.mxu0
      %592 = vdwg.mxu0
      %v593 = vmul.f32 %v590, 0.35355338
      %v594 = vsel %vm360, %v593, -inf
      %595 = vmax.xlane.f32.xlu0 %v594
      %v596 = vpop.xlane.xlu0 %595
      %v597 = vsub.f32 %v593, %v596
      %v598 = vmul.f32 %v597, 1.442695
      %v599 = vpow.pop %v598
      %v600 = vsel %vm360, %v599, 0.0
      %601 = vadd.xlane.f32.xlu0 %v600
      %v602 = vpop.xlane.xlu0 %601
      %v603 = vrcp.pop %v602
      %v604 = vmul.f32 %v599, %v603
      %v607 = vsel %vm360, %v604, 0
      %609 = vmatprep.subr.mxu0 0.0
      %610 = vmatpush1.msra.mxu0 0.0
      %611 = vmatprep.subr.mxu0 0.0
      %612 = vmatpush1.msra.mxu0 0.0
      %613 = vmatprep.subr.mxu0 0.0
      %614 = vmatpush1.msra.mxu0 0.0
      %615 = vmatprep.subr.mxu0 0.0
      %616 = vmatpush1.msra.mxu0 0.0
      %617 = vmatprep.subr.mxu0 0.0
      %618 = vmatpush1.msra.mxu0 0.0
      %619 = vmatprep.subr.mxu0 0.0
      %620 = vmatpush1.msra.mxu0 0.0
      %621 = vmatprep.subr.mxu0 0.0
      %622 = vmatpush1.msra.mxu0 0.0
      %623 = vmatprep.subr.mxu0 0.0
      %624 = vmatpush1.msra.mxu0 0.0
      %625 = vmatprep.subr.mxu0 0.0
      %626 = vmatpush1.msra.mxu0 0.0
      %627 = vmatprep.subr.mxu0 0.0
      %628 = vmatpush1.msra.mxu0 0.0
      %629 = vmatprep.subr.mxu0 0.0
      %630 = vmatpush1.msra.mxu0 0.0
      %631 = vmatprep.subr.mxu0 0.0
      %632 = vmatpush1.msra.mxu0 0.0
      %633 = vmatprep.subr.mxu0 0.0
      %634 = vmatpush1.msra.mxu0 0.0
      %635 = vmatprep.subr.mxu0 0.0
      %636 = vmatpush1.msra.mxu0 0.0
      %637 = vmatprep.subr.mxu0 0.0
      %638 = vmatpush1.msra.mxu0 0.0
      %639 = vmatprep.subr.mxu0 0.0
      %640 = vmatpush1.msra.mxu0 %v520
      %641 = vmatprep.subr.mxu0 0.0
      %642 = vmatpush2.msra.mxu0 0.0
      %643 = vmatprep.subr.mxu0 0.0
      %644 = vmatpush2.msra.mxu0 0.0
      %645 = vmatprep.subr.mxu0 0.0
      %646 = vmatpush2.msra.mxu0 0.0
      %647 = vmatprep.subr.mxu0 0.0
      %648 = vmatpush2.msra.mxu0 0.0
      %649 = vmatprep.subr.mxu0 0.0
      %650 = vmatpush2.msra.mxu0 0.0
      %651 = vmatprep.subr.mxu0 0.0
      %652 = vmatpush2.msra.mxu0 0.0
      %653 = vmatprep.subr.mxu0 0.0
      %654 = vmatpush2.msra.mxu0 0.0
      %655 = vmatprep.subr.mxu0 0.0
      %656 = vmatpush2.msra.mxu0 0.0
      %657 = vmatprep.subr.mxu0 0.0
      %658 = vmatpush2.msra.mxu0 0.0
      %659 = vmatprep.subr.mxu0 0.0
      %660 = vmatpush2.msra.mxu0 0.0
      %661 = vmatprep.subr.mxu0 0.0
      %662 = vmatpush2.msra.mxu0 0.0
      %663 = vmatprep.subr.mxu0 0.0
      %664 = vmatpush2.msra.mxu0 0.0
      %665 = vmatprep.subr.mxu0 0.0
      %666 = vmatpush2.msra.mxu0 0.0
      %667 = vmatprep.subr.mxu0 0.0
      %668 = vmatpush2.msra.mxu0 0.0
      %669 = vmatprep.subr.mxu0 0.0
      %670 = vmatpush2.msra.mxu0 0.0
      %671 = vmatprep.subr.mxu0 0.0
      %672 = vmatpush2.msra.mxu0 0.0
      %673 = vmatprep.mubr.f32.mxu0 0.0
      %674 = vmatmul.mubr.f32.gmra.mxu0 %v607
      %v675 = vpop.f32.mrf.mxu0
      %v676 = vadd.f32 0.0, %v675
      %v677 = vpop.f32.mrf.mxu0
      %678 = vdwg.mxu0
      %679 = vrot.lane.b32.xlu0 %v357, 112
      %v680 = vpop.permute.xlu0 %679
      %v681 = vsel %vm360, %v680, 0
      %683 = vmatprep.subr.mxu0 0.0
      %684 = vmatpush1.xpose.msra.mxu0 0.0
      %685 = vmatprep.subr.mxu0 0.0
      %686 = vmatpush1.xpose.msra.mxu0 0.0
      %687 = vmatprep.subr.mxu0 0.0
      %688 = vmatpush1.xpose.msra.mxu0 0.0
      %689 = vmatprep.subr.mxu0 0.0
      %690 = vmatpush1.xpose.msra.mxu0 0.0
      %691 = vmatprep.subr.mxu0 0.0
      %692 = vmatpush1.xpose.msra.mxu0 0.0
      %693 = vmatprep.subr.mxu0 0.0
      %694 = vmatpush1.xpose.msra.mxu0 0.0
      %695 = vmatprep.subr.mxu0 0.0
      %696 = vmatpush1.xpose.msra.mxu0 0.0
      %697 = vmatprep.subr.mxu0 0.0
      %698 = vmatpush1.xpose.msra.mxu0 0.0
      %699 = vmatprep.subr.mxu0 0.0
      %700 = vmatpush1.xpose.msra.mxu0 0.0
      %701 = vmatprep.subr.mxu0 0.0
      %702 = vmatpush1.xpose.msra.mxu0 0.0
      %703 = vmatprep.subr.mxu0 0.0
      %704 = vmatpush1.xpose.msra.mxu0 0.0
      %705 = vmatprep.subr.mxu0 0.0
      %706 = vmatpush1.xpose.msra.mxu0 0.0
      %707 = vmatprep.subr.mxu0 0.0
      %708 = vmatpush1.xpose.msra.mxu0 0.0
      %709 = vmatprep.subr.mxu0 0.0
      %710 = vmatpush1.xpose.msra.mxu0 0.0
      %711 = vmatprep.subr.mxu0 0.0
      %712 = vmatpush1.xpose.msra.mxu0 0.0
      %713 = vmatprep.subr.mxu0 0.0
      %714 = vmatpush1.xpose.msra.mxu0 %v681
      %715 = vmatprep.subr.mxu0 0.0
      %716 = vmatpush2.xpose.msra.mxu0 0.0
      %717 = vmatprep.subr.mxu0 0.0
      %718 = vmatpush2.xpose.msra.mxu0 0.0
      %719 = vmatprep.subr.mxu0 0.0
      %720 = vmatpush2.xpose.msra.mxu0 0.0
      %721 = vmatprep.subr.mxu0 0.0
      %722 = vmatpush2.xpose.msra.mxu0 0.0
      %723 = vmatprep.subr.mxu0 0.0
      %724 = vmatpush2.xpose.msra.mxu0 0.0
      %725 = vmatprep.subr.mxu0 0.0
      %726 = vmatpush2.xpose.msra.mxu0 0.0
      %727 = vmatprep.subr.mxu0 0.0
      %728 = vmatpush2.xpose.msra.mxu0 0.0
      %729 = vmatprep.subr.mxu0 0.0
      %730 = vmatpush2.xpose.msra.mxu0 0.0
      %731 = vmatprep.subr.mxu0 0.0
      %732 = vmatpush2.xpose.msra.mxu0 0.0
      %733 = vmatprep.subr.mxu0 0.0
      %734 = vmatpush2.xpose.msra.mxu0 0.0
      %735 = vmatprep.subr.mxu0 0.0
      %736 = vmatpush2.xpose.msra.mxu0 0.0
      %737 = vmatprep.subr.mxu0 0.0
      %738 = vmatpush2.xpose.msra.mxu0 0.0
      %739 = vmatprep.subr.mxu0 0.0
      %740 = vmatpush2.xpose.msra.mxu0 0.0
      %741 = vmatprep.subr.mxu0 0.0
      %742 = vmatpush2.xpose.msra.mxu0 0.0
      %743 = vmatprep.subr.mxu0 0.0
      %744 = vmatpush2.xpose.msra.mxu0 0.0
      %745 = vmatprep.subr.mxu0 0.0
      %746 = vmatpush2.xpose.msra.mxu0 0.0
      %747 = vmatprep.mubr.f32.mxu0 0.0
      %748 = vmatmul.mubr.f32.gmra.mxu0 %v681
      %v749 = vpop.f32.mrf.mxu0
      %v750 = vadd.f32 0.0, %v749
      %v751 = vpop.f32.mrf.mxu0
      %752 = vdwg.mxu0
      %v753 = vmul.f32 %v750, 0.35355338
      %v754 = vsel %vm360, %v753, -inf
      %755 = vmax.xlane.f32.xlu0 %v754
      %v756 = vpop.xlane.xlu0 %755
      %v757 = vsub.f32 %v753, %v756
      %v758 = vmul.f32 %v757, 1.442695
      %v759 = vpow.pop %v758
      %v760 = vsel %vm360, %v759, 0.0
      %761 = vadd.xlane.f32.xlu0 %v760
      %v762 = vpop.xlane.xlu0 %761
      %v763 = vrcp.pop %v762
      %v764 = vmul.f32 %v759, %v763
      %v767 = vsel %vm360, %v764, 0
      %769 = vmatprep.subr.mxu0 0.0
      %770 = vmatpush1.msra.mxu0 0.0
      %771 = vmatprep.subr.mxu0 0.0
      %772 = vmatpush1.msra.mxu0 0.0
      %773 = vmatprep.subr.mxu0 0.0
      %774 = vmatpush1.msra.mxu0 0.0
      %775 = vmatprep.subr.mxu0 0.0
      %776 = vmatpush1.msra.mxu0 0.0
      %777 = vmatprep.subr.mxu0 0.0
      %778 = vmatpush1.msra.mxu0 0.0
      %779 = vmatprep.subr.mxu0 0.0
      %780 = vmatpush1.msra.mxu0 0.0
      %781 = vmatprep.subr.mxu0 0.0
      %782 = vmatpush1.msra.mxu0 0.0
      %783 = vmatprep.subr.mxu0 0.0
      %784 = vmatpush1.msra.mxu0 0.0
      %785 = vmatprep.subr.mxu0 0.0
      %786 = vmatpush1.msra.mxu0 0.0
      %787 = vmatprep.subr.mxu0 0.0
      %788 = vmatpush1.msra.mxu0 0.0
      %789 = vmatprep.subr.mxu0 0.0
      %790 = vmatpush1.msra.mxu0 0.0
      %791 = vmatprep.subr.mxu0 0.0
      %792 = vmatpush1.msra.mxu0 0.0
      %793 = vmatprep.subr.mxu0 0.0
      %794 = vmatpush1.msra.mxu0 0.0
      %795 = vmatprep.subr.mxu0 0.0
      %796 = vmatpush1.msra.mxu0 0.0
      %797 = vmatprep.subr.mxu0 0.0
      %798 = vmatpush1.msra.mxu0 0.0
      %799 = vmatprep.subr.mxu0 0.0
      %800 = vmatpush1.msra.mxu0 %v680
      %801 = vmatprep.subr.mxu0 0.0
      %802 = vmatpush2.msra.mxu0 0.0
      %803 = vmatprep.subr.mxu0 0.0
      %804 = vmatpush2.msra.mxu0 0.0
      %805 = vmatprep.subr.mxu0 0.0
      %806 = vmatpush2.msra.mxu0 0.0
      %807 = vmatprep.subr.mxu0 0.0
      %808 = vmatpush2.msra.mxu0 0.0
      %809 = vmatprep.subr.mxu0 0.0
      %810 = vmatpush2.msra.mxu0 0.0
      %811 = vmatprep.subr.mxu0 0.0
      %812 = vmatpush2.msra.mxu0 0.0
      %813 = vmatprep.subr.mxu0 0.0
      %814 = vmatpush2.msra.mxu0 0.0
      %815 = vmatprep.subr.mxu0 0.0
      %816 = vmatpush2.msra.mxu0 0.0
      %817 = vmatprep.subr.mxu0 0.0
      %818 = vmatpush2.msra.mxu0 0.0
      %819 = vmatprep.subr.mxu0 0.0
      %820 = vmatpush2.msra.mxu0 0.0
      %821 = vmatprep.subr.mxu0 0.0
      %822 = vmatpush2.msra.mxu0 0.0
      %823 = vmatprep.subr.mxu0 0.0
      %824 = vmatpush2.msra.mxu0 0.0
      %825 = vmatprep.subr.mxu0 0.0
      %826 = vmatpush2.msra.mxu0 0.0
      %827 = vmatprep.subr.mxu0 0.0
      %828 = vmatpush2.msra.mxu0 0.0
      %829 = vmatprep.subr.mxu0 0.0
      %830 = vmatpush2.msra.mxu0 0.0
      %831 = vmatprep.subr.mxu0 0.0
      %832 = vmatpush2.msra.mxu0 0.0
      %833 = vmatprep.mubr.f32.mxu0 0.0
      %834 = vmatmul.mubr.f32.gmra.mxu0 %v767
      %v835 = vpop.f32.mrf.mxu0
      %v836 = vadd.f32 0.0, %v835
      %v837 = vpop.f32.mrf.mxu0
      %838 = vdwg.mxu0
      %839 = vrot.lane.b32.xlu0 %v357, 104
      %v840 = vpop.permute.xlu0 %839
      %v841 = vsel %vm360, %v840, 0
      %843 = vmatprep.subr.mxu0 0.0
      %844 = vmatpush1.xpose.msra.mxu0 0.0
      %845 = vmatprep.subr.mxu0 0.0
      %846 = vmatpush1.xpose.msra.mxu0 0.0
      %847 = vmatprep.subr.mxu0 0.0
      %848 = vmatpush1.xpose.msra.mxu0 0.0
      %849 = vmatprep.subr.mxu0 0.0
      %850 = vmatpush1.xpose.msra.mxu0 0.0
      %851 = vmatprep.subr.mxu0 0.0
      %852 = vmatpush1.xpose.msra.mxu0 0.0
      %853 = vmatprep.subr.mxu0 0.0
      %854 = vmatpush1.xpose.msra.mxu0 0.0
      %855 = vmatprep.subr.mxu0 0.0
      %856 = vmatpush1.xpose.msra.mxu0 0.0
      %857 = vmatprep.subr.mxu0 0.0
      %858 = vmatpush1.xpose.msra.mxu0 0.0
      %859 = vmatprep.subr.mxu0 0.0
      %860 = vmatpush1.xpose.msra.mxu0 0.0
      %861 = vmatprep.subr.mxu0 0.0
      %862 = vmatpush1.xpose.msra.mxu0 0.0
      %863 = vmatprep.subr.mxu0 0.0
      %864 = vmatpush1.xpose.msra.mxu0 0.0
      %865 = vmatprep.subr.mxu0 0.0
      %866 = vmatpush1.xpose.msra.mxu0 0.0
      %867 = vmatprep.subr.mxu0 0.0
      %868 = vmatpush1.xpose.msra.mxu0 0.0
      %869 = vmatprep.subr.mxu0 0.0
      %870 = vmatpush1.xpose.msra.mxu0 0.0
      %871 = vmatprep.subr.mxu0 0.0
      %872 = vmatpush1.xpose.msra.mxu0 0.0
      %873 = vmatprep.subr.mxu0 0.0
      %874 = vmatpush1.xpose.msra.mxu0 %v841
      %875 = vmatprep.subr.mxu0 0.0
      %876 = vmatpush2.xpose.msra.mxu0 0.0
      %877 = vmatprep.subr.mxu0 0.0
      %878 = vmatpush2.xpose.msra.mxu0 0.0
      %879 = vmatprep.subr.mxu0 0.0
      %880 = vmatpush2.xpose.msra.mxu0 0.0
      %881 = vmatprep.subr.mxu0 0.0
      %882 = vmatpush2.xpose.msra.mxu0 0.0
      %883 = vmatprep.subr.mxu0 0.0
      %884 = vmatpush2.xpose.msra.mxu0 0.0
      %885 = vmatprep.subr.mxu0 0.0
      %886 = vmatpush2.xpose.msra.mxu0 0.0
      %887 = vmatprep.subr.mxu0 0.0
      %888 = vmatpush2.xpose.msra.mxu0 0.0
      %889 = vmatprep.subr.mxu0 0.0
      %890 = vmatpush2.xpose.msra.mxu0 0.0
      %891 = vmatprep.subr.mxu0 0.0
      %892 = vmatpush2.xpose.msra.mxu0 0.0
      %893 = vmatprep.subr.mxu0 0.0
      %894 = vmatpush2.xpose.msra.mxu0 0.0
      %895 = vmatprep.subr.mxu0 0.0
      %896 = vmatpush2.xpose.msra.mxu0 0.0
      %897 = vmatprep.subr.mxu0 0.0
      %898 = vmatpush2.xpose.msra.mxu0 0.0
      %899 = vmatprep.subr.mxu0 0.0
      %900 = vmatpush2.xpose.msra.mxu0 0.0
      %901 = vmatprep.subr.mxu0 0.0
      %902 = vmatpush2.xpose.msra.mxu0 0.0
      %903 = vmatprep.subr.mxu0 0.0
      %904 = vmatpush2.xpose.msra.mxu0 0.0
      %905 = vmatprep.subr.mxu0 0.0
      %906 = vmatpush2.xpose.msra.mxu0 0.0
      %907 = vmatprep.mubr.f32.mxu0 0.0
      %908 = vmatmul.mubr.f32.gmra.mxu0 %v841
      %v909 = vpop.f32.mrf.mxu0
      %v910 = vadd.f32 0.0, %v909
      %v911 = vpop.f32.mrf.mxu0
      %912 = vdwg.mxu0
      %v913 = vmul.f32 %v910, 0.35355338
      %v914 = vsel %vm360, %v913, -inf
      %915 = vmax.xlane.f32.xlu0 %v914
      %v916 = vpop.xlane.xlu0 %915
      %v917 = vsub.f32 %v913, %v916
      %v918 = vmul.f32 %v917, 1.442695
      %v919 = vpow.pop %v918
      %v920 = vsel %vm360, %v919, 0.0
      %921 = vadd.xlane.f32.xlu0 %v920
      %v922 = vpop.xlane.xlu0 %921
      %v923 = vrcp.pop %v922
      %v924 = vmul.f32 %v919, %v923
      %v927 = vsel %vm360, %v924, 0
      %929 = vmatprep.subr.mxu0 0.0
      %930 = vmatpush1.msra.mxu0 0.0
      %931 = vmatprep.subr.mxu0 0.0
      %932 = vmatpush1.msra.mxu0 0.0
      %933 = vmatprep.subr.mxu0 0.0
      %934 = vmatpush1.msra.mxu0 0.0
      %935 = vmatprep.subr.mxu0 0.0
      %936 = vmatpush1.msra.mxu0 0.0
      %937 = vmatprep.subr.mxu0 0.0
      %938 = vmatpush1.msra.mxu0 0.0
      %939 = vmatprep.subr.mxu0 0.0
      %940 = vmatpush1.msra.mxu0 0.0
      %941 = vmatprep.subr.mxu0 0.0
      %942 = vmatpush1.msra.mxu0 0.0
      %943 = vmatprep.subr.mxu0 0.0
      %944 = vmatpush1.msra.mxu0 0.0
      %945 = vmatprep.subr.mxu0 0.0
      %946 = vmatpush1.msra.mxu0 0.0
      %947 = vmatprep.subr.mxu0 0.0
      %948 = vmatpush1.msra.mxu0 0.0
      %949 = vmatprep.subr.mxu0 0.0
      %950 = vmatpush1.msra.mxu0 0.0
      %951 = vmatprep.subr.mxu0 0.0
      %952 = vmatpush1.msra.mxu0 0.0
      %953 = vmatprep.subr.mxu0 0.0
      %954 = vmatpush1.msra.mxu0 0.0
      %955 = vmatprep.subr.mxu0 0.0
      %956 = vmatpush1.msra.mxu0 0.0
      %957 = vmatprep.subr.mxu0 0.0
      %958 = vmatpush1.msra.mxu0 0.0
      %959 = vmatprep.subr.mxu0 0.0
      %960 = vmatpush1.msra.mxu0 %v840
      %961 = vmatprep.subr.mxu0 0.0
      %962 = vmatpush2.msra.mxu0 0.0
      %963 = vmatprep.subr.mxu0 0.0
      %964 = vmatpush2.msra.mxu0 0.0
      %965 = vmatprep.subr.mxu0 0.0
      %966 = vmatpush2.msra.mxu0 0.0
      %967 = vmatprep.subr.mxu0 0.0
      %968 = vmatpush2.msra.mxu0 0.0
      %969 = vmatprep.subr.mxu0 0.0
      %970 = vmatpush2.msra.mxu0 0.0
      %971 = vmatprep.subr.mxu0 0.0
      %972 = vmatpush2.msra.mxu0 0.0
      %973 = vmatprep.subr.mxu0 0.0
      %974 = vmatpush2.msra.mxu0 0.0
      %975 = vmatprep.subr.mxu0 0.0
      %976 = vmatpush2.msra.mxu0 0.0
      %977 = vmatprep.subr.mxu0 0.0
      %978 = vmatpush2.msra.mxu0 0.0
      %979 = vmatprep.subr.mxu0 0.0
      %980 = vmatpush2.msra.mxu0 0.0
      %981 = vmatprep.subr.mxu0 0.0
      %982 = vmatpush2.msra.mxu0 0.0
      %983 = vmatprep.subr.mxu0 0.0
      %984 = vmatpush2.msra.mxu0 0.0
      %985 = vmatprep.subr.mxu0 0.0
      %986 = vmatpush2.msra.mxu0 0.0
      %987 = vmatprep.subr.mxu0 0.0
      %988 = vmatpush2.msra.mxu0 0.0
      %989 = vmatprep.subr.mxu0 0.0
      %990 = vmatpush2.msra.mxu0 0.0
      %991 = vmatprep.subr.mxu0 0.0
      %992 = vmatpush2.msra.mxu0 0.0
      %993 = vmatprep.mubr.f32.mxu0 0.0
      %994 = vmatmul.mubr.f32.gmra.mxu0 %v927
      %v995 = vpop.f32.mrf.mxu0
      %v996 = vadd.f32 0.0, %v995
      %v997 = vpop.f32.mrf.mxu0
      %998 = vdwg.mxu0
      %1000 = vrot.lane.b32.xlu0 %v676, 8
      %v1001 = vpop.permute.xlu0 %1000
      %1004 = vrot.lane.b32.xlu0 %v836, 16
      %v1005 = vpop.permute.xlu0 %1004
      %1008 = vrot.lane.b32.xlu0 %v996, 24
      %v1009 = vpop.permute.xlu0 %1008
      %v1011 = vsel %vm360, %v516, %v1001
      %vm1012 = vcmask 130048
      %v1013 = vsel %vm1012, %v1011, %v1005
      %vm1014 = vcmask 195584
      %v1015 = vsel %vm1014, %v1013, %v1009
      %v1016 = vld [vmem:[%s3] sm:$0xff]
      %v1017 = vld [vmem:[%s3 + $0x8] sm:$0xff]
      %v1018 = vld [vmem:[%s3 + $0x10] sm:$0xff]
      %v1019 = vld [vmem:[%s3 + $0x18] sm:$0xff]
      %v1020 = vld [vmem:[%s4] sm:$0x1]
      %v1022 = vlaneseq
      %v1023 = vshrl.u32 %v1022, 7
      %v1024 = vsub.s32 0, %v1023
      %v1025 = vrot.slane %v1020, %v1024
      %v1028 = vsel %vm286, %v1015, 0
      %1030 = vmatprep.subr.mxu0 0.0
      %1031 = vmatpush1.msra.mxu0 0.0
      %1032 = vmatprep.subr.mxu0 0.0
      %1033 = vmatpush1.msra.mxu0 0.0
      %1034 = vmatprep.subr.mxu0 0.0
      %1035 = vmatpush1.msra.mxu0 0.0
      %1036 = vmatprep.subr.mxu0 0.0
      %1037 = vmatpush1.msra.mxu0 0.0
      %1038 = vmatprep.subr.mxu0 0.0
      %1039 = vmatpush1.msra.mxu0 0.0
      %1040 = vmatprep.subr.mxu0 0.0
      %1041 = vmatpush1.msra.mxu0 0.0
      %1042 = vmatprep.subr.mxu0 0.0
      %1043 = vmatpush1.msra.mxu0 0.0
      %1044 = vmatprep.subr.mxu0 0.0
      %1045 = vmatpush1.msra.mxu0 0.0
      %1046 = vmatprep.subr.mxu0 0.0
      %1047 = vmatpush1.msra.mxu0 0.0
      %1048 = vmatprep.subr.mxu0 0.0
      %1049 = vmatpush1.msra.mxu0 0.0
      %1050 = vmatprep.subr.mxu0 0.0
      %1051 = vmatpush1.msra.mxu0 0.0
      %1052 = vmatprep.subr.mxu0 0.0
      %1053 = vmatpush1.msra.mxu0 0.0
      %1054 = vmatprep.subr.mxu0 0.0
      %1055 = vmatpush1.msra.mxu0 %v1019
      %1056 = vmatprep.subr.mxu0 0.0
      %1057 = vmatpush1.msra.mxu0 %v1018
      %1058 = vmatprep.subr.mxu0 0.0
      %1059 = vmatpush1.msra.mxu0 %v1017
      %1060 = vmatprep.subr.mxu0 0.0
      %1061 = vmatpush1.msra.mxu0 %v1016
      %1062 = vmatprep.subr.mxu0 0.0
      %1063 = vmatpush2.msra.mxu0 0.0
      %1064 = vmatprep.subr.mxu0 0.0
      %1065 = vmatpush2.msra.mxu0 0.0
      %1066 = vmatprep.subr.mxu0 0.0
      %1067 = vmatpush2.msra.mxu0 0.0
      %1068 = vmatprep.subr.mxu0 0.0
      %1069 = vmatpush2.msra.mxu0 0.0
      %1070 = vmatprep.subr.mxu0 0.0
      %1071 = vmatpush2.msra.mxu0 0.0
      %1072 = vmatprep.subr.mxu0 0.0
      %1073 = vmatpush2.msra.mxu0 0.0
      %1074 = vmatprep.subr.mxu0 0.0
      %1075 = vmatpush2.msra.mxu0 0.0
      %1076 = vmatprep.subr.mxu0 0.0
      %1077 = vmatpush2.msra.mxu0 0.0
      %1078 = vmatprep.subr.mxu0 0.0
      %1079 = vmatpush2.msra.mxu0 0.0
      %1080 = vmatprep.subr.mxu0 0.0
      %1081 = vmatpush2.msra.mxu0 0.0
      %1082 = vmatprep.subr.mxu0 0.0
      %1083 = vmatpush2.msra.mxu0 0.0
      %1084 = vmatprep.subr.mxu0 0.0
      %1085 = vmatpush2.msra.mxu0 0.0
      %1086 = vmatprep.subr.mxu0 0.0
      %1087 = vmatpush2.msra.mxu0 0.0
      %1088 = vmatprep.subr.mxu0 0.0
      %1089 = vmatpush2.msra.mxu0 0.0
      %1090 = vmatprep.subr.mxu0 0.0
      %1091 = vmatpush2.msra.mxu0 0.0
      %1092 = vmatprep.subr.mxu0 0.0
      %1093 = vmatpush2.msra.mxu0 0.0
      %1094 = vmatprep.mubr.f32.mxu0 0.0
      %1095 = vmatmul.mubr.f32.gmra.mxu0 %v1028
      %v1096 = vpop.f32.mrf.mxu0
      %v1097 = vadd.f32 %v1025, %v1096
      %v1098 = vpop.f32.mrf.mxu0
      %1099 = vdwg.mxu0
      %v1100 = vadd.f32 %v1097, %v274
      %v1101 = vsel %vm286, %v1100, 0.0
      %1102 = vadd.xlane.f32.xlu0 %v1101
      %v1103 = vpop.xlane.xlu0 %1102
      %v1104 = vrcp.pop 32.0
      %v1105 = vmul.f32 %v1103, %v1104
      %v1106 = vsub.f32 %v1100, %v1105
      %v1107 = vmul.f32 %v1106, %v1106
      %v1108 = vsel %vm286, %v1107, 0.0
      %1109 = vadd.xlane.f32.xlu0 %v1108
      %v1110 = vpop.xlane.xlu0 %1109
      %v1111 = vmul.f32 %v1110, %v1104
      %v1112 = vadd.f32 %v1111, 1e-05
      %v1113 = vrsqrt.pop %v1112
      %v1114 = vmul.f32 %v1106, %v1113
      %v1115 = vld [vmem:[%s5] sm:$0x1]
      %v1117 = vlaneseq
      %v1118 = vshrl.u32 %v1117, 7
      %v1119 = vsub.s32 0, %v1118
      %v1120 = vrot.slane %v1115, %v1119
      %v1122 = vmul.f32 %v1114, %v1120
      %v1123 = vld [vmem:[%s6] sm:$0x1]
      %v1125 = vlaneseq
      %v1126 = vshrl.u32 %v1125, 7
      %v1127 = vsub.s32 0, %v1126
      %v1128 = vrot.slane %v1123, %v1127
      %v1130 = vadd.f32 %v1122, %v1128
      %1131 = vst.msk [vmem:[%s273] sm:$0xff] %vm286, %v1130
      %p1132 = scmp.lt.s32.totalorder %s18, 1
      %s1133 = scalar_select %p1132, %s18, 1
      %s1134 = smul.addr %s1133, 8
      %s1135 = scalar_lea.vmem %s7, %s1134
      // Predicated region
      $region49: #{transformer_classifier.7} parent=47 // pred_check
        %p1136 = pneg %p188
      $region50: #{transformer_classifier.7} parent=47 // pred_check_branch
        %1138 = sbr.rel (%p1136) target = $region52
      $region51: #{transformer_classifier.7} parent=47 // pred_region
        _
      $region52: #{transformer_classifier.7} parent=47 // pred_fallthru
        _
    $region48: #{transformer_classifier.7} parent=5 // pred_fallthru
      _
    %p1139 = scmp.le.s32.totalorder 2, %s13
    // Predicated region
    $region53: #{transformer_classifier.7} parent=5 // pred_check
      %p1140 = pneg %p1139
    $region54: #{transformer_classifier.7} parent=5 // pred_check_branch
      %1142 = sbr.rel (%p1140) target = $region56
    $region55: #{transformer_classifier.7} parent=5 // pred_region
      %s1143 = ssub.s32 %s13, 2
      // Predicated region
      $region57: #{transformer_classifier.7} parent=55 // pred_check
        %p1144 = pneg %p194
      $region58: #{transformer_classifier.7} parent=55 // pred_check_branch
        %1146 = sbr.rel (%p1144) target = $region60
      $region59: #{transformer_classifier.7} parent=55 // pred_region
        %p1147 = scmp.lt.s32.totalorder %s19, 1
        %s1148 = scalar_select %p1147, %s19, 1
        %s1149 = smul.addr %s1148, 8
        %s1150 = scalar_lea.vmem %s7, %s1149
      $region60: #{transformer_classifier.7} parent=55 // pred_fallthru
        _
    $region56: #{transformer_classifier.7} parent=5 // pred_fallthru
      _
  $region6: #{transformer_classifier.7} parent=0 // loop_footer
    %s17 = sadd.s32 1, %s13
  $region7: #{transformer_classifier.7} parent=0 // loop_footer_branch
    %12 = sbr.rel target = $region3
  $region8: #{transformer_classifier.7} parent=0 // loop_exit
    _

// kernel: transformer_classifier.9
$region0: #{transformer_classifier.9}
  #allocation0 [shape = 'u32[]', space=smem, size = 0x4, offset = 0x4, fixed_abs, tag = 'smem constant byte address 0x4 - core index']
  #allocation1 [shape = 'u32[144,128]{1,0:T(1,128)}', space=vmem, size = 0x12000, scoped, tag = 'internal scratch']
  %s0 = inlined_call_operand.vmem [shape: f32[2,256], index: 0, kind: input, shape index: {}]
  %s1 = inlined_call_operand.vmem [shape: f32[256,128], index: 1, kind: input, shape index: {}]
  %s2 = inlined_call_operand.vmem [shape: f32[1,128], index: 2, kind: input, shape index: {}]
  %s3 = inlined_call_operand.hbm [shape: f32[2,128], index: 3, kind: output, shape index: {}]
  %s4 = sld [smem:[#allocation0]]
  $region22: #{transformer_classifier.9} parent=0
    _
  %s6 = ssub.s32 1, %s4
  %s7 = scalar_select 0, %s6, %s4
  $region1: #{transformer_classifier.9} parent=0
    #allocation2 [shape = 'u8[1024]{0}', space=vmem, size = 0x400, scoped, tag = 'output window, operand 0, single buffered']
    #allocation3 [shape = 's32[1]{0}', space=sflag, size = 0x4, scoped, tag = 'scoped memory for transformer_classifier.9']
    %8 = vsyncpa [#allocation3], 0
    // Predicated region
    $region2: #{transformer_classifier.9} parent=1 // pred_check
      _
    $region3: #{transformer_classifier.9} parent=1 // pred_check_branch
      %10 = sbr.rel (0) target = $region5
    $region4: #{transformer_classifier.9} parent=1 // pred_region
      _
    $region5: #{transformer_classifier.9} parent=1 // pred_fallthru
      _
    // Predicated region
    $region6: #{transformer_classifier.9} parent=1 // pred_check
      _
    $region7: #{transformer_classifier.9} parent=1 // pred_check_branch
      %12 = sbr.rel (0) target = $region9
    $region8: #{transformer_classifier.9} parent=1 // pred_region
      _
    $region9: #{transformer_classifier.9} parent=1 // pred_fallthru
      _
    // Predicated region
    $region10: #{transformer_classifier.9} parent=1 // pred_check
      _
    $region11: #{transformer_classifier.9} parent=1 // pred_check_branch
      %14 = sbr.rel (0) target = $region13
    $region12: #{transformer_classifier.9} parent=1 // pred_region
      _
    $region13: #{transformer_classifier.9} parent=1 // pred_fallthru
      _
    %v15 = vld [vmem:[%s0] sm:$0xf]
    %v16 = vld [vmem:[%s1] sm:$0xff]
    %v17 = vld [vmem:[%s1 + $0x8] sm:$0xff]
    %v18 = vld [vmem:[%s1 + $0x10] sm:$0xff]
    %v19 = vld [vmem:[%s1 + $0x18] sm:$0xff]
    %v20 = vld [vmem:[%s1 + $0x20] sm:$0xff]
    %v21 = vld [vmem:[%s1 + $0x28] sm:$0xff]
    %v22 = vld [vmem:[%s1 + $0x30] sm:$0xff]
    %v23 = vld [vmem:[%s1 + $0x38] sm:$0xff]
    %v24 = vld [vmem:[%s1 + $0x40] sm:$0xff]
    %v25 = vld [vmem:[%s1 + $0x48] sm:$0xff]
    %v26 = vld [vmem:[%s1 + $0x50] sm:$0xff]
    %v27 = vld [vmem:[%s1 + $0x58] sm:$0xff]
    %v28 = vld [vmem:[%s1 + $0x60] sm:$0xff]
    %v29 = vld [vmem:[%s1 + $0x68] sm:$0xff]
    %v30 = vld [vmem:[%s1 + $0x70] sm:$0xff]
    %v31 = vld [vmem:[%s1 + $0x78] sm:$0xff]
    %v32 = vld [vmem:[%s1 + $0x80] sm:$0xff]
    %v33 = vld [vmem:[%s1 + $0x88] sm:$0xff]
    %v34 = vld [vmem:[%s1 + $0x90] sm:$0xff]
    %v35 = vld [vmem:[%s1 + $0x98] sm:$0xff]
    %v36 = vld [vmem:[%s1 + $0xa0] sm:$0xff]
    %v37 = vld [vmem:[%s1 + $0xa8] sm:$0xff]
    %v38 = vld [vmem:[%s1 + $0xb0] sm:$0xff]
    %v39 = vld [vmem:[%s1 + $0xb8] sm:$0xff]
    %v40 = vld [vmem:[%s1 + $0xc0] sm:$0xff]
    %v41 = vld [vmem:[%s1 + $0xc8] sm:$0xff]
    %v42 = vld [vmem:[%s1 + $0xd0] sm:$0xff]
    %v43 = vld [vmem:[%s1 + $0xd8] sm:$0xff]
    %v44 = vld [vmem:[%s1 + $0xe0] sm:$0xff]
    %v45 = vld [vmem:[%s1 + $0xe8] sm:$0xff]
    %v46 = vld [vmem:[%s1 + $0xf0] sm:$0xff]
    %v47 = vld [vmem:[%s1 + $0xf8] sm:$0xff]
    %v48 = vld [vmem:[%s2] sm:$0x1]
    %v50 = vlaneseq
    %v51 = vshrl.u32 %v50, 7
    %v52 = vsub.s32 0, %v51
    %v53 = vrot.slane %v48, %v52
    %v57 = vunpack.c.l.s4 1983009808
    %v58 = vunpack.c.0.s8 %v57
    %v59 = vlaneseq
    %v60 = vshrl.u32 %v59, 7
    %v61 = vsub.s32 %v58, %v60
    %v62 = vrot.slane %v15, %v61
    %v63 = vcombine.high %v62, %v62
    %66 = vmatprep.subr.mxu0 0.0
    %67 = vmatpush1.msra.mxu0 %v31
    %68 = vmatprep.subr.mxu0 0.0
    %69 = vmatpush1.msra.mxu0 %v30
    %70 = vmatprep.subr.mxu0 0.0
    %71 = vmatpush1.msra.mxu0 %v29
    %72 = vmatprep.subr.mxu0 0.0
    %73 = vmatpush1.msra.mxu0 %v28
    %74 = vmatprep.subr.mxu0 0.0
    %75 = vmatpush1.msra.mxu0 %v27
    %76 = vmatprep.subr.mxu0 0.0
    %77 = vmatpush1.msra.mxu0 %v26
    %78 = vmatprep.subr.mxu0 0.0
    %79 = vmatpush1.msra.mxu0 %v25
    %80 = vmatprep.subr.mxu0 0.0
    %81 = vmatpush1.msra.mxu0 %v24
    %82 = vmatprep.subr.mxu0 0.0
    %83 = vmatpush1.msra.mxu0 %v23
    %84 = vmatprep.subr.mxu0 0.0
    %85 = vmatpush1.msra.mxu0 %v22
    %86 = vmatprep.subr.mxu0 0.0
    %87 = vmatpush1.msra.mxu0 %v21
    %88 = vmatprep.subr.mxu0 0.0
    %89 = vmatpush1.msra.mxu0 %v20
    %90 = vmatprep.subr.mxu0 0.0
    %91 = vmatpush1.msra.mxu0 %v19
    %92 = vmatprep.subr.mxu0 0.0
    %93 = vmatpush1.msra.mxu0 %v18
    %94 = vmatprep.subr.mxu0 0.0
    %95 = vmatpush1.msra.mxu0 %v17
    %96 = vmatprep.subr.mxu0 0.0
    %97 = vmatpush1.msra.mxu0 %v16
    %98 = vmatprep.subr.mxu0 0.0
    %99 = vmatpush2.msra.mxu0 %v47
    %100 = vmatprep.subr.mxu0 0.0
    %101 = vmatpush2.msra.mxu0 %v46
    %102 = vmatprep.subr.mxu0 0.0
    %103 = vmatpush2.msra.mxu0 %v45
    %104 = vmatprep.subr.mxu0 0.0
    %105 = vmatpush2.msra.mxu0 %v44
    %106 = vmatprep.subr.mxu0 0.0
    %107 = vmatpush2.msra.mxu0 %v43
    %108 = vmatprep.subr.mxu0 0.0
    %109 = vmatpush2.msra.mxu0 %v42
    %110 = vmatprep.subr.mxu0 0.0
    %111 = vmatpush2.msra.mxu0 %v41
    %112 = vmatprep.subr.mxu0 0.0
    %113 = vmatpush2.msra.mxu0 %v40
    %114 = vmatprep.subr.mxu0 0.0
    %115 = vmatpush2.msra.mxu0 %v39
    %116 = vmatprep.subr.mxu0 0.0
    %117 = vmatpush2.msra.mxu0 %v38
    %118 = vmatprep.subr.mxu0 0.0
    %119 = vmatpush2.msra.mxu0 %v37
    %120 = vmatprep.subr.mxu0 0.0
    %121 = vmatpush2.msra.mxu0 %v36
    %122 = vmatprep.subr.mxu0 0.0
    %123 = vmatpush2.msra.mxu0 %v35
    %124 = vmatprep.subr.mxu0 0.0
    %125 = vmatpush2.msra.mxu0 %v34
    %126 = vmatprep.subr.mxu0 0.0
    %127 = vmatpush2.msra.mxu0 %v33
    %128 = vmatprep.subr.mxu0 0.0
    %129 = vmatpush2.msra.mxu0 %v32
    %130 = vmatprep.mubr.f32.mxu0 %v63
    %131 = vmatmul.mubr.f32.gmra.mxu0 %v62
    %v132 = vpop.f32.mrf.mxu0
    %v133 = vadd.f32 %v53, %v132
    %v134 = vpop.f32.mrf.mxu0
    %135 = vdwg.mxu0
    %136 = vst [vmem:[#allocation2] sm:$0x3] %v133
    // Predicated region
    $region14: #{transformer_classifier.9} parent=1 // pred_check
      _
    $region15: #{transformer_classifier.9} parent=1 // pred_check_branch
      %138 = sbr.rel (0) target = $region17
    $region16: #{transformer_classifier.9} parent=1 // pred_region
      %s140 = ssub.s32 32, 32
      %141 = vsyncadd [#allocation3], %s140
      %s143 = sshll.u32 [#allocation2], 4
      %s144 = int_to_ptr.vmem [resolvable:$true] %s143
      %146 = dma.vmem_to_hbm [thread:$0]  %s144, 32, %s3, [#allocation3]
    $region17: #{transformer_classifier.9} parent=1 // pred_fallthru
      _
    // Predicated region
    $region18: #{transformer_classifier.9} parent=1 // pred_check
      _
    $region19: #{transformer_classifier.9} parent=1 // pred_check_branch
      %148 = sbr.rel (0) target = $region21
    $region20: #{transformer_classifier.9} parent=1 // pred_region
      %149 = dma.done [#allocation3], 32
    $region21: #{transformer_classifier.9} parent=1 // pred_fallthru
      _
    %150 = vsyncpa [#allocation3], 1

// kernel: transformer_classifier.6
$region0: #{transformer_classifier.6}
  #allocation0 [shape = 'u32[]', space=smem, size = 0x4, offset = 0x4, fixed_abs, tag = 'smem constant byte address 0x4 - core index']
  #allocation1 [shape = 'u32[144,128]{1,0:T(1,128)}', space=vmem, size = 0x12000, scoped, tag = 'internal scratch']
  %s0 = inlined_call_operand.vmem [shape: f32[16,32], index: 0, kind: input, shape index: {}]
  %s1 = inlined_call_operand.vmem [shape: bf16[32,2048], index: 1, kind: input, shape index: {}]
  %s2 = inlined_call_operand.vmem [shape: f32[1,2048], index: 2, kind: input, shape index: {}]
  %s3 = inlined_call_operand.vmem [shape: bf16[2048,32], index: 3, kind: input, shape index: {}]
  %s4 = inlined_call_operand.vmem [shape: f32[1,32], index: 4, kind: input, shape index: {}]
  %s5 = inlined_call_operand.vmem [shape: f32[1,32], index: 5, kind: input, shape index: {}]
  %s6 = inlined_call_operand.vmem [shape: f32[1,32], index: 6, kind: input, shape index: {}]
  %s7 = inlined_call_operand.vmem [shape: f32[16,32], index: 7, kind: output, shape index: {}]
  %s8 = sld [smem:[#allocation0]]
  $region61: #{transformer_classifier.6} parent=0
    _
  %s10 = ssub.s32 1, %s8
  %s11 = scalar_select 0, %s10, %s8
  loop: start=0, step=1, limit=4
  $region2: #{transformer_classifier.6} parent=0 // loop_pre_header
    _
  $region3: #{transformer_classifier.6} parent=0 // loop_header
    %s13 = sphi 0, %s17
    %p14 = scmp.ge.s32.totalorder %s13, 4
    %s23 = sphi 0, %s25
    %s26 = sphi 0, %s23
    %s27 = sphi 0, %s26
    %s43 = sphi 0, %s27
    %s47 = sphi 0, %s47
    %s49 = sphi 0, %s47
    %s50 = sphi 0, %s49
    %s64 = sphi 0, %s50
    %s68 = sphi 0, %s68
    %s70 = sphi 0, %s68
    %s71 = sphi 0, %s70
    %s85 = sphi 0, %s71
    %s89 = sphi 0, %s89
    %s91 = sphi 0, %s89
    %s92 = sphi 0, %s91
    %s106 = sphi 0, %s92
    %s110 = sphi 0, %s110
    %s112 = sphi 0, %s110
    %s113 = sphi 0, %s112
    %s127 = sphi 0, %s113
    %s131 = sphi 0, %s131
    %s133 = sphi 0, %s131
    %s134 = sphi 0, %s133
    %s148 = sphi 0, %s134
    %s152 = sphi 0, %s152
    %s154 = sphi 0, %s152
    %s155 = sphi 0, %s154
    %s169 = sphi 0, %s155
    %s175 = sphi 0, %s177
    %s178 = sphi 0, %s175
    %s179 = sphi 0, %s178
    %s195 = sphi 0, %s179
  $region4: #{transformer_classifier.6} parent=0 // loop_header_branch
    %16 = sbr.rel (%p14) target = $region8
  $region5: #{transformer_classifier.6} parent=0 // loop_body
    %s18 = ssub.s32 %s13, 1
    %s19 = ssub.s32 %s13, 2
    %s20 = sadd.s32 %s13, 1
    %s21 = ssub.s32 %s13, %s20
    %p22 = scmp.eq.s32.totalorder %s21, 0
    %s24 = sadd.s32 %s23, 1
    %s25 = scalar_select %p22, %s23, %s24
    %p28 = pneg %p22
    %p29 = scmp.eq.s32.totalorder %s13, 1
    %p30 = por %p28, %p29
    %p31 = scmp.ne.s32.totalorder %s23, %s26
    %p32 = scmp.eq.s32.totalorder %s13, 0
    %p33 = por %p31, %p32
    %p34 = scmp.ne.s32.totalorder %s23, %s26
    %p35 = scmp.eq.s32.totalorder %s18, 1
    %p36 = por %p34, %p35
    %p37 = scmp.ne.s32.totalorder %s26, %s27
    %p38 = scmp.eq.s32.totalorder %s18, 0
    %p39 = por %p37, %p38
    %p40 = scmp.ne.s32.totalorder %s26, %s27
    %p41 = scmp.eq.s32.totalorder %s19, 1
    %p42 = por %p40, %p41
    %p44 = scmp.ne.s32.totalorder %s27, %s43
    %p45 = scmp.eq.s32.totalorder %s19, 0
    %p46 = por %p44, %p45
    %s48 = sadd.s32 %s47, 1
    %p51 = scmp.eq.s32.totalorder %s13, 1
    %p52 = scmp.ne.s32.totalorder %s47, %s49
    %p53 = scmp.eq.s32.totalorder %s13, 0
    %p54 = por %p52, %p53
    %p55 = scmp.ne.s32.totalorder %s47, %s49
    %p56 = scmp.eq.s32.totalorder %s18, 1
    %p57 = por %p55, %p56
    %p58 = scmp.ne.s32.totalorder %s49, %s50
    %p59 = scmp.eq.s32.totalorder %s18, 0
    %p60 = por %p58, %p59
    %p61 = scmp.ne.s32.totalorder %s49, %s50
    %p62 = scmp.eq.s32.totalorder %s19, 1
    %p63 = por %p61, %p62
    %p65 = scmp.ne.s32.totalorder %s50, %s64
    %p66 = scmp.eq.s32.totalorder %s19, 0
    %p67 = por %p65, %p66
    %s69 = sadd.s32 %s68, 1
    %p72 = scmp.eq.s32.totalorder %s13, 1
    %p73 = scmp.ne.s32.totalorder %s68, %s70
    %p74 = scmp.eq.s32.totalorder %s13, 0
    %p75 = por %p73, %p74
    %p76 = scmp.ne.s32.totalorder %s68, %s70
    %p77 = scmp.eq.s32.totalorder %s18, 1
    %p78 = por %p76, %p77
    %p79 = scmp.ne.s32.totalorder %s70, %s71
    %p80 = scmp.eq.s32.totalorder %s18, 0
    %p81 = por %p79, %p80
    %p82 = scmp.ne.s32.totalorder %s70, %s71
    %p83 = scmp.eq.s32.totalorder %s19, 1
    %p84 = por %p82, %p83
    %p86 = scmp.ne.s32.totalorder %s71, %s85
    %p87 = scmp.eq.s32.totalorder %s19, 0
    %p88 = por %p86, %p87
    %s90 = sadd.s32 %s89, 1
    %p93 = scmp.eq.s32.totalorder %s13, 1
    %p94 = scmp.ne.s32.totalorder %s89, %s91
    %p95 = scmp.eq.s32.totalorder %s13, 0
    %p96 = por %p94, %p95
    %p97 = scmp.ne.s32.totalorder %s89, %s91
    %p98 = scmp.eq.s32.totalorder %s18, 1
    %p99 = por %p97, %p98
    %p100 = scmp.ne.s32.totalorder %s91, %s92
    %p101 = scmp.eq.s32.totalorder %s18, 0
    %p102 = por %p100, %p101
    %p103 = scmp.ne.s32.totalorder %s91, %s92
    %p104 = scmp.eq.s32.totalorder %s19, 1
    %p105 = por %p103, %p104
    %p107 = scmp.ne.s32.totalorder %s92, %s106
    %p108 = scmp.eq.s32.totalorder %s19, 0
    %p109 = por %p107, %p108
    %s111 = sadd.s32 %s110, 1
    %p114 = scmp.eq.s32.totalorder %s13, 1
    %p115 = scmp.ne.s32.totalorder %s110, %s112
    %p116 = scmp.eq.s32.totalorder %s13, 0
    %p117 = por %p115, %p116
    %p118 = scmp.ne.s32.totalorder %s110, %s112
    %p119 = scmp.eq.s32.totalorder %s18, 1
    %p120 = por %p118, %p119
    %p121 = scmp.ne.s32.totalorder %s112, %s113
    %p122 = scmp.eq.s32.totalorder %s18, 0
    %p123 = por %p121, %p122
    %p124 = scmp.ne.s32.totalorder %s112, %s113
    %p125 = scmp.eq.s32.totalorder %s19, 1
    %p126 = por %p124, %p125
    %p128 = scmp.ne.s32.totalorder %s113, %s127
    %p129 = scmp.eq.s32.totalorder %s19, 0
    %p130 = por %p128, %p129
    %s132 = sadd.s32 %s131, 1
    %p135 = scmp.eq.s32.totalorder %s13, 1
    %p136 = scmp.ne.s32.totalorder %s131, %s133
    %p137 = scmp.eq.s32.totalorder %s13, 0
    %p138 = por %p136, %p137
    %p139 = scmp.ne.s32.totalorder %s131, %s133
    %p140 = scmp.eq.s32.totalorder %s18, 1
    %p141 = por %p139, %p140
    %p142 = scmp.ne.s32.totalorder %s133, %s134
    %p143 = scmp.eq.s32.totalorder %s18, 0
    %p144 = por %p142, %p143
    %p145 = scmp.ne.s32.totalorder %s133, %s134
    %p146 = scmp.eq.s32.totalorder %s19, 1
    %p147 = por %p145, %p146
    %p149 = scmp.ne.s32.totalorder %s134, %s148
    %p150 = scmp.eq.s32.totalorder %s19, 0
    %p151 = por %p149, %p150
    %s153 = sadd.s32 %s152, 1
    %p156 = scmp.eq.s32.totalorder %s13, 1
    %p157 = scmp.ne.s32.totalorder %s152, %s154
    %p158 = scmp.eq.s32.totalorder %s13, 0
    %p159 = por %p157, %p158
    %p160 = scmp.ne.s32.totalorder %s152, %s154
    %p161 = scmp.eq.s32.totalorder %s18, 1
    %p162 = por %p160, %p161
    %p163 = scmp.ne.s32.totalorder %s154, %s155
    %p164 = scmp.eq.s32.totalorder %s18, 0
    %p165 = por %p163, %p164
    %p166 = scmp.ne.s32.totalorder %s154, %s155
    %p167 = scmp.eq.s32.totalorder %s19, 1
    %p168 = por %p166, %p167
    %p170 = scmp.ne.s32.totalorder %s155, %s169
    %p171 = scmp.eq.s32.totalorder %s19, 0
    %p172 = por %p170, %p171
    %s173 = ssub.s32 %s13, %s20
    %p174 = scmp.eq.s32.totalorder %s173, 0
    %s176 = sadd.s32 %s175, 1
    %s177 = scalar_select %p174, %s175, %s176
    %p180 = pneg %p174
    %p181 = scmp.eq.s32.totalorder %s13, 1
    %p182 = por %p180, %p181
    %p183 = scmp.ne.s32.totalorder %s175, %s178
    %p184 = scmp.eq.s32.totalorder %s13, 0
    %p185 = por %p183, %p184
    %p186 = scmp.ne.s32.totalorder %s175, %s178
    %p187 = scmp.eq.s32.totalorder %s18, 1
    %p188 = por %p186, %p187
    %p189 = scmp.ne.s32.totalorder %s178, %s179
    %p190 = scmp.eq.s32.totalorder %s18, 0
    %p191 = por %p189, %p190
    %p192 = scmp.ne.s32.totalorder %s178, %s179
    %p193 = scmp.eq.s32.totalorder %s19, 1
    %p194 = por %p192, %p193
    %p196 = scmp.ne.s32.totalorder %s179, %s195
    %p197 = scmp.eq.s32.totalorder %s19, 0
    %p198 = por %p196, %p197
    %p199 = scmp.le.s32.totalorder 1, %s13
    %p200 = scmp.lt.s32.totalorder %s13, 3
    %p201 = pnand %p199, %p200
    %p202 = pneg %p201
    // Predicated region
    $region9: #{transformer_classifier.6} parent=5 // pred_check
      _
    $region10: #{transformer_classifier.6} parent=5 // pred_check_branch
      %204 = sbr.rel (%p201) target = $region12
    $region11: #{transformer_classifier.6} parent=5 // pred_region
      %s205 = ssub.s32 %s13, 1
      // Predicated region
      $region13: #{transformer_classifier.6} parent=11 // pred_check
        %p206 = pneg %p60
      $region14: #{transformer_classifier.6} parent=11 // pred_check_branch
        %208 = sbr.rel (%p206) target = $region16
      $region15: #{transformer_classifier.6} parent=11 // pred_region
        _
      $region16: #{transformer_classifier.6} parent=11 // pred_fallthru
        _
      // Predicated region
      $region17: #{transformer_classifier.6} parent=11 // pred_check
        %p209 = pneg %p81
      $region18: #{transformer_classifier.6} parent=11 // pred_check_branch
        %211 = sbr.rel (%p209) target = $region20
      $region19: #{transformer_classifier.6} parent=11 // pred_region
        _
      $region20: #{transformer_classifier.6} parent=11 // pred_fallthru
        _
      // Predicated region
      $region21: #{transformer_classifier.6} parent=11 // pred_check
        %p212 = pneg %p102
      $region22: #{transformer_classifier.6} parent=11 // pred_check_branch
        %214 = sbr.rel (%p212) target = $region24
      $region23: #{transformer_classifier.6} parent=11 // pred_region
        _
      $region24: #{transformer_classifier.6} parent=11 // pred_fallthru
        _
      // Predicated region
      $region25: #{transformer_classifier.6} parent=11 // pred_check
        %p215 = pneg %p123
      $region26: #{transformer_classifier.6} parent=11 // pred_check_branch
        %217 = sbr.rel (%p215) target = $region28
      $region27: #{transformer_classifier.6} parent=11 // pred_region
        _
      $region28: #{transformer_classifier.6} parent=11 // pred_fallthru
        _
      // Predicated region
      $region29: #{transformer_classifier.6} parent=11 // pred_check
        %p218 = pneg %p144
      $region30: #{transformer_classifier.6} parent=11 // pred_check_branch
        %220 = sbr.rel (%p218) target = $region32
      $region31: #{transformer_classifier.6} parent=11 // pred_region
        _
      $region32: #{transformer_classifier.6} parent=11 // pred_fallthru
        _
      // Predicated region
      $region33: #{transformer_classifier.6} parent=11 // pred_check
        %p221 = pneg %p165
      $region34: #{transformer_classifier.6} parent=11 // pred_check_branch
        %223 = sbr.rel (%p221) target = $region36
      $region35: #{transformer_classifier.6} parent=11 // pred_region
        _
      $region36: #{transformer_classifier.6} parent=11 // pred_fallthru
        _
    $region12: #{transformer_classifier.6} parent=5 // pred_fallthru
      _
    %p224 = scmp.lt.s32.totalorder %s13, 2
    // Predicated region
    $region37: #{transformer_classifier.6} parent=5 // pred_check
      %p225 = pneg %p224
    $region38: #{transformer_classifier.6} parent=5 // pred_check_branch
      %227 = sbr.rel (%p225) target = $region40
    $region39: #{transformer_classifier.6} parent=5 // pred_region
      // Predicated region
      $region41: #{transformer_classifier.6} parent=39 // pred_check
        %p228 = pneg %p33
      $region42: #{transformer_classifier.6} parent=39 // pred_check_branch
        %230 = sbr.rel (%p228) target = $region44
      $region43: #{transformer_classifier.6} parent=39 // pred_region
        %p231 = scmp.lt.s32.totalorder %s13, 1
        %s232 = scalar_select %p231, %s13, 1
        %s233 = smul.addr %s232, 8
        %s234 = scalar_lea.vmem %s0, %s233
      $region44: #{transformer_classifier.6} parent=39 // pred_fallthru
        _
    $region40: #{transformer_classifier.6} parent=5 // pred_fallthru
      _
    %p235 = scmp.le.s32.totalorder 1, %s13
    %p236 = scmp.lt.s32.totalorder %s13, 3
    %p237 = pnand %p235, %p236
    %p238 = pneg %p237
    // Predicated region
    $region45: #{transformer_classifier.6} parent=5 // pred_check
      _
    $region46: #{transformer_classifier.6} parent=5 // pred_check_branch
      %240 = sbr.rel (%p237) target = $region48
    $region47: #{transformer_classifier.6} parent=5 // pred_region
      %s241 = ssub.s32 %s13, 1
      %p242 = scmp.lt.s32.totalorder %s18, 1
      %s243 = scalar_select %p242, %s18, 1
      %s244 = smul.addr %s243, 8
      %s245 = scalar_lea.vmem %s0, %s244
      %p246 = pneg %p39
      %p247 = pneg %p36
      %p248 = pneg %p60
      %p249 = pneg %p57
      %p250 = pneg %p81
      %p251 = pneg %p78
      %p252 = pneg %p102
      %p253 = pneg %p99
      %p254 = pneg %p123
      %p255 = pneg %p120
      %p256 = pneg %p144
      %p257 = pneg %p141
      %p258 = pneg %p165
      %p259 = pneg %p162
      %p260 = pneg %p191
      %p261 = pneg %p188
      %p262 = scmp.lt.s32.totalorder %s18, 1
      %s263 = scalar_select %p262, %s18, 1
      %s264 = smul.addr %s263, 8
      %s265 = scalar_lea.vmem %s7, %s264
      %p266 = scmp.lt.s32.totalorder %s18, 1
      %s267 = scalar_select %p266, %s18, 1
      %s268 = smul.addr %s267, 8
      %s269 = scalar_lea.vmem %s0, %s268
      %p270 = scmp.lt.s32.totalorder %s18, 1
      %s271 = scalar_select %p270, %s18, 1
      %s272 = smul.addr %s271, 8
      %s273 = scalar_lea.vmem %s7, %s272
      %v275 = vld [vmem:[%s269] sm:$0xff]
      %v276 = vpack.c.bf16 %v275, %v275
      %v277 = vld [vmem:[%s1] sm:$0xff]
      %v278 = vld [vmem:[%s1 + $0x8] sm:$0xff]
      %v279 = vld [vmem:[%s1 + $0x10] sm:$0xff]
      %v280 = vld [vmem:[%s1 + $0x18] sm:$0xff]
      %v281 = vld [vmem:[%s1 + $0x20] sm:$0xff]
      %v282 = vld [vmem:[%s1 + $0x28] sm:$0xff]
      %v283 = vld [vmem:[%s1 + $0x30] sm:$0xff]
      %v284 = vld [vmem:[%s1 + $0x38] sm:$0xff]
      %v285 = vld [vmem:[%s1 + $0x40] sm:$0xff]
      %v286 = vld [vmem:[%s1 + $0x48] sm:$0xff]
      %v287 = vld [vmem:[%s1 + $0x50] sm:$0xff]
      %v288 = vld [vmem:[%s1 + $0x58] sm:$0xff]
      %v289 = vld [vmem:[%s1 + $0x60] sm:$0xff]
      %v290 = vld [vmem:[%s1 + $0x68] sm:$0xff]
      %v291 = vld [vmem:[%s1 + $0x70] sm:$0xff]
      %v292 = vld [vmem:[%s1 + $0x78] sm:$0xff]
      %v293 = vld [vmem:[%s1 + $0x80] sm:$0xff]
      %v294 = vld [vmem:[%s1 + $0x88] sm:$0xff]
      %v295 = vld [vmem:[%s1 + $0x90] sm:$0xff]
      %v296 = vld [vmem:[%s1 + $0x98] sm:$0xff]
      %v297 = vld [vmem:[%s1 + $0xa0] sm:$0xff]
      %v298 = vld [vmem:[%s1 + $0xa8] sm:$0xff]
      %v299 = vld [vmem:[%s1 + $0xb0] sm:$0xff]
      %v300 = vld [vmem:[%s1 + $0xb8] sm:$0xff]
      %v301 = vld [vmem:[%s1 + $0xc0] sm:$0xff]
      %v302 = vld [vmem:[%s1 + $0xc8] sm:$0xff]
      %v303 = vld [vmem:[%s1 + $0xd0] sm:$0xff]
      %v304 = vld [vmem:[%s1 + $0xd8] sm:$0xff]
      %v305 = vld [vmem:[%s1 + $0xe0] sm:$0xff]
      %v306 = vld [vmem:[%s1 + $0xe8] sm:$0xff]
      %v307 = vld [vmem:[%s1 + $0xf0] sm:$0xff]
      %v308 = vld [vmem:[%s1 + $0xf8] sm:$0xff]
      %v309 = vld [vmem:[%s2] sm:$0xff]
      %v310 = vld [vmem:[%s2 + $0x8] sm:$0xff]
      %v313 = vlaneseq
      %v314 = vshrl.u32 %v313, 7
      %v315 = vsub.s32 0, %v314
      %v316 = vrot.slane %v309, %v315
      %v317 = vlaneseq
      %v318 = vshrl.u32 %v317, 7
      %v319 = vsub.s32 1, %v318
      %v320 = vrot.slane %v309, %v319
      %v321 = vlaneseq
      %v322 = vshrl.u32 %v321, 7
      %v323 = vsub.s32 2, %v322
      %v324 = vrot.slane %v309, %v323
      %v325 = vlaneseq
      %v326 = vshrl.u32 %v325, 7
      %v327 = vsub.s32 3, %v326
      %v328 = vrot.slane %v309, %v327
      %v329 = vlaneseq
      %v330 = vshrl.u32 %v329, 7
      %v331 = vsub.s32 4, %v330
      %v332 = vrot.slane %v309, %v331
      %v333 = vlaneseq
      %v334 = vshrl.u32 %v333, 7
      %v335 = vsub.s32 5, %v334
      %v336 = vrot.slane %v309, %v335
      %v337 = vlaneseq
      %v338 = vshrl.u32 %v337, 7
      %v339 = vsub.s32 6, %v338
      %v340 = vrot.slane %v309, %v339
      %v341 = vlaneseq
      %v342 = vshrl.u32 %v341, 7
      %v343 = vsub.s32 7, %v342
      %v344 = vrot.slane %v309, %v343
      %v345 = vlaneseq
      %v346 = vshrl.u32 %v345, 7
      %v347 = vsub.s32 0, %v346
      %v348 = vrot.slane %v310, %v347
      %v349 = vlaneseq
      %v350 = vshrl.u32 %v349, 7
      %v351 = vsub.s32 1, %v350
      %v352 = vrot.slane %v310, %v351
      %v353 = vlaneseq
      %v354 = vshrl.u32 %v353, 7
      %v355 = vsub.s32 2, %v354
      %v356 = vrot.slane %v310, %v355
      %v357 = vlaneseq
      %v358 = vshrl.u32 %v357, 7
      %v359 = vsub.s32 3, %v358
      %v360 = vrot.slane %v310, %v359
      %v361 = vlaneseq
      %v362 = vshrl.u32 %v361, 7
      %v363 = vsub.s32 4, %v362
      %v364 = vrot.slane %v310, %v363
      %v365 = vlaneseq
      %v366 = vshrl.u32 %v365, 7
      %v367 = vsub.s32 5, %v366
      %v368 = vrot.slane %v310, %v367
      %v369 = vlaneseq
      %v370 = vshrl.u32 %v369, 7
      %v371 = vsub.s32 6, %v370
      %v372 = vrot.slane %v310, %v371
      %v373 = vlaneseq
      %v374 = vshrl.u32 %v373, 7
      %v375 = vsub.s32 7, %v374
      %v376 = vrot.slane %v310, %v375
      %v425 = vunpack.c.l.b16 %v277
      %v426 = vunpack.c.h.b16 %v277
      %v427 = vunpack.c.l.b16 %v278
      %v428 = vunpack.c.h.b16 %v278
      %v429 = vunpack.c.l.b16 %v279
      %v430 = vunpack.c.h.b16 %v279
      %v431 = vunpack.c.l.b16 %v280
      %v432 = vunpack.c.h.b16 %v280
      %v433 = vunpack.c.l.b16 %v281
      %v434 = vunpack.c.h.b16 %v281
      %v435 = vunpack.c.l.b16 %v282
      %v436 = vunpack.c.h.b16 %v282
      %v437 = vunpack.c.l.b16 %v283
      %v438 = vunpack.c.h.b16 %v283
      %v439 = vunpack.c.l.b16 %v284
      %v440 = vunpack.c.h.b16 %v284
      %v441 = vunpack.c.l.b16 %v285
      %v442 = vunpack.c.h.b16 %v285
      %v443 = vunpack.c.l.b16 %v286
      %v444 = vunpack.c.h.b16 %v286
      %v445 = vunpack.c.l.b16 %v287
      %v446 = vunpack.c.h.b16 %v287
      %v447 = vunpack.c.l.b16 %v288
      %v448 = vunpack.c.h.b16 %v288
      %v449 = vunpack.c.l.b16 %v289
      %v450 = vunpack.c.h.b16 %v289
      %v451 = vunpack.c.l.b16 %v290
      %v452 = vunpack.c.h.b16 %v290
      %v453 = vunpack.c.l.b16 %v291
      %v454 = vunpack.c.h.b16 %v291
      %v455 = vunpack.c.l.b16 %v292
      %v456 = vunpack.c.h.b16 %v292
      %v457 = vunpack.c.l.b16 %v293
      %v458 = vunpack.c.h.b16 %v293
      %v459 = vunpack.c.l.b16 %v294
      %v460 = vunpack.c.h.b16 %v294
      %v461 = vunpack.c.l.b16 %v295
      %v462 = vunpack.c.h.b16 %v295
      %v463 = vunpack.c.l.b16 %v296
      %v464 = vunpack.c.h.b16 %v296
      %v465 = vunpack.c.l.b16 %v297
      %v466 = vunpack.c.h.b16 %v297
      %v467 = vunpack.c.l.b16 %v298
      %v468 = vunpack.c.h.b16 %v298
      %v469 = vunpack.c.l.b16 %v299
      %v470 = vunpack.c.h.b16 %v299
      %v471 = vunpack.c.l.b16 %v300
      %v472 = vunpack.c.h.b16 %v300
      %v473 = vunpack.c.l.b16 %v301
      %v474 = vunpack.c.h.b16 %v301
      %v475 = vunpack.c.l.b16 %v302
      %v476 = vunpack.c.h.b16 %v302
      %v477 = vunpack.c.l.b16 %v303
      %v478 = vunpack.c.h.b16 %v303
      %v479 = vunpack.c.l.b16 %v304
      %v480 = vunpack.c.h.b16 %v304
      %v481 = vunpack.c.l.b16 %v305
      %v482 = vunpack.c.h.b16 %v305
      %v483 = vunpack.c.l.b16 %v306
      %v484 = vunpack.c.h.b16 %v306
      %v485 = vunpack.c.l.b16 %v307
      %v486 = vunpack.c.h.b16 %v307
      %v487 = vunpack.c.l.b16 %v308
      %v488 = vunpack.c.h.b16 %v308
      %v489 = vpack.c.b16 %v441, %v425
      %v490 = vpack.c.b16 %v442, %v426
      %v491 = vpack.c.b16 %v443, %v427
      %v492 = vpack.c.b16 %v444, %v428
      %v493 = vpack.c.b16 %v445, %v429
      %v494 = vpack.c.b16 %v446, %v430
      %v495 = vpack.c.b16 %v447, %v431
      %v496 = vpack.c.b16 %v448, %v432
      %v497 = vpack.c.b16 %v449, %v433
      %v498 = vpack.c.b16 %v450, %v434
      %v499 = vpack.c.b16 %v451, %v435
      %v500 = vpack.c.b16 %v452, %v436
      %v501 = vpack.c.b16 %v453, %v437
      %v502 = vpack.c.b16 %v454, %v438
      %v503 = vpack.c.b16 %v455, %v439
      %v504 = vpack.c.b16 %v456, %v440
      %v505 = vpack.c.b16 %v473, %v457
      %v506 = vpack.c.b16 %v474, %v458
      %v507 = vpack.c.b16 %v475, %v459
      %v508 = vpack.c.b16 %v476, %v460
      %v509 = vpack.c.b16 %v477, %v461
      %v510 = vpack.c.b16 %v478, %v462
      %v511 = vpack.c.b16 %v479, %v463
      %v512 = vpack.c.b16 %v480, %v464
      %v513 = vpack.c.b16 %v481, %v465
      %v514 = vpack.c.b16 %v482, %v466
      %v515 = vpack.c.b16 %v483, %v467
      %v516 = vpack.c.b16 %v484, %v468
      %v517 = vpack.c.b16 %v485, %v469
      %v518 = vpack.c.b16 %v486, %v470
      %v519 = vpack.c.b16 %v487, %v471
      %v520 = vpack.c.b16 %v488, %v472
      %vm553 = vcmask 261120
      %v555 = vsel %vm553, %v276, 0
      %557 = vmatprep.subr.bf16.mxu0 0
      %558 = vmatpush1.bf16.msra.mxu0 0
      %559 = vmatprep.subr.bf16.mxu0 0
      %560 = vmatpush1.bf16.msra.mxu0 0
      %561 = vmatprep.subr.bf16.mxu0 0
      %562 = vmatpush1.bf16.msra.mxu0 0
      %563 = vmatprep.subr.bf16.mxu0 0
      %564 = vmatpush1.bf16.msra.mxu0 0
      %565 = vmatprep.subr.bf16.mxu0 0
      %566 = vmatpush1.bf16.msra.mxu0 0
      %567 = vmatprep.subr.bf16.mxu0 0
      %568 = vmatpush1.bf16.msra.mxu0 0
      %569 = vmatprep.subr.bf16.mxu0 %v506
      %570 = vmatpush1.bf16.msra.mxu0 %v505
      %571 = vmatprep.subr.bf16.mxu0 %v490
      %572 = vmatpush1.bf16.msra.mxu0 %v489
      %573 = vmatprep.subr.bf16.mxu0 0
      %574 = vmatpush2.bf16.msra.mxu0 0
      %575 = vmatprep.subr.bf16.mxu0 0
      %576 = vmatpush2.bf16.msra.mxu0 0
      %577 = vmatprep.subr.bf16.mxu0 0
      %578 = vmatpush2.bf16.msra.mxu0 0
      %579 = vmatprep.subr.bf16.mxu0 0
      %580 = vmatpush2.bf16.msra.mxu0 0
      %581 = vmatprep.subr.bf16.mxu0 0
      %582 = vmatpush2.bf16.msra.mxu0 0
      %583 = vmatprep.subr.bf16.mxu0 0
      %584 = vmatpush2.bf16.msra.mxu0 0
      %585 = vmatprep.subr.bf16.mxu0 0
      %586 = vmatpush2.bf16.msra.mxu0 0
      %587 = vmatprep.subr.bf16.mxu0 0
      %588 = vmatpush2.bf16.msra.mxu0 0
      %589 = vmatprep.mubr.bf16.mxu0 0
      %590 = vmatmul.mubr.bf16.gmra.mxu0 %v555
      %v591 = vpop.f32.mrf.mxu0
      %v592 = vadd.f32 %v316, %v591
      %v593 = vpop.f32.mrf.mxu0
      %v594 = vadd.f32 %v320, %v593
      %v595 = vpop.f32.mrf.mxu0
      %v596 = vpop.f32.mrf.mxu0
      %597 = vdwg.mxu0
      %598 = vmatprep.subr.bf16.mxu0 0
      %599 = vmatpush1.bf16.msra.mxu0 0
      %600 = vmatprep.subr.bf16.mxu0 0
      %601 = vmatpush1.bf16.msra.mxu0 0
      %602 = vmatprep.subr.bf16.mxu0 0
      %603 = vmatpush1.bf16.msra.mxu0 0
      %604 = vmatprep.subr.bf16.mxu0 0
      %605 = vmatpush1.bf16.msra.mxu0 0
      %606 = vmatprep.subr.bf16.mxu0 0
      %607 = vmatpush1.bf16.msra.mxu0 0
      %608 = vmatprep.subr.bf16.mxu0 0
      %609 = vmatpush1.bf16.msra.mxu0 0
      %610 = vmatprep.subr.bf16.mxu0 %v508
      %611 = vmatpush1.bf16.msra.mxu0 %v507
      %612 = vmatprep.subr.bf16.mxu0 %v492
      %613 = vmatpush1.bf16.msra.mxu0 %v491
      %614 = vmatprep.subr.bf16.mxu0 0
      %615 = vmatpush2.bf16.msra.mxu0 0
      %616 = vmatprep.subr.bf16.mxu0 0
      %617 = vmatpush2.bf16.msra.mxu0 0
      %618 = vmatprep.subr.bf16.mxu0 0
      %619 = vmatpush2.bf16.msra.mxu0 0
      %620 = vmatprep.subr.bf16.mxu0 0
      %621 = vmatpush2.bf16.msra.mxu0 0
      %622 = vmatprep.subr.bf16.mxu0 0
      %623 = vmatpush2.bf16.msra.mxu0 0
      %624 = vmatprep.subr.bf16.mxu0 0
      %625 = vmatpush2.bf16.msra.mxu0 0
      %626 = vmatprep.subr.bf16.mxu0 0
      %627 = vmatpush2.bf16.msra.mxu0 0
      %628 = vmatprep.subr.bf16.mxu0 0
      %629 = vmatpush2.bf16.msra.mxu0 0
      %630 = vmatprep.mubr.bf16.mxu0 0
      %631 = vmatmul.mubr.bf16.gmra.mxu0 %v555
      %v632 = vpop.f32.mrf.mxu0
      %v633 = vadd.f32 %v324, %v632
      %v634 = vpop.f32.mrf.mxu0
      %v635 = vadd.f32 %v328, %v634
      %v636 = vpop.f32.mrf.mxu0
      %v637 = vpop.f32.mrf.mxu0
      %638 = vdwg.mxu0
      %639 = vmatprep.subr.bf16.mxu0 0
      %640 = vmatpush1.bf16.msra.mxu0 0
      %641 = vmatprep.subr.bf16.mxu0 0
      %642 = vmatpush1.bf16.msra.mxu0 0
      %643 = vmatprep.subr.bf16.mxu0 0
      %644 = vmatpush1.bf16.msra.mxu0 0
      %645 = vmatprep.subr.bf16.mxu0 0
      %646 = vmatpush1.bf16.msra.mxu0 0
      %647 = vmatprep.subr.bf16.mxu0 0
      %648 = vmatpush1.bf16.msra.mxu0 0
      %649 = vmatprep.subr.bf16.mxu0 0
      %650 = vmatpush1.bf16.msra.mxu0 0
      %651 = vmatprep.subr.bf16.mxu0 %v510
      %652 = vmatpush1.bf16.msra.mxu0 %v509
      %653 = vmatprep.subr.bf16.mxu0 %v494
      %654 = vmatpush1.bf16.msra.mxu0 %v493
      %655 = vmatprep.subr.bf16.mxu0 0
      %656 = vmatpush2.bf16.msra.mxu0 0
      %657 = vmatprep.subr.bf16.mxu0 0
      %658 = vmatpush2.bf16.msra.mxu0 0
      %659 = vmatprep.subr.bf16.mxu0 0
      %660 = vmatpush2.bf16.msra.mxu0 0
      %661 = vmatprep.subr.bf16.mxu0 0
      %662 = vmatpush2.bf16.msra.mxu0 0
      %663 = vmatprep.subr.bf16.mxu0 0
      %664 = vmatpush2.bf16.msra.mxu0 0
      %665 = vmatprep.subr.bf16.mxu0 0
      %666 = vmatpush2.bf16.msra.mxu0 0
      %667 = vmatprep.subr.bf16.mxu0 0
      %668 = vmatpush2.bf16.msra.mxu0 0
      %669 = vmatprep.subr.bf16.mxu0 0
      %670 = vmatpush2.bf16.msra.mxu0 0
      %671 = vmatprep.mubr.bf16.mxu0 0
      %672 = vmatmul.mubr.bf16.gmra.mxu0 %v555
      %v673 = vpop.f32.mrf.mxu0
      %v674 = vadd.f32 %v332, %v673
      %v675 = vpop.f32.mrf.mxu0
      %v676 = vadd.f32 %v336, %v675
      %v677 = vpop.f32.mrf.mxu0
      %v678 = vpop.f32.mrf.mxu0
      %679 = vdwg.mxu0
      %680 = vmatprep.subr.bf16.mxu0 0
      %681 = vmatpush1.bf16.msra.mxu0 0
      %682 = vmatprep.subr.bf16.mxu0 0
      %683 = vmatpush1.bf16.msra.mxu0 0
      %684 = vmatprep.subr.bf16.mxu0 0
      %685 = vmatpush1.bf16.msra.mxu0 0
      %686 = vmatprep.subr.bf16.mxu0 0
      %687 = vmatpush1.bf16.msra.mxu0 0
      %688 = vmatprep.subr.bf16.mxu0 0
      %689 = vmatpush1.bf16.msra.mxu0 0
      %690 = vmatprep.subr.bf16.mxu0 0
      %691 = vmatpush1.bf16.msra.mxu0 0
      %692 = vmatprep.subr.bf16.mxu0 %v512
      %693 = vmatpush1.bf16.msra.mxu0 %v511
      %694 = vmatprep.subr.bf16.mxu0 %v496
      %695 = vmatpush1.bf16.msra.mxu0 %v495
      %696 = vmatprep.subr.bf16.mxu0 0
      %697 = vmatpush2.bf16.msra.mxu0 0
      %698 = vmatprep.subr.bf16.mxu0 0
      %699 = vmatpush2.bf16.msra.mxu0 0
      %700 = vmatprep.subr.bf16.mxu0 0
      %701 = vmatpush2.bf16.msra.mxu0 0
      %702 = vmatprep.subr.bf16.mxu0 0
      %703 = vmatpush2.bf16.msra.mxu0 0
      %704 = vmatprep.subr.bf16.mxu0 0
      %705 = vmatpush2.bf16.msra.mxu0 0
      %706 = vmatprep.subr.bf16.mxu0 0
      %707 = vmatpush2.bf16.msra.mxu0 0
      %708 = vmatprep.subr.bf16.mxu0 0
      %709 = vmatpush2.bf16.msra.mxu0 0
      %710 = vmatprep.subr.bf16.mxu0 0
      %711 = vmatpush2.bf16.msra.mxu0 0
      %712 = vmatprep.mubr.bf16.mxu0 0
      %713 = vmatmul.mubr.bf16.gmra.mxu0 %v555
      %v714 = vpop.f32.mrf.mxu0
      %v715 = vadd.f32 %v340, %v714
      %v716 = vpop.f32.mrf.mxu0
      %v717 = vadd.f32 %v344, %v716
      %v718 = vpop.f32.mrf.mxu0
      %v719 = vpop.f32.mrf.mxu0
      %720 = vdwg.mxu0
      %721 = vmatprep.subr.bf16.mxu0 0
      %722 = vmatpush1.bf16.msra.mxu0 0
      %723 = vmatprep.subr.bf16.mxu0 0
      %724 = vmatpush1.bf16.msra.mxu0 0
      %725 = vmatprep.subr.bf16.mxu0 0
      %726 = vmatpush1.bf16.msra.mxu0 0
      %727 = vmatprep.subr.bf16.mxu0 0
      %728 = vmatpush1.bf16.msra.mxu0 0
      %729 = vmatprep.subr.bf16.mxu0 0
      %730 = vmatpush1.bf16.msra.mxu0 0
      %731 = vmatprep.subr.bf16.mxu0 0
      %732 = vmatpush1.bf16.msra.mxu0 0
      %733 = vmatprep.subr.bf16.mxu0 %v514
      %734 = vmatpush1.bf16.msra.mxu0 %v513
      %735 = vmatprep.subr.bf16.mxu0 %v498
      %736 = vmatpush1.bf16.msra.mxu0 %v497
      %737 = vmatprep.subr.bf16.mxu0 0
      %738 = vmatpush2.bf16.msra.mxu0 0
      %739 = vmatprep.subr.bf16.mxu0 0
      %740 = vmatpush2.bf16.msra.mxu0 0
      %741 = vmatprep.subr.bf16.mxu0 0
      %742 = vmatpush2.bf16.msra.mxu0 0
      %743 = vmatprep.subr.bf16.mxu0 0
      %744 = vmatpush2.bf16.msra.mxu0 0
      %745 = vmatprep.subr.bf16.mxu0 0
      %746 = vmatpush2.bf16.msra.mxu0 0
      %747 = vmatprep.subr.bf16.mxu0 0
      %748 = vmatpush2.bf16.msra.mxu0 0
      %749 = vmatprep.subr.bf16.mxu0 0
      %750 = vmatpush2.bf16.msra.mxu0 0
      %751 = vmatprep.subr.bf16.mxu0 0
      %752 = vmatpush2.bf16.msra.mxu0 0
      %753 = vmatprep.mubr.bf16.mxu0 0
      %754 = vmatmul.mubr.bf16.gmra.mxu0 %v555
      %v755 = vpop.f32.mrf.mxu0
      %v756 = vadd.f32 %v348, %v755
      %v757 = vpop.f32.mrf.mxu0
      %v758 = vadd.f32 %v352, %v757
      %v759 = vpop.f32.mrf.mxu0
      %v760 = vpop.f32.mrf.mxu0
      %761 = vdwg.mxu0
      %762 = vmatprep.subr.bf16.mxu0 0
      %763 = vmatpush1.bf16.msra.mxu0 0
      %764 = vmatprep.subr.bf16.mxu0 0
      %765 = vmatpush1.bf16.msra.mxu0 0
      %766 = vmatprep.subr.bf16.mxu0 0
      %767 = vmatpush1.bf16.msra.mxu0 0
      %768 = vmatprep.subr.bf16.mxu0 0
      %769 = vmatpush1.bf16.msra.mxu0 0
      %770 = vmatprep.subr.bf16.mxu0 0
      %771 = vmatpush1.bf16.msra.mxu0 0
      %772 = vmatprep.subr.bf16.mxu0 0
      %773 = vmatpush1.bf16.msra.mxu0 0
      %774 = vmatprep.subr.bf16.mxu0 %v516
      %775 = vmatpush1.bf16.msra.mxu0 %v515
      %776 = vmatprep.subr.bf16.mxu0 %v500
      %777 = vmatpush1.bf16.msra.mxu0 %v499
      %778 = vmatprep.subr.bf16.mxu0 0
      %779 = vmatpush2.bf16.msra.mxu0 0
      %780 = vmatprep.subr.bf16.mxu0 0
      %781 = vmatpush2.bf16.msra.mxu0 0
      %782 = vmatprep.subr.bf16.mxu0 0
      %783 = vmatpush2.bf16.msra.mxu0 0
      %784 = vmatprep.subr.bf16.mxu0 0
      %785 = vmatpush2.bf16.msra.mxu0 0
      %786 = vmatprep.subr.bf16.mxu0 0
      %787 = vmatpush2.bf16.msra.mxu0 0
      %788 = vmatprep.subr.bf16.mxu0 0
      %789 = vmatpush2.bf16.msra.mxu0 0
      %790 = vmatprep.subr.bf16.mxu0 0
      %791 = vmatpush2.bf16.msra.mxu0 0
      %792 = vmatprep.subr.bf16.mxu0 0
      %793 = vmatpush2.bf16.msra.mxu0 0
      %794 = vmatprep.mubr.bf16.mxu0 0
      %795 = vmatmul.mubr.bf16.gmra.mxu0 %v555
      %v796 = vpop.f32.mrf.mxu0
      %v797 = vadd.f32 %v356, %v796
      %v798 = vpop.f32.mrf.mxu0
      %v799 = vadd.f32 %v360, %v798
      %v800 = vpop.f32.mrf.mxu0
      %v801 = vpop.f32.mrf.mxu0
      %802 = vdwg.mxu0
      %803 = vmatprep.subr.bf16.mxu0 0
      %804 = vmatpush1.bf16.msra.mxu0 0
      %805 = vmatprep.subr.bf16.mxu0 0
      %806 = vmatpush1.bf16.msra.mxu0 0
      %807 = vmatprep.subr.bf16.mxu0 0
      %808 = vmatpush1.bf16.msra.mxu0 0
      %809 = vmatprep.subr.bf16.mxu0 0
      %810 = vmatpush1.bf16.msra.mxu0 0
      %811 = vmatprep.subr.bf16.mxu0 0
      %812 = vmatpush1.bf16.msra.mxu0 0
      %813 = vmatprep.subr.bf16.mxu0 0
      %814 = vmatpush1.bf16.msra.mxu0 0
      %815 = vmatprep.subr.bf16.mxu0 %v518
      %816 = vmatpush1.bf16.msra.mxu0 %v517
      %817 = vmatprep.subr.bf16.mxu0 %v502
      %818 = vmatpush1.bf16.msra.mxu0 %v501
      %819 = vmatprep.subr.bf16.mxu0 0
      %820 = vmatpush2.bf16.msra.mxu0 0
      %821 = vmatprep.subr.bf16.mxu0 0
      %822 = vmatpush2.bf16.msra.mxu0 0
      %823 = vmatprep.subr.bf16.mxu0 0
      %824 = vmatpush2.bf16.msra.mxu0 0
      %825 = vmatprep.subr.bf16.mxu0 0
      %826 = vmatpush2.bf16.msra.mxu0 0
      %827 = vmatprep.subr.bf16.mxu0 0
      %828 = vmatpush2.bf16.msra.mxu0 0
      %829 = vmatprep.subr.bf16.mxu0 0
      %830 = vmatpush2.bf16.msra.mxu0 0
      %831 = vmatprep.subr.bf16.mxu0 0
      %832 = vmatpush2.bf16.msra.mxu0 0
      %833 = vmatprep.subr.bf16.mxu0 0
      %834 = vmatpush2.bf16.msra.mxu0 0
      %835 = vmatprep.mubr.bf16.mxu0 0
      %836 = vmatmul.mubr.bf16.gmra.mxu0 %v555
      %v837 = vpop.f32.mrf.mxu0
      %v838 = vadd.f32 %v364, %v837
      %v839 = vpop.f32.mrf.mxu0
      %v840 = vadd.f32 %v368, %v839
      %v841 = vpop.f32.mrf.mxu0
      %v842 = vpop.f32.mrf.mxu0
      %843 = vdwg.mxu0
      %844 = vmatprep.subr.bf16.mxu0 0
      %845 = vmatpush1.bf16.msra.mxu0 0
      %846 = vmatprep.subr.bf16.mxu0 0
      %847 = vmatpush1.bf16.msra.mxu0 0
      %848 = vmatprep.subr.bf16.mxu0 0
      %849 = vmatpush1.bf16.msra.mxu0 0
      %850 = vmatprep.subr.bf16.mxu0 0
      %851 = vmatpush1.bf16.msra.mxu0 0
      %852 = vmatprep.subr.bf16.mxu0 0
      %853 = vmatpush1.bf16.msra.mxu0 0
      %854 = vmatprep.subr.bf16.mxu0 0
      %855 = vmatpush1.bf16.msra.mxu0 0
      %856 = vmatprep.subr.bf16.mxu0 %v520
      %857 = vmatpush1.bf16.msra.mxu0 %v519
      %858 = vmatprep.subr.bf16.mxu0 %v504
      %859 = vmatpush1.bf16.msra.mxu0 %v503
      %860 = vmatprep.subr.bf16.mxu0 0
      %861 = vmatpush2.bf16.msra.mxu0 0
      %862 = vmatprep.subr.bf16.mxu0 0
      %863 = vmatpush2.bf16.msra.mxu0 0
      %864 = vmatprep.subr.bf16.mxu0 0
      %865 = vmatpush2.bf16.msra.mxu0 0
      %866 = vmatprep.subr.bf16.mxu0 0
      %867 = vmatpush2.bf16.msra.mxu0 0
      %868 = vmatprep.subr.bf16.mxu0 0
      %869 = vmatpush2.bf16.msra.mxu0 0
      %870 = vmatprep.subr.bf16.mxu0 0
      %871 = vmatpush2.bf16.msra.mxu0 0
      %872 = vmatprep.subr.bf16.mxu0 0
      %873 = vmatpush2.bf16.msra.mxu0 0
      %874 = vmatprep.subr.bf16.mxu0 0
      %875 = vmatpush2.bf16.msra.mxu0 0
      %876 = vmatprep.mubr.bf16.mxu0 0
      %877 = vmatmul.mubr.bf16.gmra.mxu0 %v555
      %v878 = vpop.f32.mrf.mxu0
      %v879 = vadd.f32 %v372, %v878
      %v880 = vpop.f32.mrf.mxu0
      %v881 = vadd.f32 %v376, %v880
      %v882 = vpop.f32.mrf.mxu0
      %v883 = vpop.f32.mrf.mxu0
      %884 = vdwg.mxu0
      %v885 = vmax.f32 %v592, 0.0
      %v886 = vmax.f32 %v594, 0.0
      %v887 = vmax.f32 %v633, 0.0
      %v888 = vmax.f32 %v635, 0.0
      %v889 = vmax.f32 %v674, 0.0
      %v890 = vmax.f32 %v676, 0.0
      %v891 = vmax.f32 %v715, 0.0
      %v892 = vmax.f32 %v717, 0.0
      %v893 = vmax.f32 %v756, 0.0
      %v894 = vmax.f32 %v758, 0.0
      %v895 = vmax.f32 %v797, 0.0
      %v896 = vmax.f32 %v799, 0.0
      %v897 = vmax.f32 %v838, 0.0
      %v898 = vmax.f32 %v840, 0.0
      %v899 = vmax.f32 %v879, 0.0
      %v900 = vmax.f32 %v881, 0.0
      %v901 = vpack.c.bf16 %v885, %v885
      %v902 = vpack.c.bf16 %v886, %v886
      %v903 = vpack.c.bf16 %v887, %v887
      %v904 = vpack.c.bf16 %v888, %v888
      %v905 = vpack.c.bf16 %v889, %v889
      %v906 = vpack.c.bf16 %v890, %v890
      %v907 = vpack.c.bf16 %v891, %v891
      %v908 = vpack.c.bf16 %v892, %v892
      %v909 = vpack.c.bf16 %v893, %v893
      %v910 = vpack.c.bf16 %v894, %v894
      %v911 = vpack.c.bf16 %v895, %v895
      %v912 = vpack.c.bf16 %v896, %v896
      %v913 = vpack.c.bf16 %v897, %v897
      %v914 = vpack.c.bf16 %v898, %v898
      %v915 = vpack.c.bf16 %v899, %v899
      %v916 = vpack.c.bf16 %v900, %v900
      %v917 = vld [vmem:[%s3] sm:$0xf]
      %v918 = vld [vmem:[%s3 + $0x4] sm:$0xf]
      %v919 = vld [vmem:[%s3 + $0x8] sm:$0xf]
      %v920 = vld [vmem:[%s3 + $0xc] sm:$0xf]
      %v921 = vld [vmem:[%s3 + $0x10] sm:$0xf]
      %v922 = vld [vmem:[%s3 + $0x14] sm:$0xf]
      %v923 = vld [vmem:[%s3 + $0x18] sm:$0xf]
      %v924 = vld [vmem:[%s3 + $0x1c] sm:$0xf]
      %v925 = vld [vmem:[%s3 + $0x20] sm:$0xf]
      %v926 = vld [vmem:[%s3 + $0x24] sm:$0xf]
      %v927 = vld [vmem:[%s3 + $0x28] sm:$0xf]
      %v928 = vld [vmem:[%s3 + $0x2c] sm:$0xf]
      %v929 = vld [vmem:[%s3 + $0x30] sm:$0xf]
      %v930 = vld [vmem:[%s3 + $0x34] sm:$0xf]
      %v931 = vld [vmem:[%s3 + $0x38] sm:$0xf]
      %v932 = vld [vmem:[%s3 + $0x3c] sm:$0xf]
      %v933 = vld [vmem:[%s3 + $0x40] sm:$0xf]
      %v934 = vld [vmem:[%s3 + $0x44] sm:$0xf]
      %v935 = vld [vmem:[%s3 + $0x48] sm:$0xf]
      %v936 = vld [vmem:[%s3 + $0x4c] sm:$0xf]
      %v937 = vld [vmem:[%s3 + $0x50] sm:$0xf]
      %v938 = vld [vmem:[%s3 + $0x54] sm:$0xf]
      %v939 = vld [vmem:[%s3 + $0x58] sm:$0xf]
      %v940 = vld [vmem:[%s3 + $0x5c] sm:$0xf]
      %v941 = vld [vmem:[%s3 + $0x60] sm:$0xf]
      %v942 = vld [vmem:[%s3 + $0x64] sm:$0xf]
      %v943 = vld [vmem:[%s3 + $0x68] sm:$0xf]
      %v944 = vld [vmem:[%s3 + $0x6c] sm:$0xf]
      %v945 = vld [vmem:[%s3 + $0x70] sm:$0xf]
      %v946 = vld [vmem:[%s3 + $0x74] sm:$0xf]
      %v947 = vld [vmem:[%s3 + $0x78] sm:$0xf]
      %v948 = vld [vmem:[%s3 + $0x7c] sm:$0xf]
      %v949 = vld [vmem:[%s3 + $0x80] sm:$0xf]
      %v950 = vld [vmem:[%s3 + $0x84] sm:$0xf]
      %v951 = vld [vmem:[%s3 + $0x88] sm:$0xf]
      %v952 = vld [vmem:[%s3 + $0x8c] sm:$0xf]
      %v953 = vld [vmem:[%s3 + $0x90] sm:$0xf]
      %v954 = vld [vmem:[%s3 + $0x94] sm:$0xf]
      %v955 = vld [vmem:[%s3 + $0x98] sm:$0xf]
      %v956 = vld [vmem:[%s3 + $0x9c] sm:$0xf]
      %v957 = vld [vmem:[%s3 + $0xa0] sm:$0xf]
      %v958 = vld [vmem:[%s3 + $0xa4] sm:$0xf]
      %v959 = vld [vmem:[%s3 + $0xa8] sm:$0xf]
      %v960 = vld [vmem:[%s3 + $0xac] sm:$0xf]
      %v961 = vld [vmem:[%s3 + $0xb0] sm:$0xf]
      %v962 = vld [vmem:[%s3 + $0xb4] sm:$0xf]
      %v963 = vld [vmem:[%s3 + $0xb8] sm:$0xf]
      %v964 = vld [vmem:[%s3 + $0xbc] sm:$0xf]
      %v965 = vld [vmem:[%s3 + $0xc0] sm:$0xf]
      %v966 = vld [vmem:[%s3 + $0xc4] sm:$0xf]
      %v967 = vld [vmem:[%s3 + $0xc8] sm:$0xf]
      %v968 = vld [vmem:[%s3 + $0xcc] sm:$0xf]
      %v969 = vld [vmem:[%s3 + $0xd0] sm:$0xf]
      %v970 = vld [vmem:[%s3 + $0xd4] sm:$0xf]
      %v971 = vld [vmem:[%s3 + $0xd8] sm:$0xf]
      %v972 = vld [vmem:[%s3 + $0xdc] sm:$0xf]
      %v973 = vld [vmem:[%s3 + $0xe0] sm:$0xf]
      %v974 = vld [vmem:[%s3 + $0xe4] sm:$0xf]
      %v975 = vld [vmem:[%s3 + $0xe8] sm:$0xf]
      %v976 = vld [vmem:[%s3 + $0xec] sm:$0xf]
      %v977 = vld [vmem:[%s3 + $0xf0] sm:$0xf]
      %v978 = vld [vmem:[%s3 + $0xf4] sm:$0xf]
      %v979 = vld [vmem:[%s3 + $0xf8] sm:$0xf]
      %v980 = vld [vmem:[%s3 + $0xfc] sm:$0xf]
      %v981 = vld [vmem:[%s3 + $0x100] sm:$0xf]
      %v982 = vld [vmem:[%s3 + $0x104] sm:$0xf]
      %v983 = vld [vmem:[%s3 + $0x108] sm:$0xf]
      %v984 = vld [vmem:[%s3 + $0x10c] sm:$0xf]
      %v985 = vld [vmem:[%s3 + $0x110] sm:$0xf]
      %v986 = vld [vmem:[%s3 + $0x114] sm:$0xf]
      %v987 = vld [vmem:[%s3 + $0x118] sm:$0xf]
      %v988 = vld [vmem:[%s3 + $0x11c] sm:$0xf]
      %v989 = vld [vmem:[%s3 + $0x120] sm:$0xf]
      %v990 = vld [vmem:[%s3 + $0x124] sm:$0xf]
      %v991 = vld [vmem:[%s3 + $0x128] sm:$0xf]
      %v992 = vld [vmem:[%s3 + $0x12c] sm:$0xf]
      %v993 = vld [vmem:[%s3 + $0x130] sm:$0xf]
      %v994 = vld [vmem:[%s3 + $0x134] sm:$0xf]
      %v995 = vld [vmem:[%s3 + $0x138] sm:$0xf]
      %v996 = vld [vmem:[%s3 + $0x13c] sm:$0xf]
      %v997 = vld [vmem:[%s3 + $0x140] sm:$0xf]
      %v998 = vld [vmem:[%s3 + $0x144] sm:$0xf]
      %v999 = vld [vmem:[%s3 + $0x148] sm:$0xf]
      %v1000 = vld [vmem:[%s3 + $0x14c] sm:$0xf]
      %v1001 = vld [vmem:[%s3 + $0x150] sm:$0xf]
      %v1002 = vld [vmem:[%s3 + $0x154] sm:$0xf]
      %v1003 = vld [vmem:[%s3 + $0x158] sm:$0xf]
      %v1004 = vld [vmem:[%s3 + $0x15c] sm:$0xf]
      %v1005 = vld [vmem:[%s3 + $0x160] sm:$0xf]
      %v1006 = vld [vmem:[%s3 + $0x164] sm:$0xf]
      %v1007 = vld [vmem:[%s3 + $0x168] sm:$0xf]
      %v1008 = vld [vmem:[%s3 + $0x16c] sm:$0xf]
      %v1009 = vld [vmem:[%s3 + $0x170] sm:$0xf]
      %v1010 = vld [vmem:[%s3 + $0x174] sm:$0xf]
      %v1011 = vld [vmem:[%s3 + $0x178] sm:$0xf]
      %v1012 = vld [vmem:[%s3 + $0x17c] sm:$0xf]
      %v1013 = vld [vmem:[%s3 + $0x180] sm:$0xf]
      %v1014 = vld [vmem:[%s3 + $0x184] sm:$0xf]
      %v1015 = vld [vmem:[%s3 + $0x188] sm:$0xf]
      %v1016 = vld [vmem:[%s3 + $0x18c] sm:$0xf]
      %v1017 = vld [vmem:[%s3 + $0x190] sm:$0xf]
      %v1018 = vld [vmem:[%s3 + $0x194] sm:$0xf]
      %v1019 = vld [vmem:[%s3 + $0x198] sm:$0xf]
      %v1020 = vld [vmem:[%s3 + $0x19c] sm:$0xf]
      %v1021 = vld [vmem:[%s3 + $0x1a0] sm:$0xf]
      %v1022 = vld [vmem:[%s3 + $0x1a4] sm:$0xf]
      %v1023 = vld [vmem:[%s3 + $0x1a8] sm:$0xf]
      %v1024 = vld [vmem:[%s3 + $0x1ac] sm:$0xf]
      %v1025 = vld [vmem:[%s3 + $0x1b0] sm:$0xf]
      %v1026 = vld [vmem:[%s3 + $0x1b4] sm:$0xf]
      %v1027 = vld [vmem:[%s3 + $0x1b8] sm:$0xf]
      %v1028 = vld [vmem:[%s3 + $0x1bc] sm:$0xf]
      %v1029 = vld [vmem:[%s3 + $0x1c0] sm:$0xf]
      %v1030 = vld [vmem:[%s3 + $0x1c4] sm:$0xf]
      %v1031 = vld [vmem:[%s3 + $0x1c8] sm:$0xf]
      %v1032 = vld [vmem:[%s3 + $0x1cc] sm:$0xf]
      %v1033 = vld [vmem:[%s3 + $0x1d0] sm:$0xf]
      %v1034 = vld [vmem:[%s3 + $0x1d4] sm:$0xf]
      %v1035 = vld [vmem:[%s3 + $0x1d8] sm:$0xf]
      %v1036 = vld [vmem:[%s3 + $0x1dc] sm:$0xf]
      %v1037 = vld [vmem:[%s3 + $0x1e0] sm:$0xf]
      %v1038 = vld [vmem:[%s3 + $0x1e4] sm:$0xf]
      %v1039 = vld [vmem:[%s3 + $0x1e8] sm:$0xf]
      %v1040 = vld [vmem:[%s3 + $0x1ec] sm:$0xf]
      %v1041 = vld [vmem:[%s3 + $0x1f0] sm:$0xf]
      %v1042 = vld [vmem:[%s3 + $0x1f4] sm:$0xf]
      %v1043 = vld [vmem:[%s3 + $0x1f8] sm:$0xf]
      %v1044 = vld [vmem:[%s3 + $0x1fc] sm:$0xf]
      %v1045 = vld [vmem:[%s3 + $0x200] sm:$0xf]
      %v1046 = vld [vmem:[%s3 + $0x204] sm:$0xf]
      %v1047 = vld [vmem:[%s3 + $0x208] sm:$0xf]
      %v1048 = vld [vmem:[%s3 + $0x20c] sm:$0xf]
      %v1049 = vld [vmem:[%s3 + $0x210] sm:$0xf]
      %v1050 = vld [vmem:[%s3 + $0x214] sm:$0xf]
      %v1051 = vld [vmem:[%s3 + $0x218] sm:$0xf]
      %v1052 = vld [vmem:[%s3 + $0x21c] sm:$0xf]
      %v1053 = vld [vmem:[%s3 + $0x220] sm:$0xf]
      %v1054 = vld [vmem:[%s3 + $0x224] sm:$0xf]
      %v1055 = vld [vmem:[%s3 + $0x228] sm:$0xf]
      %v1056 = vld [vmem:[%s3 + $0x22c] sm:$0xf]
      %v1057 = vld [vmem:[%s3 + $0x230] sm:$0xf]
      %v1058 = vld [vmem:[%s3 + $0x234] sm:$0xf]
      %v1059 = vld [vmem:[%s3 + $0x238] sm:$0xf]
      %v1060 = vld [vmem:[%s3 + $0x23c] sm:$0xf]
      %v1061 = vld [vmem:[%s3 + $0x240] sm:$0xf]
      %v1062 = vld [vmem:[%s3 + $0x244] sm:$0xf]
      %v1063 = vld [vmem:[%s3 + $0x248] sm:$0xf]
      %v1064 = vld [vmem:[%s3 + $0x24c] sm:$0xf]
      %v1065 = vld [vmem:[%s3 + $0x250] sm:$0xf]
      %v1066 = vld [vmem:[%s3 + $0x254] sm:$0xf]
      %v1067 = vld [vmem:[%s3 + $0x258] sm:$0xf]
      %v1068 = vld [vmem:[%s3 + $0x25c] sm:$0xf]
      %v1069 = vld [vmem:[%s3 + $0x260] sm:$0xf]
      %v1070 = vld [vmem:[%s3 + $0x264] sm:$0xf]
      %v1071 = vld [vmem:[%s3 + $0x268] sm:$0xf]
      %v1072 = vld [vmem:[%s3 + $0x26c] sm:$0xf]
      %v1073 = vld [vmem:[%s3 + $0x270] sm:$0xf]
      %v1074 = vld [vmem:[%s3 + $0x274] sm:$0xf]
      %v1075 = vld [vmem:[%s3 + $0x278] sm:$0xf]
      %v1076 = vld [vmem:[%s3 + $0x27c] sm:$0xf]
      %v1077 = vld [vmem:[%s3 + $0x280] sm:$0xf]
      %v1078 = vld [vmem:[%s3 + $0x284] sm:$0xf]
      %v1079 = vld [vmem:[%s3 + $0x288] sm:$0xf]
      %v1080 = vld [vmem:[%s3 + $0x28c] sm:$0xf]
      %v1081 = vld [vmem:[%s3 + $0x290] sm:$0xf]
      %v1082 = vld [vmem:[%s3 + $0x294] sm:$0xf]
      %v1083 = vld [vmem:[%s3 + $0x298] sm:$0xf]
      %v1084 = vld [vmem:[%s3 + $0x29c] sm:$0xf]
      %v1085 = vld [vmem:[%s3 + $0x2a0] sm:$0xf]
      %v1086 = vld [vmem:[%s3 + $0x2a4] sm:$0xf]
      %v1087 = vld [vmem:[%s3 + $0x2a8] sm:$0xf]
      %v1088 = vld [vmem:[%s3 + $0x2ac] sm:$0xf]
      %v1089 = vld [vmem:[%s3 + $0x2b0] sm:$0xf]
      %v1090 = vld [vmem:[%s3 + $0x2b4] sm:$0xf]
      %v1091 = vld [vmem:[%s3 + $0x2b8] sm:$0xf]
      %v1092 = vld [vmem:[%s3 + $0x2bc] sm:$0xf]
      %v1093 = vld [vmem:[%s3 + $0x2c0] sm:$0xf]
      %v1094 = vld [vmem:[%s3 + $0x2c4] sm:$0xf]
      %v1095 = vld [vmem:[%s3 + $0x2c8] sm:$0xf]
      %v1096 = vld [vmem:[%s3 + $0x2cc] sm:$0xf]
      %v1097 = vld [vmem:[%s3 + $0x2d0] sm:$0xf]
      %v1098 = vld [vmem:[%s3 + $0x2d4] sm:$0xf]
      %v1099 = vld [vmem:[%s3 + $0x2d8] sm:$0xf]
      %v1100 = vld [vmem:[%s3 + $0x2dc] sm:$0xf]
      %v1101 = vld [vmem:[%s3 + $0x2e0] sm:$0xf]
      %v1102 = vld [vmem:[%s3 + $0x2e4] sm:$0xf]
      %v1103 = vld [vmem:[%s3 + $0x2e8] sm:$0xf]
      %v1104 = vld [vmem:[%s3 + $0x2ec] sm:$0xf]
      %v1105 = vld [vmem:[%s3 + $0x2f0] sm:$0xf]
      %v1106 = vld [vmem:[%s3 + $0x2f4] sm:$0xf]
      %v1107 = vld [vmem:[%s3 + $0x2f8] sm:$0xf]
      %v1108 = vld [vmem:[%s3 + $0x2fc] sm:$0xf]
      %v1109 = vld [vmem:[%s3 + $0x300] sm:$0xf]
      %v1110 = vld [vmem:[%s3 + $0x304] sm:$0xf]
      %v1111 = vld [vmem:[%s3 + $0x308] sm:$0xf]
      %v1112 = vld [vmem:[%s3 + $0x30c] sm:$0xf]
      %v1113 = vld [vmem:[%s3 + $0x310] sm:$0xf]
      %v1114 = vld [vmem:[%s3 + $0x314] sm:$0xf]
      %v1115 = vld [vmem:[%s3 + $0x318] sm:$0xf]
      %v1116 = vld [vmem:[%s3 + $0x31c] sm:$0xf]
      %v1117 = vld [vmem:[%s3 + $0x320] sm:$0xf]
      %v1118 = vld [vmem:[%s3 + $0x324] sm:$0xf]
      %v1119 = vld [vmem:[%s3 + $0x328] sm:$0xf]
      %v1120 = vld [vmem:[%s3 + $0x32c] sm:$0xf]
      %v1121 = vld [vmem:[%s3 + $0x330] sm:$0xf]
      %v1122 = vld [vmem:[%s3 + $0x334] sm:$0xf]
      %v1123 = vld [vmem:[%s3 + $0x338] sm:$0xf]
      %v1124 = vld [vmem:[%s3 + $0x33c] sm:$0xf]
      %v1125 = vld [vmem:[%s3 + $0x340] sm:$0xf]
      %v1126 = vld [vmem:[%s3 + $0x344] sm:$0xf]
      %v1127 = vld [vmem:[%s3 + $0x348] sm:$0xf]
      %v1128 = vld [vmem:[%s3 + $0x34c] sm:$0xf]
      %v1129 = vld [vmem:[%s3 + $0x350] sm:$0xf]
      %v1130 = vld [vmem:[%s3 + $0x354] sm:$0xf]
      %v1131 = vld [vmem:[%s3 + $0x358] sm:$0xf]
      %v1132 = vld [vmem:[%s3 + $0x35c] sm:$0xf]
      %v1133 = vld [vmem:[%s3 + $0x360] sm:$0xf]
      %v1134 = vld [vmem:[%s3 + $0x364] sm:$0xf]
      %v1135 = vld [vmem:[%s3 + $0x368] sm:$0xf]
      %v1136 = vld [vmem:[%s3 + $0x36c] sm:$0xf]
      %v1137 = vld [vmem:[%s3 + $0x370] sm:$0xf]
      %v1138 = vld [vmem:[%s3 + $0x374] sm:$0xf]
      %v1139 = vld [vmem:[%s3 + $0x378] sm:$0xf]
      %v1140 = vld [vmem:[%s3 + $0x37c] sm:$0xf]
      %v1141 = vld [vmem:[%s3 + $0x380] sm:$0xf]
      %v1142 = vld [vmem:[%s3 + $0x384] sm:$0xf]
      %v1143 = vld [vmem:[%s3 + $0x388] sm:$0xf]
      %v1144 = vld [vmem:[%s3 + $0x38c] sm:$0xf]
      %v1145 = vld [vmem:[%s3 + $0x390] sm:$0xf]
      %v1146 = vld [vmem:[%s3 + $0x394] sm:$0xf]
      %v1147 = vld [vmem:[%s3 + $0x398] sm:$0xf]
      %v1148 = vld [vmem:[%s3 + $0x39c] sm:$0xf]
      %v1149 = vld [vmem:[%s3 + $0x3a0] sm:$0xf]
      %v1150 = vld [vmem:[%s3 + $0x3a4] sm:$0xf]
      %v1151 = vld [vmem:[%s3 + $0x3a8] sm:$0xf]
      %v1152 = vld [vmem:[%s3 + $0x3ac] sm:$0xf]
      %v1153 = vld [vmem:[%s3 + $0x3b0] sm:$0xf]
      %v1154 = vld [vmem:[%s3 + $0x3b4] sm:$0xf]
      %v1155 = vld [vmem:[%s3 + $0x3b8] sm:$0xf]
      %v1156 = vld [vmem:[%s3 + $0x3bc] sm:$0xf]
      %v1157 = vld [vmem:[%s3 + $0x3c0] sm:$0xf]
      %v1158 = vld [vmem:[%s3 + $0x3c4] sm:$0xf]
      %v1159 = vld [vmem:[%s3 + $0x3c8] sm:$0xf]
      %v1160 = vld [vmem:[%s3 + $0x3cc] sm:$0xf]
      %v1161 = vld [vmem:[%s3 + $0x3d0] sm:$0xf]
      %v1162 = vld [vmem:[%s3 + $0x3d4] sm:$0xf]
      %v1163 = vld [vmem:[%s3 + $0x3d8] sm:$0xf]
      %v1164 = vld [vmem:[%s3 + $0x3dc] sm:$0xf]
      %v1165 = vld [vmem:[%s3 + $0x3e0] sm:$0xf]
      %v1166 = vld [vmem:[%s3 + $0x3e4] sm:$0xf]
      %v1167 = vld [vmem:[%s3 + $0x3e8] sm:$0xf]
      %v1168 = vld [vmem:[%s3 + $0x3ec] sm:$0xf]
      %v1169 = vld [vmem:[%s3 + $0x3f0] sm:$0xf]
      %v1170 = vld [vmem:[%s3 + $0x3f4] sm:$0xf]
      %v1171 = vld [vmem:[%s3 + $0x3f8] sm:$0xf]
      %v1172 = vld [vmem:[%s3 + $0x3fc] sm:$0xf]
      %v1173 = vld [vmem:[%s4] sm:$0x1]
      %v1175 = vlaneseq
      %v1176 = vshrl.u32 %v1175, 7
      %v1177 = vsub.s32 0, %v1176
      %v1178 = vrot.slane %v1173, %v1177
      %v1436 = vunpack.c.l.b16 %v917
      %v1437 = vunpack.c.l.b16 %v918
      %v1438 = vunpack.c.l.b16 %v919
      %v1439 = vunpack.c.l.b16 %v920
      %v1440 = vunpack.c.l.b16 %v921
      %v1441 = vunpack.c.l.b16 %v922
      %v1442 = vunpack.c.l.b16 %v923
      %v1443 = vunpack.c.l.b16 %v924
      %v1444 = vunpack.c.l.b16 %v925
      %v1445 = vunpack.c.l.b16 %v926
      %v1446 = vunpack.c.l.b16 %v927
      %v1447 = vunpack.c.l.b16 %v928
      %v1448 = vunpack.c.l.b16 %v929
      %v1449 = vunpack.c.l.b16 %v930
      %v1450 = vunpack.c.l.b16 %v931
      %v1451 = vunpack.c.l.b16 %v932
      %v1452 = vunpack.c.l.b16 %v933
      %v1453 = vunpack.c.l.b16 %v934
      %v1454 = vunpack.c.l.b16 %v935
      %v1455 = vunpack.c.l.b16 %v936
      %v1456 = vunpack.c.l.b16 %v937
      %v1457 = vunpack.c.l.b16 %v938
      %v1458 = vunpack.c.l.b16 %v939
      %v1459 = vunpack.c.l.b16 %v940
      %v1460 = vunpack.c.l.b16 %v941
      %v1461 = vunpack.c.l.b16 %v942
      %v1462 = vunpack.c.l.b16 %v943
      %v1463 = vunpack.c.l.b16 %v944
      %v1464 = vunpack.c.l.b16 %v945
      %v1465 = vunpack.c.l.b16 %v946
      %v1466 = vunpack.c.l.b16 %v947
      %v1467 = vunpack.c.l.b16 %v948
      %v1468 = vunpack.c.l.b16 %v949
      %v1469 = vunpack.c.l.b16 %v950
      %v1470 = vunpack.c.l.b16 %v951
      %v1471 = vunpack.c.l.b16 %v952
      %v1472 = vunpack.c.l.b16 %v953
      %v1473 = vunpack.c.l.b16 %v954
      %v1474 = vunpack.c.l.b16 %v955
      %v1475 = vunpack.c.l.b16 %v956
      %v1476 = vunpack.c.l.b16 %v957
      %v1477 = vunpack.c.l.b16 %v958
      %v1478 = vunpack.c.l.b16 %v959
      %v1479 = vunpack.c.l.b16 %v960
      %v1480 = vunpack.c.l.b16 %v961
      %v1481 = vunpack.c.l.b16 %v962
      %v1482 = vunpack.c.l.b16 %v963
      %v1483 = vunpack.c.l.b16 %v964
      %v1484 = vunpack.c.l.b16 %v965
      %v1485 = vunpack.c.l.b16 %v966
      %v1486 = vunpack.c.l.b16 %v967
      %v1487 = vunpack.c.l.b16 %v968
      %v1488 = vunpack.c.l.b16 %v969
      %v1489 = vunpack.c.l.b16 %v970
      %v1490 = vunpack.c.l.b16 %v971
      %v1491 = vunpack.c.l.b16 %v972
      %v1492 = vunpack.c.l.b16 %v973
      %v1493 = vunpack.c.l.b16 %v974
      %v1494 = vunpack.c.l.b16 %v975
      %v1495 = vunpack.c.l.b16 %v976
      %v1496 = vunpack.c.l.b16 %v977
      %v1497 = vunpack.c.l.b16 %v978
      %v1498 = vunpack.c.l.b16 %v979
      %v1499 = vunpack.c.l.b16 %v980
      %v1500 = vunpack.c.l.b16 %v981
      %v1501 = vunpack.c.l.b16 %v982
      %v1502 = vunpack.c.l.b16 %v983
      %v1503 = vunpack.c.l.b16 %v984
      %v1504 = vunpack.c.l.b16 %v985
      %v1505 = vunpack.c.l.b16 %v986
      %v1506 = vunpack.c.l.b16 %v987
      %v1507 = vunpack.c.l.b16 %v988
      %v1508 = vunpack.c.l.b16 %v989
      %v1509 = vunpack.c.l.b16 %v990
      %v1510 = vunpack.c.l.b16 %v991
      %v1511 = vunpack.c.l.b16 %v992
      %v1512 = vunpack.c.l.b16 %v993
      %v1513 = vunpack.c.l.b16 %v994
      %v1514 = vunpack.c.l.b16 %v995
      %v1515 = vunpack.c.l.b16 %v996
      %v1516 = vunpack.c.l.b16 %v997
      %v1517 = vunpack.c.l.b16 %v998
      %v1518 = vunpack.c.l.b16 %v999
      %v1519 = vunpack.c.l.b16 %v1000
      %v1520 = vunpack.c.l.b16 %v1001
      %v1521 = vunpack.c.l.b16 %v1002
      %v1522 = vunpack.c.l.b16 %v1003
      %v1523 = vunpack.c.l.b16 %v1004
      %v1524 = vunpack.c.l.b16 %v1005
      %v1525 = vunpack.c.l.b16 %v1006
      %v1526 = vunpack.c.l.b16 %v1007
      %v1527 = vunpack.c.l.b16 %v1008
      %v1528 = vunpack.c.l.b16 %v1009
      %v1529 = vunpack.c.l.b16 %v1010
      %v1530 = vunpack.c.l.b16 %v1011
      %v1531 = vunpack.c.l.b16 %v1012
      %v1532 = vunpack.c.l.b16 %v1013
      %v1533 = vunpack.c.l.b16 %v1014
      %v1534 = vunpack.c.l.b16 %v1015
      %v1535 = vunpack.c.l.b16 %v1016
      %v1536 = vunpack.c.l.b16 %v1017
      %v1537 = vunpack.c.l.b16 %v1018
      %v1538 = vunpack.c.l.b16 %v1019
      %v1539 = vunpack.c.l.b16 %v1020
      %v1540 = vunpack.c.l.b16 %v1021
      %v1541 = vunpack.c.l.b16 %v1022
      %v1542 = vunpack.c.l.b16 %v1023
      %v1543 = vunpack.c.l.b16 %v1024
      %v1544 = vunpack.c.l.b16 %v1025
      %v1545 = vunpack.c.l.b16 %v1026
      %v1546 = vunpack.c.l.b16 %v1027
      %v1547 = vunpack.c.l.b16 %v1028
      %v1548 = vunpack.c.l.b16 %v1029
      %v1549 = vunpack.c.l.b16 %v1030
      %v1550 = vunpack.c.l.b16 %v1031
      %v1551 = vunpack.c.l.b16 %v1032
      %v1552 = vunpack.c.l.b16 %v1033
      %v1553 = vunpack.c.l.b16 %v1034
      %v1554 = vunpack.c.l.b16 %v1035
      %v1555 = vunpack.c.l.b16 %v1036
      %v1556 = vunpack.c.l.b16 %v1037
      %v1557 = vunpack.c.l.b16 %v1038
      %v1558 = vunpack.c.l.b16 %v1039
      %v1559 = vunpack.c.l.b16 %v1040
      %v1560 = vunpack.c.l.b16 %v1041
      %v1561 = vunpack.c.l.b16 %v1042
      %v1562 = vunpack.c.l.b16 %v1043
      %v1563 = vunpack.c.l.b16 %v1044
      %v1564 = vunpack.c.l.b16 %v1045
      %v1565 = vunpack.c.l.b16 %v1046
      %v1566 = vunpack.c.l.b16 %v1047
      %v1567 = vunpack.c.l.b16 %v1048
      %v1568 = vunpack.c.l.b16 %v1049
      %v1569 = vunpack.c.l.b16 %v1050
      %v1570 = vunpack.c.l.b16 %v1051
      %v1571 = vunpack.c.l.b16 %v1052
      %v1572 = vunpack.c.l.b16 %v1053
      %v1573 = vunpack.c.l.b16 %v1054
      %v1574 = vunpack.c.l.b16 %v1055
      %v1575 = vunpack.c.l.b16 %v1056
      %v1576 = vunpack.c.l.b16 %v1057
      %v1577 = vunpack.c.l.b16 %v1058
      %v1578 = vunpack.c.l.b16 %v1059
      %v1579 = vunpack.c.l.b16 %v1060
      %v1580 = vunpack.c.l.b16 %v1061
      %v1581 = vunpack.c.l.b16 %v1062
      %v1582 = vunpack.c.l.b16 %v1063
      %v1583 = vunpack.c.l.b16 %v1064
      %v1584 = vunpack.c.l.b16 %v1065
      %v1585 = vunpack.c.l.b16 %v1066
      %v1586 = vunpack.c.l.b16 %v1067
      %v1587 = vunpack.c.l.b16 %v1068
      %v1588 = vunpack.c.l.b16 %v1069
      %v1589 = vunpack.c.l.b16 %v1070
      %v1590 = vunpack.c.l.b16 %v1071
      %v1591 = vunpack.c.l.b16 %v1072
      %v1592 = vunpack.c.l.b16 %v1073
      %v1593 = vunpack.c.l.b16 %v1074
      %v1594 = vunpack.c.l.b16 %v1075
      %v1595 = vunpack.c.l.b16 %v1076
      %v1596 = vunpack.c.l.b16 %v1077
      %v1597 = vunpack.c.l.b16 %v1078
      %v1598 = vunpack.c.l.b16 %v1079
      %v1599 = vunpack.c.l.b16 %v1080
      %v1600 = vunpack.c.l.b16 %v1081
      %v1601 = vunpack.c.l.b16 %v1082
      %v1602 = vunpack.c.l.b16 %v1083
      %v1603 = vunpack.c.l.b16 %v1084
      %v1604 = vunpack.c.l.b16 %v1085
      %v1605 = vunpack.c.l.b16 %v1086
      %v1606 = vunpack.c.l.b16 %v1087
      %v1607 = vunpack.c.l.b16 %v1088
      %v1608 = vunpack.c.l.b16 %v1089
      %v1609 = vunpack.c.l.b16 %v1090
      %v1610 = vunpack.c.l.b16 %v1091
      %v1611 = vunpack.c.l.b16 %v1092
      %v1612 = vunpack.c.l.b16 %v1093
      %v1613 = vunpack.c.l.b16 %v1094
      %v1614 = vunpack.c.l.b16 %v1095
      %v1615 = vunpack.c.l.b16 %v1096
      %v1616 = vunpack.c.l.b16 %v1097
      %v1617 = vunpack.c.l.b16 %v1098
      %v1618 = vunpack.c.l.b16 %v1099
      %v1619 = vunpack.c.l.b16 %v1100
      %v1620 = vunpack.c.l.b16 %v1101
      %v1621 = vunpack.c.l.b16 %v1102
      %v1622 = vunpack.c.l.b16 %v1103
      %v1623 = vunpack.c.l.b16 %v1104
      %v1624 = vunpack.c.l.b16 %v1105
      %v1625 = vunpack.c.l.b16 %v1106
      %v1626 = vunpack.c.l.b16 %v1107
      %v1627 = vunpack.c.l.b16 %v1108
      %v1628 = vunpack.c.l.b16 %v1109
      %v1629 = vunpack.c.l.b16 %v1110
      %v1630 = vunpack.c.l.b16 %v1111
      %v1631 = vunpack.c.l.b16 %v1112
      %v1632 = vunpack.c.l.b16 %v1113
      %v1633 = vunpack.c.l.b16 %v1114
      %v1634 = vunpack.c.l.b16 %v1115
      %v1635 = vunpack.c.l.b16 %v1116
      %v1636 = vunpack.c.l.b16 %v1117
      %v1637 = vunpack.c.l.b16 %v1118
      %v1638 = vunpack.c.l.b16 %v1119
      %v1639 = vunpack.c.l.b16 %v1120
      %v1640 = vunpack.c.l.b16 %v1121
      %v1641 = vunpack.c.l.b16 %v1122
      %v1642 = vunpack.c.l.b16 %v1123
      %v1643 = vunpack.c.l.b16 %v1124
      %v1644 = vunpack.c.l.b16 %v1125
      %v1645 = vunpack.c.l.b16 %v1126
      %v1646 = vunpack.c.l.b16 %v1127
      %v1647 = vunpack.c.l.b16 %v1128
      %v1648 = vunpack.c.l.b16 %v1129
      %v1649 = vunpack.c.l.b16 %v1130
      %v1650 = vunpack.c.l.b16 %v1131
      %v1651 = vunpack.c.l.b16 %v1132
      %v1652 = vunpack.c.l.b16 %v1133
      %v1653 = vunpack.c.l.b16 %v1134
      %v1654 = vunpack.c.l.b16 %v1135
      %v1655 = vunpack.c.l.b16 %v1136
      %v1656 = vunpack.c.l.b16 %v1137
      %v1657 = vunpack.c.l.b16 %v1138
      %v1658 = vunpack.c.l.b16 %v1139
      %v1659 = vunpack.c.l.b16 %v1140
      %v1660 = vunpack.c.l.b16 %v1141
      %v1661 = vunpack.c.l.b16 %v1142
      %v1662 = vunpack.c.l.b16 %v1143
      %v1663 = vunpack.c.l.b16 %v1144
      %v1664 = vunpack.c.l.b16 %v1145
      %v1665 = vunpack.c.l.b16 %v1146
      %v1666 = vunpack.c.l.b16 %v1147
      %v1667 = vunpack.c.l.b16 %v1148
      %v1668 = vunpack.c.l.b16 %v1149
      %v1669 = vunpack.c.l.b16 %v1150
      %v1670 = vunpack.c.l.b16 %v1151
      %v1671 = vunpack.c.l.b16 %v1152
      %v1672 = vunpack.c.l.b16 %v1153
      %v1673 = vunpack.c.l.b16 %v1154
      %v1674 = vunpack.c.l.b16 %v1155
      %v1675 = vunpack.c.l.b16 %v1156
      %v1676 = vunpack.c.l.b16 %v1157
      %v1677 = vunpack.c.l.b16 %v1158
      %v1678 = vunpack.c.l.b16 %v1159
      %v1679 = vunpack.c.l.b16 %v1160
      %v1680 = vunpack.c.l.b16 %v1161
      %v1681 = vunpack.c.l.b16 %v1162
      %v1682 = vunpack.c.l.b16 %v1163
      %v1683 = vunpack.c.l.b16 %v1164
      %v1684 = vunpack.c.l.b16 %v1165
      %v1685 = vunpack.c.l.b16 %v1166
      %v1686 = vunpack.c.l.b16 %v1167
      %v1687 = vunpack.c.l.b16 %v1168
      %v1688 = vunpack.c.l.b16 %v1169
      %v1689 = vunpack.c.l.b16 %v1170
      %v1690 = vunpack.c.l.b16 %v1171
      %v1691 = vunpack.c.l.b16 %v1172
      %v1692 = vpack.c.b16 %v1437, %v1436
      %v1693 = vpack.c.b16 %v1439, %v1438
      %v1694 = vpack.c.b16 %v1441, %v1440
      %v1695 = vpack.c.b16 %v1443, %v1442
      %v1696 = vpack.c.b16 %v1445, %v1444
      %v1697 = vpack.c.b16 %v1447, %v1446
      %v1698 = vpack.c.b16 %v1449, %v1448
      %v1699 = vpack.c.b16 %v1451, %v1450
      %v1700 = vpack.c.b16 %v1453, %v1452
      %v1701 = vpack.c.b16 %v1455, %v1454
      %v1702 = vpack.c.b16 %v1457, %v1456
      %v1703 = vpack.c.b16 %v1459, %v1458
      %v1704 = vpack.c.b16 %v1461, %v1460
      %v1705 = vpack.c.b16 %v1463, %v1462
      %v1706 = vpack.c.b16 %v1465, %v1464
      %v1707 = vpack.c.b16 %v1467, %v1466
      %v1708 = vpack.c.b16 %v1469, %v1468
      %v1709 = vpack.c.b16 %v1471, %v1470
      %v1710 = vpack.c.b16 %v1473, %v1472
      %v1711 = vpack.c.b16 %v1475, %v1474
      %v1712 = vpack.c.b16 %v1477, %v1476
      %v1713 = vpack.c.b16 %v1479, %v1478
      %v1714 = vpack.c.b16 %v1481, %v1480
      %v1715 = vpack.c.b16 %v1483, %v1482
      %v1716 = vpack.c.b16 %v1485, %v1484
      %v1717 = vpack.c.b16 %v1487, %v1486
      %v1718 = vpack.c.b16 %v1489, %v1488
      %v1719 = vpack.c.b16 %v1491, %v1490
      %v1720 = vpack.c.b16 %v1493, %v1492
      %v1721 = vpack.c.b16 %v1495, %v1494
      %v1722 = vpack.c.b16 %v1497, %v1496
      %v1723 = vpack.c.b16 %v1499, %v1498
      %v1724 = vpack.c.b16 %v1501, %v1500
      %v1725 = vpack.c.b16 %v1503, %v1502
      %v1726 = vpack.c.b16 %v1505, %v1504
      %v1727 = vpack.c.b16 %v1507, %v1506
      %v1728 = vpack.c.b16 %v1509, %v1508
      %v1729 = vpack.c.b16 %v1511, %v1510
      %v1730 = vpack.c.b16 %v1513, %v1512
      %v1731 = vpack.c.b16 %v1515, %v1514
      %v1732 = vpack.c.b16 %v1517, %v1516
      %v1733 = vpack.c.b16 %v1519, %v1518
      %v1734 = vpack.c.b16 %v1521, %v1520
      %v1735 = vpack.c.b16 %v1523, %v1522
      %v1736 = vpack.c.b16 %v1525, %v1524
      %v1737 = vpack.c.b16 %v1527, %v1526
      %v1738 = vpack.c.b16 %v1529, %v1528
      %v1739 = vpack.c.b16 %v1531, %v1530
      %v1740 = vpack.c.b16 %v1533, %v1532
      %v1741 = vpack.c.b16 %v1535, %v1534
      %v1742 = vpack.c.b16 %v1537, %v1536
      %v1743 = vpack.c.b16 %v1539, %v1538
      %v1744 = vpack.c.b16 %v1541, %v1540
      %v1745 = vpack.c.b16 %v1543, %v1542
      %v1746 = vpack.c.b16 %v1545, %v1544
      %v1747 = vpack.c.b16 %v1547, %v1546
      %v1748 = vpack.c.b16 %v1549, %v1548
      %v1749 = vpack.c.b16 %v1551, %v1550
      %v1750 = vpack.c.b16 %v1553, %v1552
      %v1751 = vpack.c.b16 %v1555, %v1554
      %v1752 = vpack.c.b16 %v1557, %v1556
      %v1753 = vpack.c.b16 %v1559, %v1558
      %v1754 = vpack.c.b16 %v1561, %v1560
      %v1755 = vpack.c.b16 %v1563, %v1562
      %v1756 = vpack.c.b16 %v1565, %v1564
      %v1757 = vpack.c.b16 %v1567, %v1566
      %v1758 = vpack.c.b16 %v1569, %v1568
      %v1759 = vpack.c.b16 %v1571, %v1570
      %v1760 = vpack.c.b16 %v1573, %v1572
      %v1761 = vpack.c.b16 %v1575, %v1574
      %v1762 = vpack.c.b16 %v1577, %v1576
      %v1763 = vpack.c.b16 %v1579, %v1578
      %v1764 = vpack.c.b16 %v1581, %v1580
      %v1765 = vpack.c.b16 %v1583, %v1582
      %v1766 = vpack.c.b16 %v1585, %v1584
      %v1767 = vpack.c.b16 %v1587, %v1586
      %v1768 = vpack.c.b16 %v1589, %v1588
      %v1769 = vpack.c.b16 %v1591, %v1590
      %v1770 = vpack.c.b16 %v1593, %v1592
      %v1771 = vpack.c.b16 %v1595, %v1594
      %v1772 = vpack.c.b16 %v1597, %v1596
      %v1773 = vpack.c.b16 %v1599, %v1598
      %v1774 = vpack.c.b16 %v1601, %v1600
      %v1775 = vpack.c.b16 %v1603, %v1602
      %v1776 = vpack.c.b16 %v1605, %v1604
      %v1777 = vpack.c.b16 %v1607, %v1606
      %v1778 = vpack.c.b16 %v1609, %v1608
      %v1779 = vpack.c.b16 %v1611, %v1610
      %v1780 = vpack.c.b16 %v1613, %v1612
      %v1781 = vpack.c.b16 %v1615, %v1614
      %v1782 = vpack.c.b16 %v1617, %v1616
      %v1783 = vpack.c.b16 %v1619, %v1618
      %v1784 = vpack.c.b16 %v1621, %v1620
      %v1785 = vpack.c.b16 %v1623, %v1622
      %v1786 = vpack.c.b16 %v1625, %v1624
      %v1787 = vpack.c.b16 %v1627, %v1626
      %v1788 = vpack.c.b16 %v1629, %v1628
      %v1789 = vpack.c.b16 %v1631, %v1630
      %v1790 = vpack.c.b16 %v1633, %v1632
      %v1791 = vpack.c.b16 %v1635, %v1634
      %v1792 = vpack.c.b16 %v1637, %v1636
      %v1793 = vpack.c.b16 %v1639, %v1638
      %v1794 = vpack.c.b16 %v1641, %v1640
      %v1795 = vpack.c.b16 %v1643, %v1642
      %v1796 = vpack.c.b16 %v1645, %v1644
      %v1797 = vpack.c.b16 %v1647, %v1646
      %v1798 = vpack.c.b16 %v1649, %v1648
      %v1799 = vpack.c.b16 %v1651, %v1650
      %v1800 = vpack.c.b16 %v1653, %v1652
      %v1801 = vpack.c.b16 %v1655, %v1654
      %v1802 = vpack.c.b16 %v1657, %v1656
      %v1803 = vpack.c.b16 %v1659, %v1658
      %v1804 = vpack.c.b16 %v1661, %v1660
      %v1805 = vpack.c.b16 %v1663, %v1662
      %v1806 = vpack.c.b16 %v1665, %v1664
      %v1807 = vpack.c.b16 %v1667, %v1666
      %v1808 = vpack.c.b16 %v1669, %v1668
      %v1809 = vpack.c.b16 %v1671, %v1670
      %v1810 = vpack.c.b16 %v1673, %v1672
      %v1811 = vpack.c.b16 %v1675, %v1674
      %v1812 = vpack.c.b16 %v1677, %v1676
      %v1813 = vpack.c.b16 %v1679, %v1678
      %v1814 = vpack.c.b16 %v1681, %v1680
      %v1815 = vpack.c.b16 %v1683, %v1682
      %v1816 = vpack.c.b16 %v1685, %v1684
      %v1817 = vpack.c.b16 %v1687, %v1686
      %v1818 = vpack.c.b16 %v1689, %v1688
      %v1819 = vpack.c.b16 %v1691, %v1690
      %1948 = vmatprep.subr.bf16.mxu0 0
      %1949 = vmatpush1.bf16.msra.mxu0 %v1699
      %1950 = vmatprep.subr.bf16.mxu0 0
      %1951 = vmatpush1.bf16.msra.mxu0 %v1698
      %1952 = vmatprep.subr.bf16.mxu0 0
      %1953 = vmatpush1.bf16.msra.mxu0 %v1697
      %1954 = vmatprep.subr.bf16.mxu0 0
      %1955 = vmatpush1.bf16.msra.mxu0 %v1696
      %1956 = vmatprep.subr.bf16.mxu0 0
      %1957 = vmatpush1.bf16.msra.mxu0 %v1695
      %1958 = vmatprep.subr.bf16.mxu0 0
      %1959 = vmatpush1.bf16.msra.mxu0 %v1694
      %1960 = vmatprep.subr.bf16.mxu0 0
      %1961 = vmatpush1.bf16.msra.mxu0 %v1693
      %1962 = vmatprep.subr.bf16.mxu0 0
      %1963 = vmatpush1.bf16.msra.mxu0 %v1692
      %1964 = vmatprep.subr.bf16.mxu0 0
      %1965 = vmatpush2.bf16.msra.mxu0 %v1707
      %1966 = vmatprep.subr.bf16.mxu0 0
      %1967 = vmatpush2.bf16.msra.mxu0 %v1706
      %1968 = vmatprep.subr.bf16.mxu0 0
      %1969 = vmatpush2.bf16.msra.mxu0 %v1705
      %1970 = vmatprep.subr.bf16.mxu0 0
      %1971 = vmatpush2.bf16.msra.mxu0 %v1704
      %1972 = vmatprep.subr.bf16.mxu0 0
      %1973 = vmatpush2.bf16.msra.mxu0 %v1703
      %1974 = vmatprep.subr.bf16.mxu0 0
      %1975 = vmatpush2.bf16.msra.mxu0 %v1702
      %1976 = vmatprep.subr.bf16.mxu0 0
      %1977 = vmatpush2.bf16.msra.mxu0 %v1701
      %1978 = vmatprep.subr.bf16.mxu0 0
      %1979 = vmatpush2.bf16.msra.mxu0 %v1700
      %1980 = vmatprep.mubr.bf16.mxu0 %v902
      %1981 = vmatmul.mubr.bf16.gmra.mxu0 %v901
      %v1982 = vpop.f32.mrf.mxu0
      %v1983 = vadd.f32 %v1178, %v1982
      %v1984 = vpop.f32.mrf.mxu0
      %v1985 = vpop.f32.mrf.mxu0
      %v1986 = vpop.f32.mrf.mxu0
      %1987 = vdwg.mxu0
      %1988 = vmatprep.subr.bf16.mxu0 0
      %1989 = vmatpush1.bf16.msra.mxu0 %v1715
      %1990 = vmatprep.subr.bf16.mxu0 0
      %1991 = vmatpush1.bf16.msra.mxu0 %v1714
      %1992 = vmatprep.subr.bf16.mxu0 0
      %1993 = vmatpush1.bf16.msra.mxu0 %v1713
      %1994 = vmatprep.subr.bf16.mxu0 0
      %1995 = vmatpush1.bf16.msra.mxu0 %v1712
      %1996 = vmatprep.subr.bf16.mxu0 0
      %1997 = vmatpush1.bf16.msra.mxu0 %v1711
      %1998 = vmatprep.subr.bf16.mxu0 0
      %1999 = vmatpush1.bf16.msra.mxu0 %v1710
      %2000 = vmatprep.subr.bf16.mxu0 0
      %2001 = vmatpush1.bf16.msra.mxu0 %v1709
      %2002 = vmatprep.subr.bf16.mxu0 0
      %2003 = vmatpush1.bf16.msra.mxu0 %v1708
      %2004 = vmatprep.subr.bf16.mxu0 0
      %2005 = vmatpush2.bf16.msra.mxu0 %v1723
      %2006 = vmatprep.subr.bf16.mxu0 0
      %2007 = vmatpush2.bf16.msra.mxu0 %v1722
      %2008 = vmatprep.subr.bf16.mxu0 0
      %2009 = vmatpush2.bf16.msra.mxu0 %v1721
      %2010 = vmatprep.subr.bf16.mxu0 0
      %2011 = vmatpush2.bf16.msra.mxu0 %v1720
      %2012 = vmatprep.subr.bf16.mxu0 0
      %2013 = vmatpush2.bf16.msra.mxu0 %v1719
      %2014 = vmatprep.subr.bf16.mxu0 0
      %2015 = vmatpush2.bf16.msra.mxu0 %v1718
      %2016 = vmatprep.subr.bf16.mxu0 0
      %2017 = vmatpush2.bf16.msra.mxu0 %v1717
      %2018 = vmatprep.subr.bf16.mxu0 0
      %2019 = vmatpush2.bf16.msra.mxu0 %v1716
      %2020 = vmatprep.mubr.bf16.mxu0 %v904
      %2021 = vmatmul.mubr.bf16.gmra.mxu0 %v903
      %v2022 = vpop.f32.mrf.mxu0
      %v2023 = vadd.f32 %v1983, %v2022
      %v2024 = vpop.f32.mrf.mxu0
      %v2025 = vpop.f32.mrf.mxu0
      %v2026 = vpop.f32.mrf.mxu0
      %2027 = vdwg.mxu0
      %2028 = vmatprep.subr.bf16.mxu0 0
      %2029 = vmatpush1.bf16.msra.mxu0 %v1731
      %2030 = vmatprep.subr.bf16.mxu0 0
      %2031 = vmatpush1.bf16.msra.mxu0 %v1730
      %2032 = vmatprep.subr.bf16.mxu0 0
      %2033 = vmatpush1.bf16.msra.mxu0 %v1729
      %2034 = vmatprep.subr.bf16.mxu0 0
      %2035 = vmatpush1.bf16.msra.mxu0 %v1728
      %2036 = vmatprep.subr.bf16.mxu0 0
      %2037 = vmatpush1.bf16.msra.mxu0 %v1727
      %2038 = vmatprep.subr.bf16.mxu0 0
      %2039 = vmatpush1.bf16.msra.mxu0 %v1726
      %2040 = vmatprep.subr.bf16.mxu0 0
      %2041 = vmatpush1.bf16.msra.mxu0 %v1725
      %2042 = vmatprep.subr.bf16.mxu0 0
      %2043 = vmatpush1.bf16.msra.mxu0 %v1724
      %2044 = vmatprep.subr.bf16.mxu0 0
      %2045 = vmatpush2.bf16.msra.mxu0 %v1739
      %2046 = vmatprep.subr.bf16.mxu0 0
      %2047 = vmatpush2.bf16.msra.mxu0 %v1738
      %2048 = vmatprep.subr.bf16.mxu0 0
      %2049 = vmatpush2.bf16.msra.mxu0 %v1737
      %2050 = vmatprep.subr.bf16.mxu0 0
      %2051 = vmatpush2.bf16.msra.mxu0 %v1736
      %2052 = vmatprep.subr.bf16.mxu0 0
      %2053 = vmatpush2.bf16.msra.mxu0 %v1735
      %2054 = vmatprep.subr.bf16.mxu0 0
      %2055 = vmatpush2.bf16.msra.mxu0 %v1734
      %2056 = vmatprep.subr.bf16.mxu0 0
      %2057 = vmatpush2.bf16.msra.mxu0 %v1733
      %2058 = vmatprep.subr.bf16.mxu0 0
      %2059 = vmatpush2.bf16.msra.mxu0 %v1732
      %2060 = vmatprep.mubr.bf16.mxu0 %v906
      %2061 = vmatmul.mubr.bf16.gmra.mxu0 %v905
      %v2062 = vpop.f32.mrf.mxu0
      %v2063 = vadd.f32 %v2023, %v2062
      %v2064 = vpop.f32.mrf.mxu0
      %v2065 = vpop.f32.mrf.mxu0
      %v2066 = vpop.f32.mrf.mxu0
      %2067 = vdwg.mxu0
      %2068 = vmatprep.subr.bf16.mxu0 0
      %2069 = vmatpush1.bf16.msra.mxu0 %v1747
      %2070 = vmatprep.subr.bf16.mxu0 0
      %2071 = vmatpush1.bf16.msra.mxu0 %v1746
      %2072 = vmatprep.subr.bf16.mxu0 0
      %2073 = vmatpush1.bf16.msra.mxu0 %v1745
      %2074 = vmatprep.subr.bf16.mxu0 0
      %2075 = vmatpush1.bf16.msra.mxu0 %v1744
      %2076 = vmatprep.subr.bf16.mxu0 0
      %2077 = vmatpush1.bf16.msra.mxu0 %v1743
      %2078 = vmatprep.subr.bf16.mxu0 0
      %2079 = vmatpush1.bf16.msra.mxu0 %v1742
      %2080 = vmatprep.subr.bf16.mxu0 0
      %2081 = vmatpush1.bf16.msra.mxu0 %v1741
      %2082 = vmatprep.subr.bf16.mxu0 0
      %2083 = vmatpush1.bf16.msra.mxu0 %v1740
      %2084 = vmatprep.subr.bf16.mxu0 0
      %2085 = vmatpush2.bf16.msra.mxu0 %v1755
      %2086 = vmatprep.subr.bf16.mxu0 0
      %2087 = vmatpush2.bf16.msra.mxu0 %v1754
      %2088 = vmatprep.subr.bf16.mxu0 0
      %2089 = vmatpush2.bf16.msra.mxu0 %v1753
      %2090 = vmatprep.subr.bf16.mxu0 0
      %2091 = vmatpush2.bf16.msra.mxu0 %v1752
      %2092 = vmatprep.subr.bf16.mxu0 0
      %2093 = vmatpush2.bf16.msra.mxu0 %v1751
      %2094 = vmatprep.subr.bf16.mxu0 0
      %2095 = vmatpush2.bf16.msra.mxu0 %v1750
      %2096 = vmatprep.subr.bf16.mxu0 0
      %2097 = vmatpush2.bf16.msra.mxu0 %v1749
      %2098 = vmatprep.subr.bf16.mxu0 0
      %2099 = vmatpush2.bf16.msra.mxu0 %v1748
      %2100 = vmatprep.mubr.bf16.mxu0 %v908
      %2101 = vmatmul.mubr.bf16.gmra.mxu0 %v907
      %v2102 = vpop.f32.mrf.mxu0
      %v2103 = vadd.f32 %v2063, %v2102
      %v2104 = vpop.f32.mrf.mxu0
      %v2105 = vpop.f32.mrf.mxu0
      %v2106 = vpop.f32.mrf.mxu0
      %2107 = vdwg.mxu0
      %2108 = vmatprep.subr.bf16.mxu0 0
      %2109 = vmatpush1.bf16.msra.mxu0 %v1763
      %2110 = vmatprep.subr.bf16.mxu0 0
      %2111 = vmatpush1.bf16.msra.mxu0 %v1762
      %2112 = vmatprep.subr.bf16.mxu0 0
      %2113 = vmatpush1.bf16.msra.mxu0 %v1761
      %2114 = vmatprep.subr.bf16.mxu0 0
      %2115 = vmatpush1.bf16.msra.mxu0 %v1760
      %2116 = vmatprep.subr.bf16.mxu0 0
      %2117 = vmatpush1.bf16.msra.mxu0 %v1759
      %2118 = vmatprep.subr.bf16.mxu0 0
      %2119 = vmatpush1.bf16.msra.mxu0 %v1758
      %2120 = vmatprep.subr.bf16.mxu0 0
      %2121 = vmatpush1.bf16.msra.mxu0 %v1757
      %2122 = vmatprep.subr.bf16.mxu0 0
      %2123 = vmatpush1.bf16.msra.mxu0 %v1756
      %2124 = vmatprep.subr.bf16.mxu0 0
      %2125 = vmatpush2.bf16.msra.mxu0 %v1771
      %2126 = vmatprep.subr.bf16.mxu0 0
      %2127 = vmatpush2.bf16.msra.mxu0 %v1770
      %2128 = vmatprep.subr.bf16.mxu0 0
      %2129 = vmatpush2.bf16.msra.mxu0 %v1769
      %2130 = vmatprep.subr.bf16.mxu0 0
      %2131 = vmatpush2.bf16.msra.mxu0 %v1768
      %2132 = vmatprep.subr.bf16.mxu0 0
      %2133 = vmatpush2.bf16.msra.mxu0 %v1767
      %2134 = vmatprep.subr.bf16.mxu0 0
      %2135 = vmatpush2.bf16.msra.mxu0 %v1766
      %2136 = vmatprep.subr.bf16.mxu0 0
      %2137 = vmatpush2.bf16.msra.mxu0 %v1765
      %2138 = vmatprep.subr.bf16.mxu0 0
      %2139 = vmatpush2.bf16.msra.mxu0 %v1764
      %2140 = vmatprep.mubr.bf16.mxu0 %v910
      %2141 = vmatmul.mubr.bf16.gmra.mxu0 %v909
      %v2142 = vpop.f32.mrf.mxu0
      %v2143 = vadd.f32 %v2103, %v2142
      %v2144 = vpop.f32.mrf.mxu0
      %v2145 = vpop.f32.mrf.mxu0
      %v2146 = vpop.f32.mrf.mxu0
      %2147 = vdwg.mxu0
      %2148 = vmatprep.subr.bf16.mxu0 0
      %2149 = vmatpush1.bf16.msra.mxu0 %v1779
      %2150 = vmatprep.subr.bf16.mxu0 0
      %2151 = vmatpush1.bf16.msra.mxu0 %v1778
      %2152 = vmatprep.subr.bf16.mxu0 0
      %2153 = vmatpush1.bf16.msra.mxu0 %v1777
      %2154 = vmatprep.subr.bf16.mxu0 0
      %2155 = vmatpush1.bf16.msra.mxu0 %v1776
      %2156 = vmatprep.subr.bf16.mxu0 0
      %2157 = vmatpush1.bf16.msra.mxu0 %v1775
      %2158 = vmatprep.subr.bf16.mxu0 0
      %2159 = vmatpush1.bf16.msra.mxu0 %v1774
      %2160 = vmatprep.subr.bf16.mxu0 0
      %2161 = vmatpush1.bf16.msra.mxu0 %v1773
      %2162 = vmatprep.subr.bf16.mxu0 0
      %2163 = vmatpush1.bf16.msra.mxu0 %v1772
      %2164 = vmatprep.subr.bf16.mxu0 0
      %2165 = vmatpush2.bf16.msra.mxu0 %v1787
      %2166 = vmatprep.subr.bf16.mxu0 0
      %2167 = vmatpush2.bf16.msra.mxu0 %v1786
      %2168 = vmatprep.subr.bf16.mxu0 0
      %2169 = vmatpush2.bf16.msra.mxu0 %v1785
      %2170 = vmatprep.subr.bf16.mxu0 0
      %2171 = vmatpush2.bf16.msra.mxu0 %v1784
      %2172 = vmatprep.subr.bf16.mxu0 0
      %2173 = vmatpush2.bf16.msra.mxu0 %v1783
      %2174 = vmatprep.subr.bf16.mxu0 0
      %2175 = vmatpush2.bf16.msra.mxu0 %v1782
      %2176 = vmatprep.subr.bf16.mxu0 0
      %2177 = vmatpush2.bf16.msra.mxu0 %v1781
      %2178 = vmatprep.subr.bf16.mxu0 0
      %2179 = vmatpush2.bf16.msra.mxu0 %v1780
      %2180 = vmatprep.mubr.bf16.mxu0 %v912
      %2181 = vmatmul.mubr.bf16.gmra.mxu0 %v911
      %v2182 = vpop.f32.mrf.mxu0
      %v2183 = vadd.f32 %v2143, %v2182
      %v2184 = vpop.f32.mrf.mxu0
      %v2185 = vpop.f32.mrf.mxu0
      %v2186 = vpop.f32.mrf.mxu0
      %2187 = vdwg.mxu0
      %2188 = vmatprep.subr.bf16.mxu0 0
      %2189 = vmatpush1.bf16.msra.mxu0 %v1795
      %2190 = vmatprep.subr.bf16.mxu0 0
      %2191 = vmatpush1.bf16.msra.mxu0 %v1794
      %2192 = vmatprep.subr.bf16.mxu0 0
      %2193 = vmatpush1.bf16.msra.mxu0 %v1793
      %2194 = vmatprep.subr.bf16.mxu0 0
      %2195 = vmatpush1.bf16.msra.mxu0 %v1792
      %2196 = vmatprep.subr.bf16.mxu0 0
      %2197 = vmatpush1.bf16.msra.mxu0 %v1791
      %2198 = vmatprep.subr.bf16.mxu0 0
      %2199 = vmatpush1.bf16.msra.mxu0 %v1790
      %2200 = vmatprep.subr.bf16.mxu0 0
      %2201 = vmatpush1.bf16.msra.mxu0 %v1789
      %2202 = vmatprep.subr.bf16.mxu0 0
      %2203 = vmatpush1.bf16.msra.mxu0 %v1788
      %2204 = vmatprep.subr.bf16.mxu0 0
      %2205 = vmatpush2.bf16.msra.mxu0 %v1803
      %2206 = vmatprep.subr.bf16.mxu0 0
      %2207 = vmatpush2.bf16.msra.mxu0 %v1802
      %2208 = vmatprep.subr.bf16.mxu0 0
      %2209 = vmatpush2.bf16.msra.mxu0 %v1801
      %2210 = vmatprep.subr.bf16.mxu0 0
      %2211 = vmatpush2.bf16.msra.mxu0 %v1800
      %2212 = vmatprep.subr.bf16.mxu0 0
      %2213 = vmatpush2.bf16.msra.mxu0 %v1799
      %2214 = vmatprep.subr.bf16.mxu0 0
      %2215 = vmatpush2.bf16.msra.mxu0 %v1798
      %2216 = vmatprep.subr.bf16.mxu0 0
      %2217 = vmatpush2.bf16.msra.mxu0 %v1797
      %2218 = vmatprep.subr.bf16.mxu0 0
      %2219 = vmatpush2.bf16.msra.mxu0 %v1796
      %2220 = vmatprep.mubr.bf16.mxu0 %v914
      %2221 = vmatmul.mubr.bf16.gmra.mxu0 %v913
      %v2222 = vpop.f32.mrf.mxu0
      %v2223 = vadd.f32 %v2183, %v2222
      %v2224 = vpop.f32.mrf.mxu0
      %v2225 = vpop.f32.mrf.mxu0
      %v2226 = vpop.f32.mrf.mxu0
      %2227 = vdwg.mxu0
      %2228 = vmatprep.subr.bf16.mxu0 0
      %2229 = vmatpush1.bf16.msra.mxu0 %v1811
      %2230 = vmatprep.subr.bf16.mxu0 0
      %2231 = vmatpush1.bf16.msra.mxu0 %v1810
      %2232 = vmatprep.subr.bf16.mxu0 0
      %2233 = vmatpush1.bf16.msra.mxu0 %v1809
      %2234 = vmatprep.subr.bf16.mxu0 0
      %2235 = vmatpush1.bf16.msra.mxu0 %v1808
      %2236 = vmatprep.subr.bf16.mxu0 0
      %2237 = vmatpush1.bf16.msra.mxu0 %v1807
      %2238 = vmatprep.subr.bf16.mxu0 0
      %2239 = vmatpush1.bf16.msra.mxu0 %v1806
      %2240 = vmatprep.subr.bf16.mxu0 0
      %2241 = vmatpush1.bf16.msra.mxu0 %v1805
      %2242 = vmatprep.subr.bf16.mxu0 0
      %2243 = vmatpush1.bf16.msra.mxu0 %v1804
      %2244 = vmatprep.subr.bf16.mxu0 0
      %2245 = vmatpush2.bf16.msra.mxu0 %v1819
      %2246 = vmatprep.subr.bf16.mxu0 0
      %2247 = vmatpush2.bf16.msra.mxu0 %v1818
      %2248 = vmatprep.subr.bf16.mxu0 0
      %2249 = vmatpush2.bf16.msra.mxu0 %v1817
      %2250 = vmatprep.subr.bf16.mxu0 0
      %2251 = vmatpush2.bf16.msra.mxu0 %v1816
      %2252 = vmatprep.subr.bf16.mxu0 0
      %2253 = vmatpush2.bf16.msra.mxu0 %v1815
      %2254 = vmatprep.subr.bf16.mxu0 0
      %2255 = vmatpush2.bf16.msra.mxu0 %v1814
      %2256 = vmatprep.subr.bf16.mxu0 0
      %2257 = vmatpush2.bf16.msra.mxu0 %v1813
      %2258 = vmatprep.subr.bf16.mxu0 0
      %2259 = vmatpush2.bf16.msra.mxu0 %v1812
      %2260 = vmatprep.mubr.bf16.mxu0 %v916
      %2261 = vmatmul.mubr.bf16.gmra.mxu0 %v915
      %v2262 = vpop.f32.mrf.mxu0
      %v2263 = vadd.f32 %v2223, %v2262
      %v2264 = vpop.f32.mrf.mxu0
      %v2265 = vpop.f32.mrf.mxu0
      %v2266 = vpop.f32.mrf.mxu0
      %2267 = vdwg.mxu0
      %v2268 = vadd.f32 %v2263, %v275
      %v2269 = vsel %vm553, %v2268, 0.0
      %2270 = vadd.xlane.f32.xlu0 %v2269
      %v2271 = vpop.xlane.xlu0 %2270
      %v2272 = vrcp.pop 32.0
      %v2273 = vmul.f32 %v2271, %v2272
      %v2274 = vsub.f32 %v2268, %v2273
      %v2275 = vmul.f32 %v2274, %v2274
      %v2276 = vsel %vm553, %v2275, 0.0
      %2277 = vadd.xlane.f32.xlu0 %v2276
      %v2278 = vpop.xlane.xlu0 %2277
      %v2279 = vmul.f32 %v2278, %v2272
      %v2280 = vadd.f32 %v2279, 1e-05
      %v2281 = vrsqrt.pop %v2280
      %v2282 = vmul.f32 %v2274, %v2281
      %v2283 = vld [vmem:[%s5] sm:$0x1]
      %v2285 = vlaneseq
      %v2286 = vshrl.u32 %v2285, 7
      %v2287 = vsub.s32 0, %v2286
      %v2288 = vrot.slane %v2283, %v2287
      %v2290 = vmul.f32 %v2282, %v2288
      %v2291 = vld [vmem:[%s6] sm:$0x1]
      %v2293 = vlaneseq
      %v2294 = vshrl.u32 %v2293, 7
      %v2295 = vsub.s32 0, %v2294
      %v2296 = vrot.slane %v2291, %v2295
      %v2298 = vadd.f32 %v2290, %v2296
      %2299 = vst.msk [vmem:[%s273] sm:$0xff] %vm553, %v2298
      %p2300 = scmp.lt.s32.totalorder %s18, 1
      %s2301 = scalar_select %p2300, %s18, 1
      %s2302 = smul.addr %s2301, 8
      %s2303 = scalar_lea.vmem %s7, %s2302
      // Predicated region
      $region49: #{transformer_classifier.6} parent=47 // pred_check
        %p2304 = pneg %p188
      $region50: #{transformer_classifier.6} parent=47 // pred_check_branch
        %2306 = sbr.rel (%p2304) target = $region52
      $region51: #{transformer_classifier.6} parent=47 // pred_region
        _
      $region52: #{transformer_classifier.6} parent=47 // pred_fallthru
        _
    $region48: #{transformer_classifier.6} parent=5 // pred_fallthru
      _
    %p2307 = scmp.le.s32.totalorder 2, %s13
    // Predicated region
    $region53: #{transformer_classifier.6} parent=5 // pred_check
      %p2308 = pneg %p2307
    $region54: #{transformer_classifier.6} parent=5 // pred_check_branch
      %2310 = sbr.rel (%p2308) target = $region56
    $region55: #{transformer_classifier.6} parent=5 // pred_region
      %s2311 = ssub.s32 %s13, 2
      // Predicated region
      $region57: #{transformer_classifier.6} parent=55 // pred_check
        %p2312 = pneg %p194
      $region58: #{transformer_classifier.6} parent=55 // pred_check_branch
        %2314 = sbr.rel (%p2312) target = $region60
      $region59: #{transformer_classifier.6} parent=55 // pred_region
        %p2315 = scmp.lt.s32.totalorder %s19, 1
        %s2316 = scalar_select %p2315, %s19, 1
        %s2317 = smul.addr %s2316, 8
        %s2318 = scalar_lea.vmem %s7, %s2317
      $region60: #{transformer_classifier.6} parent=55 // pred_fallthru
        _
    $region56: #{transformer_classifier.6} parent=5 // pred_fallthru
      _
  $region6: #{transformer_classifier.6} parent=0 // loop_footer
    %s17 = sadd.s32 1, %s13
  $region7: #{transformer_classifier.6} parent=0 // loop_footer_branch
    %12 = sbr.rel target = $region3
  $region8: #{transformer_classifier.6} parent=0 // loop_exit
    _

</llo_original>
